<compile_context>
chip_gen: v7x
topology: tpu7x:2x2x1
jax: 0.10.0
libtpu: 0.0.40
codegen_flags: <defaults>
</compile_context>

<pallas_src>
import functools

import jax
import jax.numpy as jnp
import numpy as np
from jax.experimental import pallas as pl
from jax.experimental.pallas import tpu as pltpu

LANE = 128


# ----------------------------- small helpers ---------------------------------

def _round_up(n, m):
    return ((n + m - 1) // m) * m


def _pad_last(a, c):
    return jnp.pad(a, [(0, 0)] * (a.ndim - 1) + [(0, c - a.shape[-1])])


def _pad_mat(w, rows, cols):
    return jnp.pad(w, ((0, rows - w.shape[0]), (0, cols - w.shape[1])))


def _vmem_budget():
    """Generation-aware scoped-VMEM budget: ~3/4 of physical, capped at 96 MiB.
    128 MiB chips (v5e/v6e) -> 96 MiB; 64 MiB chips (v7x) -> 48 MiB; unknown -> 48 MiB."""
    cap = None
    try:
        info = pltpu.get_tpu_info()
        for attr in ("vmem_capacity_bytes", "vmem_size_bytes", "vmem_bytes"):
            v = getattr(info, attr, None)
            if v:
                cap = int(v)
                break
    except Exception:
        cap = None
    if not cap:
        cap = 64 * 1024 * 1024          # conservative (v7x-sized) fallback
    return min(3 * cap // 4, 96 * 1024 * 1024)


def _stage1_vmem_bytes(th, W, stride, Cin_p, Cp):
    """Rough per-step VMEM footprint of the fused stage-1 kernel for row tile `th`."""
    thh = th + 2
    est = 0
    est += 2 * thh * W * Cin_p * 2                        # x + halo blocks (dbl-buffered) bf16
    est += 2 * (th // stride) * (W // stride) * Cp * 2    # output block (dbl-buffered) bf16
    est += 2 * (Cin_p * Cp + 9 * Cp * Cp) * 2             # w1 + w2cat (dbl-buffered) bf16
    est += thh * W * Cin_p * 2                            # assembled haloed input copy, bf16
    est += 3 * thh * W * Cp * 4                           # h + 2 rolled column taps, f32
    est += thh * W * 3 * Cp * 2                           # concatenated taps, bf16
    est += th * W * Cp * 4                                # conv2 f32 accumulator
    if stride > 1:
        est += (th // stride) * W * Cp * 4                # pool scratch
    return est


def _pick_row_tile(H, W, stride, Cin_p, Cp, budget):
    """Largest row tile (multiple of stride, divides H) whose footprint fits the budget."""
    cands = sorted({stride * k for k in (64, 32, 16, 8, 4, 2, 1)} | {H}, reverse=True)
    cands = [t for t in cands if t <= H and H % t == 0 and t % stride == 0]
    for th in cands:
        if _stage1_vmem_bytes(th, W, stride, Cin_p, Cp) <= 0.6 * budget:
            return th
    return cands[-1]


def avgpool(x_nhwc, s):
    # AvgPool2d(kernel=s, stride=s), identity/downsample path only (cheap XLA glue on bf16;
    # the main-path avgpool is fused inside the Pallas conv kernel).
    # TODO(synk): fully fusing this pool into the downsample matmul kernel would remove one
    # more HBM pass over the pooled activation.
    N, H, W, C = x_nhwc.shape
    p = x_nhwc.reshape(N, H // s, s, W // s, s, C).astype(jnp.float32).mean(axis=(2, 4))
    return p.astype(x_nhwc.dtype)


# ------------------------------------------------------------------------------------
# Kernel 1: fused conv1(1x1)+bn1+relu -> conv2(3x3,pad=1)+bn2+relu -> avgpool(stride)
# One grid step = one (image, row-block) tile; the 2 halo rows arrive as a tiny side input.
# ------------------------------------------------------------------------------------

def _conv1_conv2_pool_kernel(x_ref, hal_ref, w1_ref, s1_ref, b1_ref,
                             w2_ref, s2_ref, b2_ref, o_ref, *scratch, stride):
    _, TH, W, Cin = x_ref.shape
    THh = TH + 2
    Cp = w1_ref.shape[1]
    s = stride
    THo, Wo = TH // s, W // s

    # Assemble the (TH+2)-row haloed input tile (major-axis concat: cheap tile copies).
    hal = hal_ref[0]                                                  # (2, W, Cin)
    xb = jnp.concatenate([hal[0:1], x_ref[0], hal[1:2]], axis=0)      # (THh, W, Cin) bf16

    # ---- conv1 (1x1) + bn1 + relu (halo rows recomputed; 1x1 is pointwise) ----
    h = jnp.dot(xb.reshape(THh * W, Cin), w1_ref[...],
                preferred_element_type=jnp.float32)
    h = jnp.maximum(h * s1_ref[...] + b1_ref[...], 0.0).reshape(THh, W, Cp)

    # conv2's zero padding acts on the *post-relu1* activation: zero halo rows lying outside
    # the image (first / last row-block only).  Small (THh,1,1) iota -> broadcast multiply.
    rb = pl.program_id(1)
    nrb = pl.num_programs(1)
    row = jax.lax.broadcasted_iota(jnp.int32, (THh, 1, 1), 0)
    oob = ((row == 0) & (rb == 0)) | ((row == THh - 1) & (rb == nrb - 1))
    h = h * (1.0 - oob.astype(jnp.float32))

    # ---- column taps (x-1, x, x+1): one XLU roll + edge mask each, concatenated along the
    #      contraction axis so conv2 becomes 3 matmuls of K=3*Cp (keeps 256-deep MXUs fed).
    col = jax.lax.broadcasted_iota(jnp.int32, (1, W, 1), 1)
    lmask = (col >= 1).astype(jnp.float32)       # tap reads column x-1: zero at column 0
    rmask = (col < W - 1).astype(jnp.float32)    # tap reads column x+1: zero at column W-1
    taps = jnp.concatenate(
        [(pltpu.roll(h, 1, axis=1) * lmask).astype(jnp.bfloat16),
         h.astype(jnp.bfloat16),
         (pltpu.roll(h, W - 1, axis=1) * rmask).astype(jnp.bfloat16)],
        axis=-1)                                                      # (THh, W, 3*Cp) bf16

    # ---- conv2 (3x3) + bn2 + relu: 3 lane-dense matmuls (row taps = free major slices) ----
    acc = jnp.zeros((TH * W, Cp), jnp.float32)
    for dy in range(3):
        patch = taps[dy:dy + TH].reshape(TH * W, 3 * Cp)
        acc = acc + jnp.dot(patch, w2_ref[dy], preferred_element_type=jnp.float32)
    y = jnp.maximum(acc * s2_ref[...] + b2_ref[...], 0.0)             # (TH*W, Cp) f32

    # ---- avgpool(stride) epilogue in VMEM (un-pooled activation never hits HBM) ----
    if s > 1:
        pool_ref, = scratch
        t = y.reshape(THo, s, W, Cp)           # layout-trivial regroup of leading dims
        yh = t[:, 0]
        for a in range(1, s):
            yh = yh + t[:, a]                  # pool along H
        pool_ref[...] = yh.reshape(THo * W, Cp)
        r = THo * Wo
        yw = pool_ref[pl.ds(0, r, stride=s), :]
        for k in range(1, s):
            yw = yw + pool_ref[pl.ds(k, r, stride=s), :]   # strided sublane loads: W pool
        y = yw * (1.0 / (s * s))
    o_ref[...] = y.reshape(1, THo, Wo, Cp).astype(o_ref.dtype)


def conv1_conv2_pool(x, halo, w1, s1, b1, w2cat, s2, b2, *, th, stride, vmem_limit):
    N, H, W, Cin_p = x.shape
    RB = H // th
    Cp = w1.shape[1]
    Ho, Wo = H // stride, W // stride
    THo = th // stride

    kern = functools.partial(_conv1_conv2_pool_kernel, stride=stride)
    rep2 = lambda n, r: (0, 0)
    scratch = [pltpu.VMEM((THo * W, Cp), jnp.float32)] if stride > 1 else []

    flops = 2 * N * RB * W * Cp * ((th + 2) * Cin_p + 9 * th * Cp)
    bytes_accessed = (2 * (x.size + halo.size + w1.size + w2cat.size)
                      + 4 * (s1.size + b1.size + s2.size + b2.size)
                      + 2 * N * Ho * Wo * Cp)

    return pl.pallas_call(
        kern,
        out_shape=jax.ShapeDtypeStruct((N, Ho, Wo, Cp), jnp.bfloat16),
        grid=(N, RB),
        in_specs=[
            pl.BlockSpec((1, th, W, Cin_p), lambda n, r: (n, r, 0, 0)),
            pl.BlockSpec((1, 2, W, Cin_p), lambda n, r: (n * RB + r, 0, 0, 0)),
            pl.BlockSpec((Cin_p, Cp), rep2),
            pl.BlockSpec((1, Cp), rep2),
            pl.BlockSpec((1, Cp), rep2),
            pl.BlockSpec((3, 3 * Cp, Cp), lambda n, r: (0, 0, 0)),
            pl.BlockSpec((1, Cp), rep2),
            pl.BlockSpec((1, Cp), rep2),
        ],
        out_specs=pl.BlockSpec((1, THo, Wo, Cp), lambda n, r: (n, r, 0, 0)),
        scratch_shapes=scratch,
        compiler_params=pltpu.CompilerParams(
            dimension_semantics=("parallel", "parallel"),
            vmem_limit_bytes=int(vmem_limit)),
        cost_estimate=pl.CostEstimate(flops=int(flops), transcendentals=0,
                                      bytes_accessed=int(bytes_accessed)),
    )(x, halo, w1, s1, b1, w2cat, s2, b2)


# ------------------------------------------------------------------------------------
# Kernel 2: general tiled matmul with fused BN / residual / ReLU epilogue.
# Used for conv3(1x1)+bn3(+residual+relu) and the downsample conv(1x1)+bn.
# ------------------------------------------------------------------------------------

def _fused_matmul_bn(x2d, w, scale, bias, identity=None, relu=True,
                     out_dtype=jnp.float32, vmem_limit=48 * 1024 * 1024):
    """y = [relu](x @ w * scale + bias [+ identity]); bf16 operands, f32 accumulation."""
    M, K = x2d.shape
    N = w.shape[1]
    assert K % LANE == 0 and N % LANE == 0, (K, N)

    TM = 256 if (M >= 256 and M % 256 == 0) else 128
    TN = 256 if N % 256 == 0 else 128
    TK = 512 if K % 512 == 0 else (256 if K % 256 == 0 else 128)
    Mp = _round_up(M, TM)
    nk = K // TK

    if Mp != M:
        x2d = jnp.pad(x2d, ((0, Mp - M), (0, 0)))
        if identity is not None:
            identity = jnp.pad(identity, ((0, Mp - M), (0, 0)))
    has_id = identity is not None

    def kern(*refs):
        if has_id:
            x_ref, w_ref, s_ref, b_ref, id_ref, o_ref, acc_ref = refs
        else:
            x_ref, w_ref, s_ref, b_ref, o_ref, acc_ref = refs
        k = pl.program_id(2)

        @pl.when(k == 0)
        def _():
            acc_ref[...] = jnp.zeros_like(acc_ref)

        acc_ref[...] += jnp.dot(x_ref[...], w_ref[...],
                                preferred_element_type=jnp.float32)

        @pl.when(k == nk - 1)
        def _():
            y = acc_ref[...] * s_ref[...] + b_ref[...]
            if has_id:
                y = y + id_ref[...].astype(jnp.float32)
            if relu:
                y = jnp.maximum(y, 0.0)
            o_ref[...] = y.astype(o_ref.dtype)

    in_specs = [
        pl.BlockSpec((TM, TK), lambda i, j, k: (i, k)),
        pl.BlockSpec((TK, TN), lambda i, j, k: (k, j)),
        pl.BlockSpec((1, TN), lambda i, j, k: (0, j)),
        pl.BlockSpec((1, TN), lambda i, j, k: (0, j)),
    ]
    inputs = [x2d, w, scale, bias]
    if has_id:
        in_specs.append(pl.BlockSpec((TM, TN), lambda i, j, k: (i, j)))
        inputs.append(identity)

    out_bytes = jnp.dtype(out_dtype).itemsize
    bytes_accessed = (Mp * K * x2d.dtype.itemsize + K * N * w.dtype.itemsize
                      + 8 * N + Mp * N * out_bytes
                      + (Mp * N * identity.dtype.itemsize if has_id else 0))

    out = pl.pallas_call(
        kern,
        out_shape=jax.ShapeDtypeStruct((Mp, N), out_dtype),
        grid=(Mp // TM, N // TN, nk),
        in_specs=in_specs,
        out_specs=pl.BlockSpec((TM, TN), lambda i, j, k: (i, j)),
        scratch_shapes=[pltpu.VMEM((TM, TN), jnp.float32)],
        compiler_params=pltpu.CompilerParams(
            dimension_semantics=("parallel", "parallel", "arbitrary"),
            vmem_limit_bytes=int(vmem_limit)),
        cost_estimate=pl.CostEstimate(flops=int(2 * Mp * K * N), transcendentals=0,
                                      bytes_accessed=int(bytes_accessed)),
    )(*inputs)
    return out[:M]


# ----------------------------- Bottleneck forward -----------------------------

def bottleneck_forward(x_nchw, p, stride):
    x = jnp.transpose(x_nchw, (0, 2, 3, 1)).astype(jnp.float32)   # NCHW -> NHWC
    N, H, W, Cin = x.shape
    planes = p["w1"].shape[1]
    cout = p["w3"].shape[1]
    assert H % stride == 0 and W % stride == 0

    Cin_p = _round_up(max(Cin, LANE), LANE)
    Cp = _round_up(max(planes, LANE), LANE)
    Co_p = _round_up(max(cout, LANE), LANE)
    budget = _vmem_budget()

    # lane-dense (zero-padded) weights / folded-BN params; matmul operands in bf16.
    w1 = _pad_mat(p["w1"], Cin_p, Cp).astype(jnp.bfloat16)
    w2p = jnp.pad(p["w2"], ((0, 0), (0, 0), (0, Cp - planes), (0, Cp - planes)))
    # (3,3,Cp,Cp) -> (3, 3*Cp, Cp): column taps concatenated along the contraction axis so
    # conv2 runs as 3 matmuls with K = 3*Cp.
    w2cat = w2p.reshape(3, 3 * Cp, Cp).astype(jnp.bfloat16)
    w3 = _pad_mat(p["w3"], Cp, Co_p).astype(jnp.bfloat16)
    wd = _pad_mat(p["wd"], Cin_p, Co_p).astype(jnp.bfloat16)
    s1, b1 = _pad_last(p["s1"], Cp), _pad_last(p["b1"], Cp)
    s2, b2 = _pad_last(p["s2"], Cp), _pad_last(p["b2"], Cp)
    s3, b3 = _pad_last(p["s3"], Co_p), _pad_last(p["b3"], Co_p)
    sd, bd = _pad_last(p["sd"], Co_p), _pad_last(p["bd"], Co_p)

    # single channel-padded bf16 copy of the input, shared by the main and identity paths
    x_bf = _pad_last(x, Cin_p).astype(jnp.bfloat16)               # (N, H, W, Cin_p)

    # per-row-block halo rows (2 per block): tiny vs. a full halo-duplicated input copy
    TH = _pick_row_tile(H, W, stride, Cin_p, Cp, budget)
    RB = H // TH
    zrow = jnp.zeros((N, 1, W, Cin_p), jnp.bfloat16)
    if RB > 1:
        top = jnp.concatenate([zrow, x_bf[:, TH - 1::TH][:, :RB - 1]], axis=1)
        bot = jnp.concatenate([x_bf[:, TH::TH][:, :RB - 1], zrow], axis=1)
    else:
        top, bot = zrow, zrow
    halo = jnp.stack([top, bot], axis=2).reshape(N * RB, 2, W, Cin_p)

    # fused conv1+bn1+relu -> conv2+bn2+relu -> avgpool(stride)   (single Pallas kernel)
    o = conv1_conv2_pool(x_bf, halo, w1, s1, b1, w2cat, s2, b2,
                         th=TH, stride=stride, vmem_limit=budget)
    Ho, Wo = H // stride, W // stride
    o2d = o.reshape(N * Ho * Wo, Cp)                              # bf16, lane-dense K

    # identity / downsample path: AvgPool(stride) -> conv 1x1 -> BN, all bf16 HBM traffic
    if stride > 1 or Cin != cout:
        idn_in = avgpool(x_bf, stride) if stride > 1 else x_bf
        idn = _fused_matmul_bn(idn_in.reshape(-1, Cin_p), wd, sd, bd,
                               identity=None, relu=False,
                               out_dtype=jnp.bfloat16, vmem_limit=budget)
    else:
        idn = x_bf.reshape(-1, Cin_p)                             # Cin_p == Co_p here

    # conv3 (1x1) + bn3 + residual add + relu, fused into one matmul kernel
    out2d = _fused_matmul_bn(o2d, w3, s3, b3, identity=idn, relu=True,
                             out_dtype=jnp.float32, vmem_limit=budget)
    out = out2d[:, :cout].reshape(N, Ho, Wo, cout)
    return jnp.transpose(out, (0, 3, 1, 2))                       # NHWC -> NCHW


# ----------------------------- reference (pure JAX) ----------------------------

def bottleneck_reference(x_nchw, p, stride):
    hp = jax.lax.Precision.HIGHEST
    r16 = lambda a: a.astype(jnp.bfloat16).astype(jnp.float32)    # model bf16 MXU inputs
    x = jnp.transpose(x_nchw, (0, 2, 3, 1)).astype(jnp.float32)
    o = jnp.einsum("nhwc,co->nhwo", r16(x), r16(p["w1"]), precision=hp)
    o = jnp.maximum(o * p["s1"] + p["b1"], 0.0)
    o = jax.lax.conv_general_dilated(
        r16(o), r16(p["w2"]), (1, 1), ((1, 1), (1, 1)),
        dimension_numbers=("NHWC", "HWIO", "NHWC"), precision=hp)
    o = jnp.maximum(o * p["s2"] + p["b2"], 0.0)
    if stride > 1:
        o = avgpool(o, stride)
    o = jnp.einsum("nhwc,co->nhwo", r16(o), r16(p["w3"]), precision=hp)
    o = o * p["s3"] + p["b3"]
    cout = p["w3"].shape[1]
    if stride > 1 or x.shape[-1] != cout:
        idn = avgpool(x, stride) if stride > 1 else x
        idn = jnp.einsum("nhwc,co->nhwo", r16(idn), r16(p["wd"]), precision=hp)
        idn = idn * p["sd"] + p["bd"]
    else:
        idn = x
    o = jnp.maximum(o + idn, 0.0)
    return jnp.transpose(o, (0, 3, 1, 2))


# ----------------------------- parameter init ---------------------------------

def bn_fold(key, c, eps=1e-5):
    k1, k2, k3, k4 = jax.random.split(key, 4)
    gamma = jax.random.uniform(k1, (c,), jnp.float32, 0.5, 1.5)
    beta = jax.random.normal(k2, (c,), jnp.float32) * 0.1
    mean = jax.random.normal(k3, (c,), jnp.float32) * 0.1
    var = jax.random.uniform(k4, (c,), jnp.float32, 0.5, 1.5)
    scale = gamma / jnp.sqrt(var + eps)
    bias = beta - mean * scale
    return scale.reshape(1, c), bias.reshape(1, c)


def make_params(key, inplanes, planes, expansion=4):
    cout = planes * expansion
    ks = jax.random.split(key, 8)
    p = {}
    p["w1"] = jax.random.normal(ks[0], (inplanes, planes), jnp.float32) * 0.1
    p["w2"] = jax.random.normal(ks[1], (3, 3, planes, planes), jnp.float32) * 0.1
    p["w3"] = jax.random.normal(ks[2], (planes, cout), jnp.float32) * 0.1
    p["wd"] = jax.random.normal(ks[3], (inplanes, cout), jnp.float32) * 0.1
    p["s1"], p["b1"] = bn_fold(ks[4], planes)
    p["s2"], p["b2"] = bn_fold(ks[5], planes)
    p["s3"], p["b3"] = bn_fold(ks[6], cout)
    p["sd"], p["bd"] = bn_fold(ks[7], cout)
    return p


# ----------------------------- main --------------------------------------------

if __name__ == "__main__":
    inplanes, planes, stride = 16, 8, 2   # downsample active (stride>1, inplanes != 4*planes)
    N, H, W = 2, 16, 16

    key = jax.random.PRNGKey(0)
    kx, kp = jax.random.split(key)
    x = jax.random.normal(kx, (N, inplanes, H, W), jnp.float32)   # NCHW, like PyTorch
    params = make_params(kp, inplanes, planes)

    fwd = jax.jit(functools.partial(bottleneck_forward, stride=stride))
    out = jax.block_until_ready(fwd(x, params))

    ref = jax.block_until_ready(bottleneck_reference(x, params, stride))
    assert out.shape == (N, planes * 4, H // stride, W // stride), out.shape
    np.testing.assert_allclose(np.asarray(out), np.asarray(ref), rtol=2e-2, atol=2e-2)

    print("KERNEL_OK")
</pallas_src>

<mosaic_0001>
module attributes {stable_mosaic.version = 11 : i64} {
  func.func @kern(%arg0: i32, %arg1: i32, %arg2: i32, %arg3: memref<128x128xbf16, #tpu.memory_space<vmem>>, %arg4: memref<128x128xbf16, #tpu.memory_space<vmem>>, %arg5: memref<1x128xf32, #tpu.memory_space<vmem>>, %arg6: memref<1x128xf32, #tpu.memory_space<vmem>>, %arg7: memref<128x128xbf16, #tpu.memory_space<vmem>>, %arg8: memref<128x128xf32, #tpu.memory_space<vmem>>) attributes {dimension_semantics = [#tpu.dimension_semantics<parallel>, #tpu.dimension_semantics<parallel>, #tpu.dimension_semantics<arbitrary>], iteration_bounds = array<i64: 1, 1, 1>, scalar_prefetch = 0 : i64, scratch_operands = 1 : i64, tpu.core_type = #tpu.core_type<tc>, window_params = [{transform_indices = @transform_0, window_bounds = array<i64: 128, 128>}, {transform_indices = @transform_1, window_bounds = array<i64: 128, 128>}, {transform_indices = @transform_2, window_bounds = array<i64: 1, 128>}, {transform_indices = @transform_3, window_bounds = array<i64: 1, 128>}, {transform_indices = @transform_4, window_bounds = array<i64: 128, 128>}]} {
    %c0_i32 = arith.constant 0 : i32
    %0 = arith.cmpi eq, %arg2, %c0_i32 : i32
    %1 = arith.extui %0 : i1 to i32
    %c0_i32_0 = arith.constant 0 : i32
    %2 = arith.cmpi ne, %1, %c0_i32_0 : i32
    scf.if %2 {
      %cst_10 = arith.constant 0.000000e+00 : f32
      %12 = vector.broadcast %cst_10 : f32 to vector<128x128xf32>
      %c0_11 = arith.constant 0 : index
      %c0_12 = arith.constant 0 : index
      %13 = vector.load %arg8[%c0_11, %c0_12] : memref<128x128xf32, #tpu.memory_space<vmem>>, vector<128x128xf32>
      tpu.vector_store %arg8[%c0_11, %c0_12], %12 {strides = array<i32>} : memref<128x128xf32, #tpu.memory_space<vmem>>, vector<128x128xf32>,
    } else {
    }
    %c0 = arith.constant 0 : index
    %c0_1 = arith.constant 0 : index
    %3 = vector.load %arg8[%c0, %c0_1] : memref<128x128xf32, #tpu.memory_space<vmem>>, vector<128x128xf32>
    %c0_2 = arith.constant 0 : index
    %c0_3 = arith.constant 0 : index
    %4 = vector.load %arg3[%c0_2, %c0_3] : memref<128x128xbf16, #tpu.memory_space<vmem>>, vector<128x128xbf16>
    %c0_4 = arith.constant 0 : index
    %c0_5 = arith.constant 0 : index
    %5 = vector.load %arg4[%c0_4, %c0_5] : memref<128x128xbf16, #tpu.memory_space<vmem>>, vector<128x128xbf16>
    %cst = arith.constant dense<0.000000e+00> : vector<128x128xf32>
    %6 = tpu.matmul %4, %5, %cst {dimension_numbers = #tpu.dot_dimension_numbers<[1], [0], [0], [1], [0, 0, 1, 1], [], []>} : vector<128x128xbf16>, vector<128x128xbf16>, vector<128x128xf32> -> vector<128x128xf32>
    %7 = arith.addf %3, %6 : vector<128x128xf32>
    %c0_6 = arith.constant 0 : index
    %c0_7 = arith.constant 0 : index
    %8 = vector.load %arg8[%c0_6, %c0_7] : memref<128x128xf32, #tpu.memory_space<vmem>>, vector<128x128xf32>
    tpu.vector_store %arg8[%c0_6, %c0_7], %7 {strides = array<i32>} : memref<128x128xf32, #tpu.memory_space<vmem>>, vector<128x128xf32>,
    %c0_i32_8 = arith.constant 0 : i32
    %9 = arith.cmpi eq, %arg2, %c0_i32_8 : i32
    %10 = arith.extui %9 : i1 to i32
    %c0_i32_9 = arith.constant 0 : i32
    %11 = arith.cmpi ne, %10, %c0_i32_9 : i32
    scf.if %11 {
      %c0_10 = arith.constant 0 : index
      %c0_11 = arith.constant 0 : index
      %12 = vector.load %arg8[%c0_10, %c0_11] : memref<128x128xf32, #tpu.memory_space<vmem>>, vector<128x128xf32>
      %c0_12 = arith.constant 0 : index
      %c0_13 = arith.constant 0 : index
      %13 = vector.load %arg5[%c0_12, %c0_13] : memref<1x128xf32, #tpu.memory_space<vmem>>, vector<1x128xf32>
      %14 = vector.broadcast %13 : vector<1x128xf32> to vector<128x128xf32>
      %15 = arith.mulf %12, %14 : vector<128x128xf32>
      %c0_14 = arith.constant 0 : index
      %c0_15 = arith.constant 0 : index
      %16 = vector.load %arg6[%c0_14, %c0_15] : memref<1x128xf32, #tpu.memory_space<vmem>>, vector<1x128xf32>
      %17 = vector.broadcast %16 : vector<1x128xf32> to vector<128x128xf32>
      %18 = arith.addf %15, %17 : vector<128x128xf32>
      %19 = arith.truncf %18 : vector<128x128xf32> to vector<128x128xbf16>
      %c0_16 = arith.constant 0 : index
      %c0_17 = arith.constant 0 : index
      %20 = vector.load %arg7[%c0_16, %c0_17] : memref<128x128xbf16, #tpu.memory_space<vmem>>, vector<128x128xbf16>
      tpu.vector_store %arg7[%c0_16, %c0_17], %19 {strides = array<i32>} : memref<128x128xbf16, #tpu.memory_space<vmem>>, vector<128x128xbf16>,
    } else {
    }
    return
  }
  func.func @transform_0(%arg0: i32, %arg1: i32, %arg2: i32) -> (i32, i32) {
    %c0_i32 = arith.constant 0 : i32
    return %arg0, %arg2 : i32, i32
  }
  func.func @transform_1(%arg0: i32, %arg1: i32, %arg2: i32) -> (i32, i32) {
    %c0_i32 = arith.constant 0 : i32
    return %arg2, %arg1 : i32, i32
  }
  func.func @transform_2(%arg0: i32, %arg1: i32, %arg2: i32) -> (i32, i32) {
    %c0_i32 = arith.constant 0 : i32
    %c0_i32_0 = arith.constant 0 : i32
    return %c0_i32, %arg1 : i32, i32
  }
  func.func @transform_3(%arg0: i32, %arg1: i32, %arg2: i32) -> (i32, i32) {
    %c0_i32 = arith.constant 0 : i32
    %c0_i32_0 = arith.constant 0 : i32
    return %c0_i32, %arg1 : i32, i32
  }
  func.func @transform_4(%arg0: i32, %arg1: i32, %arg2: i32) -> (i32, i32) {
    %c0_i32 = arith.constant 0 : i32
    return %arg0, %arg1 : i32, i32
  }
}

module attributes {stable_mosaic.version = 11 : i64} {
  func.func @_conv1_conv2_pool_kernel(%arg0: i32, %arg1: i32, %arg2: memref<1x16x16x128xbf16, #tpu.memory_space<vmem>>, %arg3: memref<1x2x16x128xbf16, #tpu.memory_space<vmem>>, %arg4: memref<128x128xbf16, #tpu.memory_space<vmem>>, %arg5: memref<1x128xf32, #tpu.memory_space<vmem>>, %arg6: memref<1x128xf32, #tpu.memory_space<vmem>>, %arg7: memref<3x384x128xbf16, #tpu.memory_space<vmem>>, %arg8: memref<1x128xf32, #tpu.memory_space<vmem>>, %arg9: memref<1x128xf32, #tpu.memory_space<vmem>>, %arg10: memref<1x8x8x128xbf16, #tpu.memory_space<vmem>>, %arg11: memref<128x128xf32, #tpu.memory_space<vmem>>) attributes {dimension_semantics = [#tpu.dimension_semantics<parallel>, #tpu.dimension_semantics<parallel>], iteration_bounds = array<i64: 2, 1>, scalar_prefetch = 0 : i64, scratch_operands = 1 : i64, tpu.core_type = #tpu.core_type<tc>, window_params = [{transform_indices = @transform_0, window_bounds = array<i64: 1, 16, 16, 128>}, {transform_indices = @transform_1, window_bounds = array<i64: 1, 2, 16, 128>}, {pipeline_mode = #tpu.pipeline_mode<synchronous>, transform_indices = @transform_2, window_bounds = array<i64: 128, 128>}, {pipeline_mode = #tpu.pipeline_mode<synchronous>, transform_indices = @transform_3, window_bounds = array<i64: 1, 128>}, {pipeline_mode = #tpu.pipeline_mode<synchronous>, transform_indices = @transform_4, window_bounds = array<i64: 1, 128>}, {pipeline_mode = #tpu.pipeline_mode<synchronous>, transform_indices = @transform_5, window_bounds = array<i64: 3, 384, 128>}, {pipeline_mode = #tpu.pipeline_mode<synchronous>, transform_indices = @transform_6, window_bounds = array<i64: 1, 128>}, {pipeline_mode = #tpu.pipeline_mode<synchronous>, transform_indices = @transform_7, window_bounds = array<i64: 1, 128>}, {transform_indices = @transform_8, window_bounds = array<i64: 1, 8, 8, 128>}]} {
    %c0 = arith.constant 0 : index
    %c0_0 = arith.constant 0 : index
    %c0_1 = arith.constant 0 : index
    %c0_2 = arith.constant 0 : index
    %0 = vector.load %arg3[%c0, %c0_0, %c0_1, %c0_2] : memref<1x2x16x128xbf16, #tpu.memory_space<vmem>>, vector<1x2x16x128xbf16>
    %1 = vector.shape_cast %0 : vector<1x2x16x128xbf16> to vector<2x16x128xbf16>
    %2 = vector.extract_strided_slice %1 {offsets = [0, 0, 0], sizes = [1, 16, 128], strides = [1, 1, 1]} : vector<2x16x128xbf16> to vector<1x16x128xbf16>
    %c0_3 = arith.constant 0 : index
    %c0_4 = arith.constant 0 : index
    %c0_5 = arith.constant 0 : index
    %c0_6 = arith.constant 0 : index
    %3 = vector.load %arg2[%c0_3, %c0_4, %c0_5, %c0_6] : memref<1x16x16x128xbf16, #tpu.memory_space<vmem>>, vector<1x16x16x128xbf16>
    %4 = vector.shape_cast %3 : vector<1x16x16x128xbf16> to vector<16x16x128xbf16>
    %5 = vector.extract_strided_slice %1 {offsets = [1, 0, 0], sizes = [1, 16, 128], strides = [1, 1, 1]} : vector<2x16x128xbf16> to vector<1x16x128xbf16>
    %6 = tpu.concatenate %2, %4, %5 in 0 : vector<1x16x128xbf16>, vector<16x16x128xbf16>, vector<1x16x128xbf16> -> vector<18x16x128xbf16>
    %7 = vector.shape_cast %6 : vector<18x16x128xbf16> to vector<288x128xbf16>
    %c0_7 = arith.constant 0 : index
    %c0_8 = arith.constant 0 : index
    %8 = vector.load %arg4[%c0_7, %c0_8] : memref<128x128xbf16, #tpu.memory_space<vmem>>, vector<128x128xbf16>
    %cst = arith.constant dense<0.000000e+00> : vector<288x128xf32>
    %9 = tpu.matmul %7, %8, %cst {dimension_numbers = #tpu.dot_dimension_numbers<[1], [0], [0], [1], [0, 0, 1, 1], [], []>} : vector<288x128xbf16>, vector<128x128xbf16>, vector<288x128xf32> -> vector<288x128xf32>
    %c0_9 = arith.constant 0 : index
    %c0_10 = arith.constant 0 : index
    %10 = vector.load %arg5[%c0_9, %c0_10] : memref<1x128xf32, #tpu.memory_space<vmem>>, vector<1x128xf32>
    %11 = vector.broadcast %10 : vector<1x128xf32> to vector<288x128xf32>
    %12 = arith.mulf %9, %11 : vector<288x128xf32>
    %c0_11 = arith.constant 0 : index
    %c0_12 = arith.constant 0 : index
    %13 = vector.load %arg6[%c0_11, %c0_12] : memref<1x128xf32, #tpu.memory_space<vmem>>, vector<1x128xf32>
    %14 = vector.broadcast %13 : vector<1x128xf32> to vector<288x128xf32>
    %15 = arith.addf %12, %14 : vector<288x128xf32>
    %cst_13 = arith.constant 0.000000e+00 : f32
    %16 = vector.broadcast %cst_13 : f32 to vector<288x128xf32>
    %17 = arith.maximumf %15, %16 : vector<288x128xf32>
    %18 = vector.shape_cast %17 : vector<288x128xf32> to vector<18x16x128xf32>
    %19 = tpu.iota {dimensions = array<i32: 0>} : vector<18x1x1xi32>
    %c0_i32 = arith.constant 0 : i32
    %20 = vector.broadcast %c0_i32 : i32 to vector<18x1x1xi32>
    %21 = arith.cmpi eq, %19, %20 : vector<18x1x1xi32>
    %c0_i32_14 = arith.constant 0 : i32
    %22 = arith.cmpi eq, %arg1, %c0_i32_14 : i32
    %23 = vector.broadcast %22 : i1 to vector<18x1x1xi1>
    %24 = arith.andi %21, %23 : vector<18x1x1xi1>
    %c17_i32 = arith.constant 17 : i32
    %25 = vector.broadcast %c17_i32 : i32 to vector<18x1x1xi32>
    %26 = arith.cmpi eq, %19, %25 : vector<18x1x1xi32>
    %c0_i32_15 = arith.constant 0 : i32
    %27 = arith.cmpi eq, %arg1, %c0_i32_15 : i32
    %28 = vector.broadcast %27 : i1 to vector<18x1x1xi1>
    %29 = arith.andi %26, %28 : vector<18x1x1xi1>
    %30 = arith.ori %24, %29 : vector<18x1x1xi1>
    %31 = arith.extui %30 : vector<18x1x1xi1> to vector<18x1x1xi32>
    %32 = arith.sitofp %31 : vector<18x1x1xi32> to vector<18x1x1xf32>
    %cst_16 = arith.constant 1.000000e+00 : f32
    %33 = vector.broadcast %cst_16 : f32 to vector<18x1x1xf32>
    %34 = arith.subf %33, %32 : vector<18x1x1xf32>
    %35 = vector.broadcast %34 : vector<18x1x1xf32> to vector<18x16x128xf32>
    %36 = arith.mulf %18, %35 : vector<18x16x128xf32>
    %37 = tpu.iota {dimensions = array<i32: 1>} : vector<1x16x1xi32>
    %c1_i32 = arith.constant 1 : i32
    %38 = vector.broadcast %c1_i32 : i32 to vector<1x16x1xi32>
    %39 = arith.cmpi sge, %37, %38 : vector<1x16x1xi32>
    %40 = arith.extui %39 : vector<1x16x1xi1> to vector<1x16x1xi32>
    %41 = arith.sitofp %40 : vector<1x16x1xi32> to vector<1x16x1xf32>
    %c15_i32 = arith.constant 15 : i32
    %42 = vector.broadcast %c15_i32 : i32 to vector<1x16x1xi32>
    %43 = arith.cmpi slt, %37, %42 : vector<1x16x1xi32>
    %44 = arith.extui %43 : vector<1x16x1xi1> to vector<1x16x1xi32>
    %45 = arith.sitofp %44 : vector<1x16x1xi32> to vector<1x16x1xf32>
    %c1_i32_17 = arith.constant 1 : i32
    %46 = tpu.dynamic_rotate %36 by %c1_i32_17 dim 1 : vector<18x16x128xf32>, i32 -> vector<18x16x128xf32>
    %47 = vector.broadcast %41 : vector<1x16x1xf32> to vector<18x16x128xf32>
    %48 = arith.mulf %46, %47 : vector<18x16x128xf32>
    %49 = arith.truncf %48 : vector<18x16x128xf32> to vector<18x16x128xbf16>
    %50 = arith.truncf %36 : vector<18x16x128xf32> to vector<18x16x128xbf16>
    %c15_i32_18 = arith.constant 15 : i32
    %51 = tpu.dynamic_rotate %36 by %c15_i32_18 dim 1 : vector<18x16x128xf32>, i32 -> vector<18x16x128xf32>
    %52 = vector.broadcast %45 : vector<1x16x1xf32> to vector<18x16x128xf32>
    %53 = arith.mulf %51, %52 : vector<18x16x128xf32>
    %54 = arith.truncf %53 : vector<18x16x128xf32> to vector<18x16x128xbf16>
    %55 = tpu.concatenate %49, %50, %54 in 2 : vector<18x16x128xbf16>, vector<18x16x128xbf16>, vector<18x16x128xbf16> -> vector<18x16x384xbf16>
    %cst_19 = arith.constant 0.000000e+00 : f32
    %56 = vector.broadcast %cst_19 : f32 to vector<256x128xf32>
    %57 = vector.extract_strided_slice %55 {offsets = [0, 0, 0], sizes = [16, 16, 384], strides = [1, 1, 1]} : vector<18x16x384xbf16> to vector<16x16x384xbf16>
    %58 = vector.shape_cast %57 : vector<16x16x384xbf16> to vector<256x384xbf16>
    %c0_20 = arith.constant 0 : index
    %c0_21 = arith.constant 0 : index
    %c0_22 = arith.constant 0 : index
    %59 = vector.load %arg7[%c0_20, %c0_21, %c0_22] : memref<3x384x128xbf16, #tpu.memory_space<vmem>>, vector<1x384x128xbf16>
    %60 = vector.shape_cast %59 : vector<1x384x128xbf16> to vector<384x128xbf16>
    %cst_23 = arith.constant dense<0.000000e+00> : vector<256x128xf32>
    %61 = tpu.matmul %58, %60, %cst_23 {dimension_numbers = #tpu.dot_dimension_numbers<[1], [0], [0], [1], [0, 0, 1, 1], [], []>} : vector<256x384xbf16>, vector<384x128xbf16>, vector<256x128xf32> -> vector<256x128xf32>
    %62 = arith.addf %56, %61 : vector<256x128xf32>
    %63 = vector.extract_strided_slice %55 {offsets = [1, 0, 0], sizes = [16, 16, 384], strides = [1, 1, 1]} : vector<18x16x384xbf16> to vector<16x16x384xbf16>
    %64 = vector.shape_cast %63 : vector<16x16x384xbf16> to vector<256x384xbf16>
    %c1 = arith.constant 1 : index
    %c0_24 = arith.constant 0 : index
    %c0_25 = arith.constant 0 : index
    %65 = vector.load %arg7[%c1, %c0_24, %c0_25] : memref<3x384x128xbf16, #tpu.memory_space<vmem>>, vector<1x384x128xbf16>
    %66 = vector.shape_cast %65 : vector<1x384x128xbf16> to vector<384x128xbf16>
    %cst_26 = arith.constant dense<0.000000e+00> : vector<256x128xf32>
    %67 = tpu.matmul %64, %66, %cst_26 {dimension_numbers = #tpu.dot_dimension_numbers<[1], [0], [0], [1], [0, 0, 1, 1], [], []>} : vector<256x384xbf16>, vector<384x128xbf16>, vector<256x128xf32> -> vector<256x128xf32>
    %68 = arith.addf %62, %67 : vector<256x128xf32>
    %69 = vector.extract_strided_slice %55 {offsets = [2, 0, 0], sizes = [16, 16, 384], strides = [1, 1, 1]} : vector<18x16x384xbf16> to vector<16x16x384xbf16>
    %70 = vector.shape_cast %69 : vector<16x16x384xbf16> to vector<256x384xbf16>
    %c2 = arith.constant 2 : index
    %c0_27 = arith.constant 0 : index
    %c0_28 = arith.constant 0 : index
    %71 = vector.load %arg7[%c2, %c0_27, %c0_28] : memref<3x384x128xbf16, #tpu.memory_space<vmem>>, vector<1x384x128xbf16>
    %72 = vector.shape_cast %71 : vector<1x384x128xbf16> to vector<384x128xbf16>
    %cst_29 = arith.constant dense<0.000000e+00> : vector<256x128xf32>
    %73 = tpu.matmul %70, %72, %cst_29 {dimension_numbers = #tpu.dot_dimension_numbers<[1], [0], [0], [1], [0, 0, 1, 1], [], []>} : vector<256x384xbf16>, vector<384x128xbf16>, vector<256x128xf32> -> vector<256x128xf32>
    %74 = arith.addf %68, %73 : vector<256x128xf32>
    %c0_30 = arith.constant 0 : index
    %c0_31 = arith.constant 0 : index
    %75 = vector.load %arg8[%c0_30, %c0_31] : memref<1x128xf32, #tpu.memory_space<vmem>>, vector<1x128xf32>
    %76 = vector.broadcast %75 : vector<1x128xf32> to vector<256x128xf32>
    %77 = arith.mulf %74, %76 : vector<256x128xf32>
    %c0_32 = arith.constant 0 : index
    %c0_33 = arith.constant 0 : index
    %78 = vector.load %arg9[%c0_32, %c0_33] : memref<1x128xf32, #tpu.memory_space<vmem>>, vector<1x128xf32>
    %79 = vector.broadcast %78 : vector<1x128xf32> to vector<256x128xf32>
    %80 = arith.addf %77, %79 : vector<256x128xf32>
    %cst_34 = arith.constant 0.000000e+00 : f32
    %81 = vector.broadcast %cst_34 : f32 to vector<256x128xf32>
    %82 = arith.maximumf %80, %81 : vector<256x128xf32>
    %83 = vector.shape_cast %82 : vector<256x128xf32> to vector<8x2x16x128xf32>
    %84 = vector.extract_strided_slice %83 {offsets = [0, 0, 0, 0], sizes = [8, 1, 16, 128], strides = [1, 1, 1, 1]} : vector<8x2x16x128xf32> to vector<8x1x16x128xf32>
    %85 = vector.shape_cast %84 : vector<8x1x16x128xf32> to vector<8x16x128xf32>
    %86 = vector.extract_strided_slice %83 {offsets = [0, 1, 0, 0], sizes = [8, 1, 16, 128], strides = [1, 1, 1, 1]} : vector<8x2x16x128xf32> to vector<8x1x16x128xf32>
    %87 = vector.shape_cast %86 : vector<8x1x16x128xf32> to vector<8x16x128xf32>
    %88 = arith.addf %85, %87 : vector<8x16x128xf32>
    %89 = vector.shape_cast %88 : vector<8x16x128xf32> to vector<128x128xf32>
    %c0_35 = arith.constant 0 : index
    %c0_36 = arith.constant 0 : index
    %90 = vector.load %arg11[%c0_35, %c0_36] : memref<128x128xf32, #tpu.memory_space<vmem>>, vector<128x128xf32>
    tpu.vector_store %arg11[%c0_35, %c0_36], %89 {strides = array<i32>} : memref<128x128xf32, #tpu.memory_space<vmem>>, vector<128x128xf32>,
    %c0_37 = arith.constant 0 : index
    %c0_38 = arith.constant 0 : index
    %91 = tpu.strided_load %arg11[%c0_37, %c0_38] {strides = array<i32: 2, 1>} : memref<128x128xf32, #tpu.memory_space<vmem>>, vector<64x128xf32>
    %c1_39 = arith.constant 1 : index
    %c0_40 = arith.constant 0 : index
    %92 = tpu.strided_load %arg11[%c1_39, %c0_40] {strides = array<i32: 2, 1>} : memref<128x128xf32, #tpu.memory_space<vmem>>, vector<64x128xf32>
    %93 = arith.addf %91, %92 : vector<64x128xf32>
    %cst_41 = arith.constant 2.500000e-01 : f32
    %94 = vector.broadcast %cst_41 : f32 to vector<64x128xf32>
    %95 = arith.mulf %93, %94 : vector<64x128xf32>
    %96 = vector.shape_cast %95 : vector<64x128xf32> to vector<1x8x8x128xf32>
    %97 = arith.truncf %96 : vector<1x8x8x128xf32> to vector<1x8x8x128xbf16>
    %c0_42 = arith.constant 0 : index
    %c0_43 = arith.constant 0 : index
    %c0_44 = arith.constant 0 : index
    %c0_45 = arith.constant 0 : index
    %98 = vector.load %arg10[%c0_42, %c0_43, %c0_44, %c0_45] : memref<1x8x8x128xbf16, #tpu.memory_space<vmem>>, vector<1x8x8x128xbf16>
    tpu.vector_store %arg10[%c0_42, %c0_43, %c0_44, %c0_45], %97 {strides = array<i32>} : memref<1x8x8x128xbf16, #tpu.memory_space<vmem>>, vector<1x8x8x128xbf16>,
    return
  }
  func.func @transform_0(%arg0: i32, %arg1: i32) -> (i32, i32, i32, i32) {
    %c0_i32 = arith.constant 0 : i32
    %c0_i32_0 = arith.constant 0 : i32
    %c0_i32_1 = arith.constant 0 : i32
    return %arg0, %arg1, %c0_i32, %c0_i32_0 : i32, i32, i32, i32
  }
  func.func @transform_1(%arg0: i32, %arg1: i32) -> (i32, i32, i32, i32) {
    %c1_i32 = arith.constant 1 : i32
    %0 = arith.muli %arg0, %c1_i32 : i32
    %1 = arith.addi %0, %arg1 : i32
    %c0_i32 = arith.constant 0 : i32
    %c0_i32_0 = arith.constant 0 : i32
    %c0_i32_1 = arith.constant 0 : i32
    %c0_i32_2 = arith.constant 0 : i32
    return %1, %c0_i32, %c0_i32_0, %c0_i32_1 : i32, i32, i32, i32
  }
  func.func @transform_2(%arg0: i32, %arg1: i32) -> (i32, i32) {
    %c0_i32 = arith.constant 0 : i32
    %c0_i32_0 = arith.constant 0 : i32
    %c0_i32_1 = arith.constant 0 : i32
    return %c0_i32, %c0_i32_0 : i32, i32
  }
  func.func @transform_3(%arg0: i32, %arg1: i32) -> (i32, i32) {
    %c0_i32 = arith.constant 0 : i32
    %c0_i32_0 = arith.constant 0 : i32
    %c0_i32_1 = arith.constant 0 : i32
    return %c0_i32, %c0_i32_0 : i32, i32
  }
  func.func @transform_4(%arg0: i32, %arg1: i32) -> (i32, i32) {
    %c0_i32 = arith.constant 0 : i32
    %c0_i32_0 = arith.constant 0 : i32
    %c0_i32_1 = arith.constant 0 : i32
    return %c0_i32, %c0_i32_0 : i32, i32
  }
  func.func @transform_5(%arg0: i32, %arg1: i32) -> (i32, i32, i32) {
    %c0_i32 = arith.constant 0 : i32
    %c0_i32_0 = arith.constant 0 : i32
    %c0_i32_1 = arith.constant 0 : i32
    %c0_i32_2 = arith.constant 0 : i32
    return %c0_i32, %c0_i32_0, %c0_i32_1 : i32, i32, i32
  }
  func.func @transform_6(%arg0: i32, %arg1: i32) -> (i32, i32) {
    %c0_i32 = arith.constant 0 : i32
    %c0_i32_0 = arith.constant 0 : i32
    %c0_i32_1 = arith.constant 0 : i32
    return %c0_i32, %c0_i32_0 : i32, i32
  }
  func.func @transform_7(%arg0: i32, %arg1: i32) -> (i32, i32) {
    %c0_i32 = arith.constant 0 : i32
    %c0_i32_0 = arith.constant 0 : i32
    %c0_i32_1 = arith.constant 0 : i32
    return %c0_i32, %c0_i32_0 : i32, i32
  }
  func.func @transform_8(%arg0: i32, %arg1: i32) -> (i32, i32, i32, i32) {
    %c0_i32 = arith.constant 0 : i32
    %c0_i32_0 = arith.constant 0 : i32
    %c0_i32_1 = arith.constant 0 : i32
    return %arg0, %arg1, %c0_i32, %c0_i32_0 : i32, i32, i32, i32
  }
}

module attributes {stable_mosaic.version = 11 : i64} {
  func.func @kern(%arg0: i32, %arg1: i32, %arg2: i32, %arg3: memref<128x128xbf16, #tpu.memory_space<vmem>>, %arg4: memref<128x128xbf16, #tpu.memory_space<vmem>>, %arg5: memref<1x128xf32, #tpu.memory_space<vmem>>, %arg6: memref<1x128xf32, #tpu.memory_space<vmem>>, %arg7: memref<128x128xbf16, #tpu.memory_space<vmem>>, %arg8: memref<128x128xf32, #tpu.memory_space<vmem>>, %arg9: memref<128x128xf32, #tpu.memory_space<vmem>>) attributes {dimension_semantics = [#tpu.dimension_semantics<parallel>, #tpu.dimension_semantics<parallel>, #tpu.dimension_semantics<arbitrary>], iteration_bounds = array<i64: 1, 1, 1>, scalar_prefetch = 0 : i64, scratch_operands = 1 : i64, tpu.core_type = #tpu.core_type<tc>, window_params = [{transform_indices = @transform_0, window_bounds = array<i64: 128, 128>}, {transform_indices = @transform_1, window_bounds = array<i64: 128, 128>}, {transform_indices = @transform_2, window_bounds = array<i64: 1, 128>}, {transform_indices = @transform_3, window_bounds = array<i64: 1, 128>}, {transform_indices = @transform_4, window_bounds = array<i64: 128, 128>}, {transform_indices = @transform_5, window_bounds = array<i64: 128, 128>}]} {
    %c0_i32 = arith.constant 0 : i32
    %0 = arith.cmpi eq, %arg2, %c0_i32 : i32
    %1 = arith.extui %0 : i1 to i32
    %c0_i32_0 = arith.constant 0 : i32
    %2 = arith.cmpi ne, %1, %c0_i32_0 : i32
    scf.if %2 {
      %cst_10 = arith.constant 0.000000e+00 : f32
      %12 = vector.broadcast %cst_10 : f32 to vector<128x128xf32>
      %c0_11 = arith.constant 0 : index
      %c0_12 = arith.constant 0 : index
      %13 = vector.load %arg9[%c0_11, %c0_12] : memref<128x128xf32, #tpu.memory_space<vmem>>, vector<128x128xf32>
      tpu.vector_store %arg9[%c0_11, %c0_12], %12 {strides = array<i32>} : memref<128x128xf32, #tpu.memory_space<vmem>>, vector<128x128xf32>,
    } else {
    }
    %c0 = arith.constant 0 : index
    %c0_1 = arith.constant 0 : index
    %3 = vector.load %arg9[%c0, %c0_1] : memref<128x128xf32, #tpu.memory_space<vmem>>, vector<128x128xf32>
    %c0_2 = arith.constant 0 : index
    %c0_3 = arith.constant 0 : index
    %4 = vector.load %arg3[%c0_2, %c0_3] : memref<128x128xbf16, #tpu.memory_space<vmem>>, vector<128x128xbf16>
    %c0_4 = arith.constant 0 : index
    %c0_5 = arith.constant 0 : index
    %5 = vector.load %arg4[%c0_4, %c0_5] : memref<128x128xbf16, #tpu.memory_space<vmem>>, vector<128x128xbf16>
    %cst = arith.constant dense<0.000000e+00> : vector<128x128xf32>
    %6 = tpu.matmul %4, %5, %cst {dimension_numbers = #tpu.dot_dimension_numbers<[1], [0], [0], [1], [0, 0, 1, 1], [], []>} : vector<128x128xbf16>, vector<128x128xbf16>, vector<128x128xf32> -> vector<128x128xf32>
    %7 = arith.addf %3, %6 : vector<128x128xf32>
    %c0_6 = arith.constant 0 : index
    %c0_7 = arith.constant 0 : index
    %8 = vector.load %arg9[%c0_6, %c0_7] : memref<128x128xf32, #tpu.memory_space<vmem>>, vector<128x128xf32>
    tpu.vector_store %arg9[%c0_6, %c0_7], %7 {strides = array<i32>} : memref<128x128xf32, #tpu.memory_space<vmem>>, vector<128x128xf32>,
    %c0_i32_8 = arith.constant 0 : i32
    %9 = arith.cmpi eq, %arg2, %c0_i32_8 : i32
    %10 = arith.extui %9 : i1 to i32
    %c0_i32_9 = arith.constant 0 : i32
    %11 = arith.cmpi ne, %10, %c0_i32_9 : i32
    scf.if %11 {
      %c0_10 = arith.constant 0 : index
      %c0_11 = arith.constant 0 : index
      %12 = vector.load %arg9[%c0_10, %c0_11] : memref<128x128xf32, #tpu.memory_space<vmem>>, vector<128x128xf32>
      %c0_12 = arith.constant 0 : index
      %c0_13 = arith.constant 0 : index
      %13 = vector.load %arg5[%c0_12, %c0_13] : memref<1x128xf32, #tpu.memory_space<vmem>>, vector<1x128xf32>
      %14 = vector.broadcast %13 : vector<1x128xf32> to vector<128x128xf32>
      %15 = arith.mulf %12, %14 : vector<128x128xf32>
      %c0_14 = arith.constant 0 : index
      %c0_15 = arith.constant 0 : index
      %16 = vector.load %arg6[%c0_14, %c0_15] : memref<1x128xf32, #tpu.memory_space<vmem>>, vector<1x128xf32>
      %17 = vector.broadcast %16 : vector<1x128xf32> to vector<128x128xf32>
      %18 = arith.addf %15, %17 : vector<128x128xf32>
      %c0_16 = arith.constant 0 : index
      %c0_17 = arith.constant 0 : index
      %19 = vector.load %arg7[%c0_16, %c0_17] : memref<128x128xbf16, #tpu.memory_space<vmem>>, vector<128x128xbf16>
      %20 = arith.extf %19 : vector<128x128xbf16> to vector<128x128xf32>
      %21 = arith.addf %18, %20 : vector<128x128xf32>
      %cst_18 = arith.constant 0.000000e+00 : f32
      %22 = vector.broadcast %cst_18 : f32 to vector<128x128xf32>
      %23 = arith.maximumf %21, %22 : vector<128x128xf32>
      %c0_19 = arith.constant 0 : index
      %c0_20 = arith.constant 0 : index
      %24 = vector.load %arg8[%c0_19, %c0_20] : memref<128x128xf32, #tpu.memory_space<vmem>>, vector<128x128xf32>
      tpu.vector_store %arg8[%c0_19, %c0_20], %23 {strides = array<i32>} : memref<128x128xf32, #tpu.memory_space<vmem>>, vector<128x128xf32>,
    } else {
    }
    return
  }
  func.func @transform_0(%arg0: i32, %arg1: i32, %arg2: i32) -> (i32, i32) {
    %c0_i32 = arith.constant 0 : i32
    return %arg0, %arg2 : i32, i32
  }
  func.func @transform_1(%arg0: i32, %arg1: i32, %arg2: i32) -> (i32, i32) {
    %c0_i32 = arith.constant 0 : i32
    return %arg2, %arg1 : i32, i32
  }
  func.func @transform_2(%arg0: i32, %arg1: i32, %arg2: i32) -> (i32, i32) {
    %c0_i32 = arith.constant 0 : i32
    %c0_i32_0 = arith.constant 0 : i32
    return %c0_i32, %arg1 : i32, i32
  }
  func.func @transform_3(%arg0: i32, %arg1: i32, %arg2: i32) -> (i32, i32) {
    %c0_i32 = arith.constant 0 : i32
    %c0_i32_0 = arith.constant 0 : i32
    return %c0_i32, %arg1 : i32, i32
  }
  func.func @transform_4(%arg0: i32, %arg1: i32, %arg2: i32) -> (i32, i32) {
    %c0_i32 = arith.constant 0 : i32
    return %arg0, %arg1 : i32, i32
  }
  func.func @transform_5(%arg0: i32, %arg1: i32, %arg2: i32) -> (i32, i32) {
    %c0_i32 = arith.constant 0 : i32
    return %arg0, %arg1 : i32, i32
  }
}

</mosaic_0001>

<llo_original>
// kernel: bottleneck_forward.4
$region0: #{bottleneck_forward.4}
  #allocation0 [shape = 'u32[]', space=smem, size = 0x4, offset = 0x4, fixed_abs, tag = 'smem constant byte address 0x4 - core index']
  #allocation1 [shape = 'u32[144,128]{1,0:T(1,128)}', space=vmem, size = 0x12000, scoped, tag = 'internal scratch']
  #allocation2 [shape = 'f32[128,128]{1,0:T(8,128)}', space=vmem, size = 0x10000, scoped, tag = 'scratch operand']
  %s0 = inlined_call_operand.vmem [shape: bf16[128,128], index: 0, kind: input, shape index: {}]
  %s1 = inlined_call_operand.vmem [shape: bf16[128,128], index: 1, kind: input, shape index: {}]
  %s2 = inlined_call_operand.vmem [shape: f32[1,128], index: 2, kind: input, shape index: {}]
  %s3 = inlined_call_operand.vmem [shape: f32[1,128], index: 3, kind: input, shape index: {}]
  %s4 = inlined_call_operand.vmem [shape: bf16[128,128], index: 4, kind: output, shape index: {}]
  %s5 = sld [smem:[#allocation0]]
  $region34: #{bottleneck_forward.4} parent=0
    _
  %s7 = ssub.s32 1, %s5
  %s8 = scalar_select 0, %s7, %s5
  // Predicated region
  $region2: #{bottleneck_forward.4} parent=0 // pred_check
    _
  $region3: #{bottleneck_forward.4} parent=0 // pred_check_branch
    %10 = sbr.rel (0) target = $region5
  $region4: #{bottleneck_forward.4} parent=0 // pred_region
    _
  $region5: #{bottleneck_forward.4} parent=0 // pred_fallthru
    _
  // Predicated region
  $region6: #{bottleneck_forward.4} parent=0 // pred_check
    _
  $region7: #{bottleneck_forward.4} parent=0 // pred_check_branch
    %12 = sbr.rel (0) target = $region9
  $region8: #{bottleneck_forward.4} parent=0 // pred_region
    _
  $region9: #{bottleneck_forward.4} parent=0 // pred_fallthru
    _
  // Predicated region
  $region10: #{bottleneck_forward.4} parent=0 // pred_check
    _
  $region11: #{bottleneck_forward.4} parent=0 // pred_check_branch
    %14 = sbr.rel (0) target = $region13
  $region12: #{bottleneck_forward.4} parent=0 // pred_region
    _
  $region13: #{bottleneck_forward.4} parent=0 // pred_fallthru
    _
  // Predicated region
  $region14: #{bottleneck_forward.4} parent=0 // pred_check
    _
  $region15: #{bottleneck_forward.4} parent=0 // pred_check_branch
    %16 = sbr.rel (0) target = $region17
  $region16: #{bottleneck_forward.4} parent=0 // pred_region
    _
  $region17: #{bottleneck_forward.4} parent=0 // pred_fallthru
    _
  %p18 = scmp.eq.s32.totalorder 0, 0
  // Predicated region
  $region18: #{bottleneck_forward.4} parent=0 // pred_check
    %p19 = pneg %p18
  $region19: #{bottleneck_forward.4} parent=0 // pred_check_branch
    %21 = sbr.rel (%p19) target = $region21
  $region20: #{bottleneck_forward.4} parent=0 // pred_region
    %22 = vst [vmem:[#allocation2] sm:$0xff] 0.0
    %23 = vst [vmem:[#allocation2 + $0x8] sm:$0xff] 0.0
    %24 = vst [vmem:[#allocation2 + $0x10] sm:$0xff] 0.0
    %25 = vst [vmem:[#allocation2 + $0x18] sm:$0xff] 0.0
    %26 = vst [vmem:[#allocation2 + $0x20] sm:$0xff] 0.0
    %27 = vst [vmem:[#allocation2 + $0x28] sm:$0xff] 0.0
    %28 = vst [vmem:[#allocation2 + $0x30] sm:$0xff] 0.0
    %29 = vst [vmem:[#allocation2 + $0x38] sm:$0xff] 0.0
    %30 = vst [vmem:[#allocation2 + $0x40] sm:$0xff] 0.0
    %31 = vst [vmem:[#allocation2 + $0x48] sm:$0xff] 0.0
    %32 = vst [vmem:[#allocation2 + $0x50] sm:$0xff] 0.0
    %33 = vst [vmem:[#allocation2 + $0x58] sm:$0xff] 0.0
    %34 = vst [vmem:[#allocation2 + $0x60] sm:$0xff] 0.0
    %35 = vst [vmem:[#allocation2 + $0x68] sm:$0xff] 0.0
    %36 = vst [vmem:[#allocation2 + $0x70] sm:$0xff] 0.0
    %37 = vst [vmem:[#allocation2 + $0x78] sm:$0xff] 0.0
  $region21: #{bottleneck_forward.4} parent=0 // pred_fallthru
    _
  %v38 = vld [vmem:[#allocation2] sm:$0xff]
  %v39 = vld [vmem:[#allocation2 + $0x8] sm:$0xff]
  %v40 = vld [vmem:[#allocation2 + $0x10] sm:$0xff]
  %v41 = vld [vmem:[#allocation2 + $0x18] sm:$0xff]
  %v42 = vld [vmem:[#allocation2 + $0x20] sm:$0xff]
  %v43 = vld [vmem:[#allocation2 + $0x28] sm:$0xff]
  %v44 = vld [vmem:[#allocation2 + $0x30] sm:$0xff]
  %v45 = vld [vmem:[#allocation2 + $0x38] sm:$0xff]
  %v46 = vld [vmem:[#allocation2 + $0x40] sm:$0xff]
  %v47 = vld [vmem:[#allocation2 + $0x48] sm:$0xff]
  %v48 = vld [vmem:[#allocation2 + $0x50] sm:$0xff]
  %v49 = vld [vmem:[#allocation2 + $0x58] sm:$0xff]
  %v50 = vld [vmem:[#allocation2 + $0x60] sm:$0xff]
  %v51 = vld [vmem:[#allocation2 + $0x68] sm:$0xff]
  %v52 = vld [vmem:[#allocation2 + $0x70] sm:$0xff]
  %v53 = vld [vmem:[#allocation2 + $0x78] sm:$0xff]
  %v54 = vld [vmem:[%s0] sm:$0xf]
  %v55 = vld [vmem:[%s0 + $0x4] sm:$0xf]
  %v56 = vld [vmem:[%s0 + $0x8] sm:$0xf]
  %v57 = vld [vmem:[%s0 + $0xc] sm:$0xf]
  %v58 = vld [vmem:[%s0 + $0x10] sm:$0xf]
  %v59 = vld [vmem:[%s0 + $0x14] sm:$0xf]
  %v60 = vld [vmem:[%s0 + $0x18] sm:$0xf]
  %v61 = vld [vmem:[%s0 + $0x1c] sm:$0xf]
  %v62 = vld [vmem:[%s0 + $0x20] sm:$0xf]
  %v63 = vld [vmem:[%s0 + $0x24] sm:$0xf]
  %v64 = vld [vmem:[%s0 + $0x28] sm:$0xf]
  %v65 = vld [vmem:[%s0 + $0x2c] sm:$0xf]
  %v66 = vld [vmem:[%s0 + $0x30] sm:$0xf]
  %v67 = vld [vmem:[%s0 + $0x34] sm:$0xf]
  %v68 = vld [vmem:[%s0 + $0x38] sm:$0xf]
  %v69 = vld [vmem:[%s0 + $0x3c] sm:$0xf]
  %v70 = vld [vmem:[%s1] sm:$0xf]
  %v71 = vld [vmem:[%s1 + $0x4] sm:$0xf]
  %v72 = vld [vmem:[%s1 + $0x8] sm:$0xf]
  %v73 = vld [vmem:[%s1 + $0xc] sm:$0xf]
  %v74 = vld [vmem:[%s1 + $0x10] sm:$0xf]
  %v75 = vld [vmem:[%s1 + $0x14] sm:$0xf]
  %v76 = vld [vmem:[%s1 + $0x18] sm:$0xf]
  %v77 = vld [vmem:[%s1 + $0x1c] sm:$0xf]
  %v78 = vld [vmem:[%s1 + $0x20] sm:$0xf]
  %v79 = vld [vmem:[%s1 + $0x24] sm:$0xf]
  %v80 = vld [vmem:[%s1 + $0x28] sm:$0xf]
  %v81 = vld [vmem:[%s1 + $0x2c] sm:$0xf]
  %v82 = vld [vmem:[%s1 + $0x30] sm:$0xf]
  %v83 = vld [vmem:[%s1 + $0x34] sm:$0xf]
  %v84 = vld [vmem:[%s1 + $0x38] sm:$0xf]
  %v85 = vld [vmem:[%s1 + $0x3c] sm:$0xf]
  %v102 = vunpack.c.l.b16 %v54
  %v103 = vunpack.c.l.b16 %v55
  %v104 = vunpack.c.l.b16 %v56
  %v105 = vunpack.c.l.b16 %v57
  %v106 = vunpack.c.l.b16 %v58
  %v107 = vunpack.c.l.b16 %v59
  %v108 = vunpack.c.l.b16 %v60
  %v109 = vunpack.c.l.b16 %v61
  %v110 = vunpack.c.l.b16 %v62
  %v111 = vunpack.c.l.b16 %v63
  %v112 = vunpack.c.l.b16 %v64
  %v113 = vunpack.c.l.b16 %v65
  %v114 = vunpack.c.l.b16 %v66
  %v115 = vunpack.c.l.b16 %v67
  %v116 = vunpack.c.l.b16 %v68
  %v117 = vunpack.c.l.b16 %v69
  %v118 = vpack.c.b16 %v103, %v102
  %v119 = vpack.c.b16 %v105, %v104
  %v120 = vpack.c.b16 %v107, %v106
  %v121 = vpack.c.b16 %v109, %v108
  %v122 = vpack.c.b16 %v111, %v110
  %v123 = vpack.c.b16 %v113, %v112
  %v124 = vpack.c.b16 %v115, %v114
  %v125 = vpack.c.b16 %v117, %v116
  %v150 = vunpack.c.l.b16 %v70
  %v151 = vunpack.c.l.b16 %v71
  %v152 = vunpack.c.l.b16 %v72
  %v153 = vunpack.c.l.b16 %v73
  %v154 = vunpack.c.l.b16 %v74
  %v155 = vunpack.c.l.b16 %v75
  %v156 = vunpack.c.l.b16 %v76
  %v157 = vunpack.c.l.b16 %v77
  %v158 = vunpack.c.l.b16 %v78
  %v159 = vunpack.c.l.b16 %v79
  %v160 = vunpack.c.l.b16 %v80
  %v161 = vunpack.c.l.b16 %v81
  %v162 = vunpack.c.l.b16 %v82
  %v163 = vunpack.c.l.b16 %v83
  %v164 = vunpack.c.l.b16 %v84
  %v165 = vunpack.c.l.b16 %v85
  %v166 = vpack.c.b16 %v151, %v150
  %v167 = vpack.c.b16 %v153, %v152
  %v168 = vpack.c.b16 %v155, %v154
  %v169 = vpack.c.b16 %v157, %v156
  %v170 = vpack.c.b16 %v159, %v158
  %v171 = vpack.c.b16 %v161, %v160
  %v172 = vpack.c.b16 %v163, %v162
  %v173 = vpack.c.b16 %v165, %v164
  %182 = vmatprep.subr.bf16.mxu0 0
  %183 = vmatpush1.bf16.msra.mxu0 %v166
  %184 = vmatprep.subr.bf16.mxu0 0
  %185 = vmatpush1.bf16.msra.mxu0 %v167
  %186 = vmatprep.subr.bf16.mxu0 0
  %187 = vmatpush1.bf16.msra.mxu0 %v168
  %188 = vmatprep.subr.bf16.mxu0 0
  %189 = vmatpush1.bf16.msra.mxu0 %v169
  %190 = vmatprep.subr.bf16.mxu0 0
  %191 = vmatpush1.bf16.msra.mxu0 %v170
  %192 = vmatprep.subr.bf16.mxu0 0
  %193 = vmatpush1.bf16.msra.mxu0 %v171
  %194 = vmatprep.subr.bf16.mxu0 0
  %195 = vmatpush1.bf16.msra.mxu0 %v172
  %196 = vmatprep.subr.bf16.mxu0 0
  %197 = vmatpush1.bf16.msra.mxu0 %v173
  %198 = vmatprep.subr.bf16.mxu0 0
  %199 = vmatpush1.bf16.msra.mxu0 0
  %200 = vmatprep.subr.bf16.mxu0 0
  %201 = vmatpush1.bf16.msra.mxu0 0
  %202 = vmatprep.subr.bf16.mxu0 0
  %203 = vmatpush1.bf16.msra.mxu0 0
  %204 = vmatprep.subr.bf16.mxu0 0
  %205 = vmatpush1.bf16.msra.mxu0 0
  %206 = vmatprep.subr.bf16.mxu0 0
  %207 = vmatpush1.bf16.msra.mxu0 0
  %208 = vmatprep.subr.bf16.mxu0 0
  %209 = vmatpush1.bf16.msra.mxu0 0
  %210 = vmatprep.subr.bf16.mxu0 0
  %211 = vmatpush1.bf16.msra.mxu0 0
  %212 = vmatprep.subr.bf16.mxu0 0
  %213 = vmatpush1.bf16.msra.mxu0 0
  %214 = vmatprep.mubr.bf16.mxu0 0
  %215 = vmatmul.mubr.bf16.gmra.mrb[0].mxu0 %v118
  %v216 = vpop.f32.mrb[0].mxu0
  %v217 = vadd.f32 0.0, %v216
  %v218 = vpop.f32.mrb[0].mxu0
  %v219 = vpop.f32.mrb[0].mxu0
  %v220 = vadd.f32 0.0, %v219
  %v221 = vpop.f32.mrb[0].mxu0
  %222 = vmatprep.mubr.bf16.mxu0 0
  %223 = vmatmul.mubr.bf16.gmra.mrb[0].mxu0 %v119
  %v224 = vpop.f32.mrb[0].mxu0
  %v225 = vadd.f32 0.0, %v224
  %v226 = vpop.f32.mrb[0].mxu0
  %v227 = vpop.f32.mrb[0].mxu0
  %v228 = vadd.f32 0.0, %v227
  %v229 = vpop.f32.mrb[0].mxu0
  %230 = vmatprep.mubr.bf16.mxu0 0
  %231 = vmatmul.mubr.bf16.gmra.mrb[0].mxu0 %v120
  %v232 = vpop.f32.mrb[0].mxu0
  %v233 = vadd.f32 0.0, %v232
  %v234 = vpop.f32.mrb[0].mxu0
  %v235 = vpop.f32.mrb[0].mxu0
  %v236 = vadd.f32 0.0, %v235
  %v237 = vpop.f32.mrb[0].mxu0
  %238 = vmatprep.mubr.bf16.mxu0 0
  %239 = vmatmul.mubr.bf16.gmra.mrb[0].mxu0 %v121
  %v240 = vpop.f32.mrb[0].mxu0
  %v241 = vadd.f32 0.0, %v240
  %v242 = vpop.f32.mrb[0].mxu0
  %v243 = vpop.f32.mrb[0].mxu0
  %v244 = vadd.f32 0.0, %v243
  %v245 = vpop.f32.mrb[0].mxu0
  %246 = vmatprep.mubr.bf16.mxu0 0
  %247 = vmatmul.mubr.bf16.gmra.mrb[0].mxu0 %v122
  %v248 = vpop.f32.mrb[0].mxu0
  %v249 = vadd.f32 0.0, %v248
  %v250 = vpop.f32.mrb[0].mxu0
  %v251 = vpop.f32.mrb[0].mxu0
  %v252 = vadd.f32 0.0, %v251
  %v253 = vpop.f32.mrb[0].mxu0
  %254 = vmatprep.mubr.bf16.mxu0 0
  %255 = vmatmul.mubr.bf16.gmra.mrb[0].mxu0 %v123
  %v256 = vpop.f32.mrb[0].mxu0
  %v257 = vadd.f32 0.0, %v256
  %v258 = vpop.f32.mrb[0].mxu0
  %v259 = vpop.f32.mrb[0].mxu0
  %v260 = vadd.f32 0.0, %v259
  %v261 = vpop.f32.mrb[0].mxu0
  %262 = vmatprep.mubr.bf16.mxu0 0
  %263 = vmatmul.mubr.bf16.gmra.mrb[0].mxu0 %v124
  %v264 = vpop.f32.mrb[0].mxu0
  %v265 = vadd.f32 0.0, %v264
  %v266 = vpop.f32.mrb[0].mxu0
  %v267 = vpop.f32.mrb[0].mxu0
  %v268 = vadd.f32 0.0, %v267
  %v269 = vpop.f32.mrb[0].mxu0
  %270 = vmatprep.mubr.bf16.mxu0 0
  %271 = vmatmul.mubr.bf16.gmra.mrb[0].mxu0 %v125
  %v272 = vpop.f32.mrb[0].mxu0
  %v273 = vadd.f32 0.0, %v272
  %v274 = vpop.f32.mrb[0].mxu0
  %v275 = vpop.f32.mrb[0].mxu0
  %v276 = vadd.f32 0.0, %v275
  %v277 = vpop.f32.mrb[0].mxu0
  %278 = vdwg.mxu0
  %v279 = vadd.f32 %v38, %v217
  %v280 = vadd.f32 %v39, %v220
  %v281 = vadd.f32 %v40, %v225
  %v282 = vadd.f32 %v41, %v228
  %v283 = vadd.f32 %v42, %v233
  %v284 = vadd.f32 %v43, %v236
  %v285 = vadd.f32 %v44, %v241
  %v286 = vadd.f32 %v45, %v244
  %v287 = vadd.f32 %v46, %v249
  %v288 = vadd.f32 %v47, %v252
  %v289 = vadd.f32 %v48, %v257
  %v290 = vadd.f32 %v49, %v260
  %v291 = vadd.f32 %v50, %v265
  %v292 = vadd.f32 %v51, %v268
  %v293 = vadd.f32 %v52, %v273
  %v294 = vadd.f32 %v53, %v276
  %295 = vst [vmem:[#allocation2] sm:$0xff] %v279
  %296 = vst [vmem:[#allocation2 + $0x8] sm:$0xff] %v280
  %297 = vst [vmem:[#allocation2 + $0x10] sm:$0xff] %v281
  %298 = vst [vmem:[#allocation2 + $0x18] sm:$0xff] %v282
  %299 = vst [vmem:[#allocation2 + $0x20] sm:$0xff] %v283
  %300 = vst [vmem:[#allocation2 + $0x28] sm:$0xff] %v284
  %301 = vst [vmem:[#allocation2 + $0x30] sm:$0xff] %v285
  %302 = vst [vmem:[#allocation2 + $0x38] sm:$0xff] %v286
  %303 = vst [vmem:[#allocation2 + $0x40] sm:$0xff] %v287
  %304 = vst [vmem:[#allocation2 + $0x48] sm:$0xff] %v288
  %305 = vst [vmem:[#allocation2 + $0x50] sm:$0xff] %v289
  %306 = vst [vmem:[#allocation2 + $0x58] sm:$0xff] %v290
  %307 = vst [vmem:[#allocation2 + $0x60] sm:$0xff] %v291
  %308 = vst [vmem:[#allocation2 + $0x68] sm:$0xff] %v292
  %309 = vst [vmem:[#allocation2 + $0x70] sm:$0xff] %v293
  %310 = vst [vmem:[#allocation2 + $0x78] sm:$0xff] %v294
  // Predicated region
  $region22: #{bottleneck_forward.4} parent=0 // pred_check
    %p311 = pneg %p18
  $region23: #{bottleneck_forward.4} parent=0 // pred_check_branch
    %313 = sbr.rel (%p311) target = $region25
  $region24: #{bottleneck_forward.4} parent=0 // pred_region
    %v314 = vld [vmem:[#allocation2] sm:$0xff]
    %v315 = vld [vmem:[#allocation2 + $0x8] sm:$0xff]
    %v316 = vld [vmem:[#allocation2 + $0x10] sm:$0xff]
    %v317 = vld [vmem:[#allocation2 + $0x18] sm:$0xff]
    %v318 = vld [vmem:[#allocation2 + $0x20] sm:$0xff]
    %v319 = vld [vmem:[#allocation2 + $0x28] sm:$0xff]
    %v320 = vld [vmem:[#allocation2 + $0x30] sm:$0xff]
    %v321 = vld [vmem:[#allocation2 + $0x38] sm:$0xff]
    %v322 = vld [vmem:[#allocation2 + $0x40] sm:$0xff]
    %v323 = vld [vmem:[#allocation2 + $0x48] sm:$0xff]
    %v324 = vld [vmem:[#allocation2 + $0x50] sm:$0xff]
    %v325 = vld [vmem:[#allocation2 + $0x58] sm:$0xff]
    %v326 = vld [vmem:[#allocation2 + $0x60] sm:$0xff]
    %v327 = vld [vmem:[#allocation2 + $0x68] sm:$0xff]
    %v328 = vld [vmem:[#allocation2 + $0x70] sm:$0xff]
    %v329 = vld [vmem:[#allocation2 + $0x78] sm:$0xff]
    %v330 = vld [vmem:[%s2] sm:$0x1]
    %v332 = vlaneseq
    %v333 = vshrl.u32 %v332, 7
    %v334 = vsub.s32 0, %v333
    %v335 = vrot.slane %v330, %v334
    %v337 = vmul.f32 %v314, %v335
    %v338 = vmul.f32 %v315, %v335
    %v339 = vmul.f32 %v316, %v335
    %v340 = vmul.f32 %v317, %v335
    %v341 = vmul.f32 %v318, %v335
    %v342 = vmul.f32 %v319, %v335
    %v343 = vmul.f32 %v320, %v335
    %v344 = vmul.f32 %v321, %v335
    %v345 = vmul.f32 %v322, %v335
    %v346 = vmul.f32 %v323, %v335
    %v347 = vmul.f32 %v324, %v335
    %v348 = vmul.f32 %v325, %v335
    %v349 = vmul.f32 %v326, %v335
    %v350 = vmul.f32 %v327, %v335
    %v351 = vmul.f32 %v328, %v335
    %v352 = vmul.f32 %v329, %v335
    %v353 = vld [vmem:[%s3] sm:$0x1]
    %v355 = vlaneseq
    %v356 = vshrl.u32 %v355, 7
    %v357 = vsub.s32 0, %v356
    %v358 = vrot.slane %v353, %v357
    %v360 = vadd.f32 %v337, %v358
    %v361 = vadd.f32 %v338, %v358
    %v362 = vadd.f32 %v339, %v358
    %v363 = vadd.f32 %v340, %v358
    %v364 = vadd.f32 %v341, %v358
    %v365 = vadd.f32 %v342, %v358
    %v366 = vadd.f32 %v343, %v358
    %v367 = vadd.f32 %v344, %v358
    %v368 = vadd.f32 %v345, %v358
    %v369 = vadd.f32 %v346, %v358
    %v370 = vadd.f32 %v347, %v358
    %v371 = vadd.f32 %v348, %v358
    %v372 = vadd.f32 %v349, %v358
    %v373 = vadd.f32 %v350, %v358
    %v374 = vadd.f32 %v351, %v358
    %v375 = vadd.f32 %v352, %v358
    %v376 = vpack.c.bf16 %v361, %v360
    %v377 = vpack.c.bf16 %v363, %v362
    %v378 = vpack.c.bf16 %v365, %v364
    %v379 = vpack.c.bf16 %v367, %v366
    %v380 = vpack.c.bf16 %v369, %v368
    %v381 = vpack.c.bf16 %v371, %v370
    %v382 = vpack.c.bf16 %v373, %v372
    %v383 = vpack.c.bf16 %v375, %v374
    %v392 = vunpack.c.l.b16 %v376
    %v393 = vunpack.c.h.b16 %v376
    %v394 = vunpack.c.l.b16 %v377
    %v395 = vunpack.c.h.b16 %v377
    %v396 = vunpack.c.l.b16 %v378
    %v397 = vunpack.c.h.b16 %v378
    %v398 = vunpack.c.l.b16 %v379
    %v399 = vunpack.c.h.b16 %v379
    %v400 = vunpack.c.l.b16 %v380
    %v401 = vunpack.c.h.b16 %v380
    %v402 = vunpack.c.l.b16 %v381
    %v403 = vunpack.c.h.b16 %v381
    %v404 = vunpack.c.l.b16 %v382
    %v405 = vunpack.c.h.b16 %v382
    %v406 = vunpack.c.l.b16 %v383
    %v407 = vunpack.c.h.b16 %v383
    %v408 = vpack.c.b16 %v392, %v392
    %v409 = vpack.c.b16 %v393, %v393
    %v410 = vpack.c.b16 %v394, %v394
    %v411 = vpack.c.b16 %v395, %v395
    %v412 = vpack.c.b16 %v396, %v396
    %v413 = vpack.c.b16 %v397, %v397
    %v414 = vpack.c.b16 %v398, %v398
    %v415 = vpack.c.b16 %v399, %v399
    %v416 = vpack.c.b16 %v400, %v400
    %v417 = vpack.c.b16 %v401, %v401
    %v418 = vpack.c.b16 %v402, %v402
    %v419 = vpack.c.b16 %v403, %v403
    %v420 = vpack.c.b16 %v404, %v404
    %v421 = vpack.c.b16 %v405, %v405
    %v422 = vpack.c.b16 %v406, %v406
    %v423 = vpack.c.b16 %v407, %v407
    %440 = vst [vmem:[%s4] sm:$0xf] %v408
    %441 = vst [vmem:[%s4 + $0x4] sm:$0xf] %v409
    %442 = vst [vmem:[%s4 + $0x8] sm:$0xf] %v410
    %443 = vst [vmem:[%s4 + $0xc] sm:$0xf] %v411
    %444 = vst [vmem:[%s4 + $0x10] sm:$0xf] %v412
    %445 = vst [vmem:[%s4 + $0x14] sm:$0xf] %v413
    %446 = vst [vmem:[%s4 + $0x18] sm:$0xf] %v414
    %447 = vst [vmem:[%s4 + $0x1c] sm:$0xf] %v415
    %448 = vst [vmem:[%s4 + $0x20] sm:$0xf] %v416
    %449 = vst [vmem:[%s4 + $0x24] sm:$0xf] %v417
    %450 = vst [vmem:[%s4 + $0x28] sm:$0xf] %v418
    %451 = vst [vmem:[%s4 + $0x2c] sm:$0xf] %v419
    %452 = vst [vmem:[%s4 + $0x30] sm:$0xf] %v420
    %453 = vst [vmem:[%s4 + $0x34] sm:$0xf] %v421
    %454 = vst [vmem:[%s4 + $0x38] sm:$0xf] %v422
    %455 = vst [vmem:[%s4 + $0x3c] sm:$0xf] %v423
  $region25: #{bottleneck_forward.4} parent=0 // pred_fallthru
    _
  // Predicated region
  $region26: #{bottleneck_forward.4} parent=0 // pred_check
    _
  $region27: #{bottleneck_forward.4} parent=0 // pred_check_branch
    %457 = sbr.rel (0) target = $region29
  $region28: #{bottleneck_forward.4} parent=0 // pred_region
    _
  $region29: #{bottleneck_forward.4} parent=0 // pred_fallthru
    _
  // Predicated region
  $region30: #{bottleneck_forward.4} parent=0 // pred_check
    _
  $region31: #{bottleneck_forward.4} parent=0 // pred_check_branch
    %459 = sbr.rel (0) target = $region33
  $region32: #{bottleneck_forward.4} parent=0 // pred_region
    _
  $region33: #{bottleneck_forward.4} parent=0 // pred_fallthru
    _

// kernel: bottleneck_forward.5
$region0: #{bottleneck_forward.5}
  #allocation0 [shape = 'u32[]', space=smem, size = 0x4, offset = 0x4, fixed_abs, tag = 'smem constant byte address 0x4 - core index']
  #allocation1 [shape = 'u32[144,128]{1,0:T(1,128)}', space=vmem, size = 0x12000, scoped, tag = 'internal scratch']
  #allocation2 [shape = 'f32[128,128]{1,0:T(8,128)}', space=vmem, size = 0x10000, scoped, tag = 'scratch operand']
  %s0 = inlined_call_operand.vmem [shape: bf16[128,128], index: 0, kind: input, shape index: {}]
  %s1 = inlined_call_operand.vmem [shape: bf16[128,128], index: 1, kind: input, shape index: {}]
  %s2 = inlined_call_operand.vmem [shape: f32[1,128], index: 2, kind: input, shape index: {}]
  %s3 = inlined_call_operand.vmem [shape: f32[1,128], index: 3, kind: input, shape index: {}]
  %s4 = inlined_call_operand.vmem [shape: bf16[128,128], index: 4, kind: input, shape index: {}]
  %s5 = inlined_call_operand.hbm [shape: f32[128,128], index: 5, kind: output, shape index: {}]
  %s6 = sld [smem:[#allocation0]]
  $region38: #{bottleneck_forward.5} parent=0
    _
  %s8 = ssub.s32 1, %s6
  %s9 = scalar_select 0, %s8, %s6
  $region1: #{bottleneck_forward.5} parent=0
    #allocation3 [shape = 'u8[65536]{0}', space=vmem, size = 0x10000, scoped, tag = 'output window, operand 0, single buffered']
    #allocation4 [shape = 's32[1]{0}', space=sflag, size = 0x4, scoped, tag = 'scoped memory for bottleneck_forward.5']
    %10 = vsyncpa [#allocation4], 0
    // Predicated region
    $region2: #{bottleneck_forward.5} parent=1 // pred_check
      _
    $region3: #{bottleneck_forward.5} parent=1 // pred_check_branch
      %12 = sbr.rel (0) target = $region5
    $region4: #{bottleneck_forward.5} parent=1 // pred_region
      _
    $region5: #{bottleneck_forward.5} parent=1 // pred_fallthru
      _
    // Predicated region
    $region6: #{bottleneck_forward.5} parent=1 // pred_check
      _
    $region7: #{bottleneck_forward.5} parent=1 // pred_check_branch
      %14 = sbr.rel (0) target = $region9
    $region8: #{bottleneck_forward.5} parent=1 // pred_region
      _
    $region9: #{bottleneck_forward.5} parent=1 // pred_fallthru
      _
    // Predicated region
    $region10: #{bottleneck_forward.5} parent=1 // pred_check
      _
    $region11: #{bottleneck_forward.5} parent=1 // pred_check_branch
      %16 = sbr.rel (0) target = $region13
    $region12: #{bottleneck_forward.5} parent=1 // pred_region
      _
    $region13: #{bottleneck_forward.5} parent=1 // pred_fallthru
      _
    // Predicated region
    $region14: #{bottleneck_forward.5} parent=1 // pred_check
      _
    $region15: #{bottleneck_forward.5} parent=1 // pred_check_branch
      %18 = sbr.rel (0) target = $region17
    $region16: #{bottleneck_forward.5} parent=1 // pred_region
      _
    $region17: #{bottleneck_forward.5} parent=1 // pred_fallthru
      _
    // Predicated region
    $region18: #{bottleneck_forward.5} parent=1 // pred_check
      _
    $region19: #{bottleneck_forward.5} parent=1 // pred_check_branch
      %20 = sbr.rel (0) target = $region21
    $region20: #{bottleneck_forward.5} parent=1 // pred_region
      _
    $region21: #{bottleneck_forward.5} parent=1 // pred_fallthru
      _
    %p22 = scmp.eq.s32.totalorder 0, 0
    // Predicated region
    $region22: #{bottleneck_forward.5} parent=1 // pred_check
      %p23 = pneg %p22
    $region23: #{bottleneck_forward.5} parent=1 // pred_check_branch
      %25 = sbr.rel (%p23) target = $region25
    $region24: #{bottleneck_forward.5} parent=1 // pred_region
      %26 = vst [vmem:[#allocation2] sm:$0xff] 0.0
      %27 = vst [vmem:[#allocation2 + $0x8] sm:$0xff] 0.0
      %28 = vst [vmem:[#allocation2 + $0x10] sm:$0xff] 0.0
      %29 = vst [vmem:[#allocation2 + $0x18] sm:$0xff] 0.0
      %30 = vst [vmem:[#allocation2 + $0x20] sm:$0xff] 0.0
      %31 = vst [vmem:[#allocation2 + $0x28] sm:$0xff] 0.0
      %32 = vst [vmem:[#allocation2 + $0x30] sm:$0xff] 0.0
      %33 = vst [vmem:[#allocation2 + $0x38] sm:$0xff] 0.0
      %34 = vst [vmem:[#allocation2 + $0x40] sm:$0xff] 0.0
      %35 = vst [vmem:[#allocation2 + $0x48] sm:$0xff] 0.0
      %36 = vst [vmem:[#allocation2 + $0x50] sm:$0xff] 0.0
      %37 = vst [vmem:[#allocation2 + $0x58] sm:$0xff] 0.0
      %38 = vst [vmem:[#allocation2 + $0x60] sm:$0xff] 0.0
      %39 = vst [vmem:[#allocation2 + $0x68] sm:$0xff] 0.0
      %40 = vst [vmem:[#allocation2 + $0x70] sm:$0xff] 0.0
      %41 = vst [vmem:[#allocation2 + $0x78] sm:$0xff] 0.0
    $region25: #{bottleneck_forward.5} parent=1 // pred_fallthru
      _
    %v42 = vld [vmem:[#allocation2] sm:$0xff]
    %v43 = vld [vmem:[#allocation2 + $0x8] sm:$0xff]
    %v44 = vld [vmem:[#allocation2 + $0x10] sm:$0xff]
    %v45 = vld [vmem:[#allocation2 + $0x18] sm:$0xff]
    %v46 = vld [vmem:[#allocation2 + $0x20] sm:$0xff]
    %v47 = vld [vmem:[#allocation2 + $0x28] sm:$0xff]
    %v48 = vld [vmem:[#allocation2 + $0x30] sm:$0xff]
    %v49 = vld [vmem:[#allocation2 + $0x38] sm:$0xff]
    %v50 = vld [vmem:[#allocation2 + $0x40] sm:$0xff]
    %v51 = vld [vmem:[#allocation2 + $0x48] sm:$0xff]
    %v52 = vld [vmem:[#allocation2 + $0x50] sm:$0xff]
    %v53 = vld [vmem:[#allocation2 + $0x58] sm:$0xff]
    %v54 = vld [vmem:[#allocation2 + $0x60] sm:$0xff]
    %v55 = vld [vmem:[#allocation2 + $0x68] sm:$0xff]
    %v56 = vld [vmem:[#allocation2 + $0x70] sm:$0xff]
    %v57 = vld [vmem:[#allocation2 + $0x78] sm:$0xff]
    %v58 = vld [vmem:[%s0] sm:$0xf]
    %v59 = vld [vmem:[%s0 + $0x4] sm:$0xf]
    %v60 = vld [vmem:[%s0 + $0x8] sm:$0xf]
    %v61 = vld [vmem:[%s0 + $0xc] sm:$0xf]
    %v62 = vld [vmem:[%s0 + $0x10] sm:$0xf]
    %v63 = vld [vmem:[%s0 + $0x14] sm:$0xf]
    %v64 = vld [vmem:[%s0 + $0x18] sm:$0xf]
    %v65 = vld [vmem:[%s0 + $0x1c] sm:$0xf]
    %v66 = vld [vmem:[%s0 + $0x20] sm:$0xf]
    %v67 = vld [vmem:[%s0 + $0x24] sm:$0xf]
    %v68 = vld [vmem:[%s0 + $0x28] sm:$0xf]
    %v69 = vld [vmem:[%s0 + $0x2c] sm:$0xf]
    %v70 = vld [vmem:[%s0 + $0x30] sm:$0xf]
    %v71 = vld [vmem:[%s0 + $0x34] sm:$0xf]
    %v72 = vld [vmem:[%s0 + $0x38] sm:$0xf]
    %v73 = vld [vmem:[%s0 + $0x3c] sm:$0xf]
    %v74 = vld [vmem:[%s1] sm:$0xf]
    %v75 = vld [vmem:[%s1 + $0x4] sm:$0xf]
    %v76 = vld [vmem:[%s1 + $0x8] sm:$0xf]
    %v77 = vld [vmem:[%s1 + $0xc] sm:$0xf]
    %v78 = vld [vmem:[%s1 + $0x10] sm:$0xf]
    %v79 = vld [vmem:[%s1 + $0x14] sm:$0xf]
    %v80 = vld [vmem:[%s1 + $0x18] sm:$0xf]
    %v81 = vld [vmem:[%s1 + $0x1c] sm:$0xf]
    %v82 = vld [vmem:[%s1 + $0x20] sm:$0xf]
    %v83 = vld [vmem:[%s1 + $0x24] sm:$0xf]
    %v84 = vld [vmem:[%s1 + $0x28] sm:$0xf]
    %v85 = vld [vmem:[%s1 + $0x2c] sm:$0xf]
    %v86 = vld [vmem:[%s1 + $0x30] sm:$0xf]
    %v87 = vld [vmem:[%s1 + $0x34] sm:$0xf]
    %v88 = vld [vmem:[%s1 + $0x38] sm:$0xf]
    %v89 = vld [vmem:[%s1 + $0x3c] sm:$0xf]
    %v106 = vunpack.c.l.b16 %v58
    %v107 = vunpack.c.l.b16 %v59
    %v108 = vunpack.c.l.b16 %v60
    %v109 = vunpack.c.l.b16 %v61
    %v110 = vunpack.c.l.b16 %v62
    %v111 = vunpack.c.l.b16 %v63
    %v112 = vunpack.c.l.b16 %v64
    %v113 = vunpack.c.l.b16 %v65
    %v114 = vunpack.c.l.b16 %v66
    %v115 = vunpack.c.l.b16 %v67
    %v116 = vunpack.c.l.b16 %v68
    %v117 = vunpack.c.l.b16 %v69
    %v118 = vunpack.c.l.b16 %v70
    %v119 = vunpack.c.l.b16 %v71
    %v120 = vunpack.c.l.b16 %v72
    %v121 = vunpack.c.l.b16 %v73
    %v122 = vpack.c.b16 %v107, %v106
    %v123 = vpack.c.b16 %v109, %v108
    %v124 = vpack.c.b16 %v111, %v110
    %v125 = vpack.c.b16 %v113, %v112
    %v126 = vpack.c.b16 %v115, %v114
    %v127 = vpack.c.b16 %v117, %v116
    %v128 = vpack.c.b16 %v119, %v118
    %v129 = vpack.c.b16 %v121, %v120
    %v154 = vunpack.c.l.b16 %v74
    %v155 = vunpack.c.l.b16 %v75
    %v156 = vunpack.c.l.b16 %v76
    %v157 = vunpack.c.l.b16 %v77
    %v158 = vunpack.c.l.b16 %v78
    %v159 = vunpack.c.l.b16 %v79
    %v160 = vunpack.c.l.b16 %v80
    %v161 = vunpack.c.l.b16 %v81
    %v162 = vunpack.c.l.b16 %v82
    %v163 = vunpack.c.l.b16 %v83
    %v164 = vunpack.c.l.b16 %v84
    %v165 = vunpack.c.l.b16 %v85
    %v166 = vunpack.c.l.b16 %v86
    %v167 = vunpack.c.l.b16 %v87
    %v168 = vunpack.c.l.b16 %v88
    %v169 = vunpack.c.l.b16 %v89
    %v170 = vpack.c.b16 %v155, %v154
    %v171 = vpack.c.b16 %v157, %v156
    %v172 = vpack.c.b16 %v159, %v158
    %v173 = vpack.c.b16 %v161, %v160
    %v174 = vpack.c.b16 %v163, %v162
    %v175 = vpack.c.b16 %v165, %v164
    %v176 = vpack.c.b16 %v167, %v166
    %v177 = vpack.c.b16 %v169, %v168
    %186 = vmatprep.subr.bf16.mxu0 0
    %187 = vmatpush1.bf16.msra.mxu0 %v170
    %188 = vmatprep.subr.bf16.mxu0 0
    %189 = vmatpush1.bf16.msra.mxu0 %v171
    %190 = vmatprep.subr.bf16.mxu0 0
    %191 = vmatpush1.bf16.msra.mxu0 %v172
    %192 = vmatprep.subr.bf16.mxu0 0
    %193 = vmatpush1.bf16.msra.mxu0 %v173
    %194 = vmatprep.subr.bf16.mxu0 0
    %195 = vmatpush1.bf16.msra.mxu0 %v174
    %196 = vmatprep.subr.bf16.mxu0 0
    %197 = vmatpush1.bf16.msra.mxu0 %v175
    %198 = vmatprep.subr.bf16.mxu0 0
    %199 = vmatpush1.bf16.msra.mxu0 %v176
    %200 = vmatprep.subr.bf16.mxu0 0
    %201 = vmatpush1.bf16.msra.mxu0 %v177
    %202 = vmatprep.subr.bf16.mxu0 0
    %203 = vmatpush1.bf16.msra.mxu0 0
    %204 = vmatprep.subr.bf16.mxu0 0
    %205 = vmatpush1.bf16.msra.mxu0 0
    %206 = vmatprep.subr.bf16.mxu0 0
    %207 = vmatpush1.bf16.msra.mxu0 0
    %208 = vmatprep.subr.bf16.mxu0 0
    %209 = vmatpush1.bf16.msra.mxu0 0
    %210 = vmatprep.subr.bf16.mxu0 0
    %211 = vmatpush1.bf16.msra.mxu0 0
    %212 = vmatprep.subr.bf16.mxu0 0
    %213 = vmatpush1.bf16.msra.mxu0 0
    %214 = vmatprep.subr.bf16.mxu0 0
    %215 = vmatpush1.bf16.msra.mxu0 0
    %216 = vmatprep.subr.bf16.mxu0 0
    %217 = vmatpush1.bf16.msra.mxu0 0
    %218 = vmatprep.mubr.bf16.mxu0 0
    %219 = vmatmul.mubr.bf16.gmra.mrb[0].mxu0 %v122
    %v220 = vpop.f32.mrb[0].mxu0
    %v221 = vadd.f32 0.0, %v220
    %v222 = vpop.f32.mrb[0].mxu0
    %v223 = vpop.f32.mrb[0].mxu0
    %v224 = vadd.f32 0.0, %v223
    %v225 = vpop.f32.mrb[0].mxu0
    %226 = vmatprep.mubr.bf16.mxu0 0
    %227 = vmatmul.mubr.bf16.gmra.mrb[0].mxu0 %v123
    %v228 = vpop.f32.mrb[0].mxu0
    %v229 = vadd.f32 0.0, %v228
    %v230 = vpop.f32.mrb[0].mxu0
    %v231 = vpop.f32.mrb[0].mxu0
    %v232 = vadd.f32 0.0, %v231
    %v233 = vpop.f32.mrb[0].mxu0
    %234 = vmatprep.mubr.bf16.mxu0 0
    %235 = vmatmul.mubr.bf16.gmra.mrb[0].mxu0 %v124
    %v236 = vpop.f32.mrb[0].mxu0
    %v237 = vadd.f32 0.0, %v236
    %v238 = vpop.f32.mrb[0].mxu0
    %v239 = vpop.f32.mrb[0].mxu0
    %v240 = vadd.f32 0.0, %v239
    %v241 = vpop.f32.mrb[0].mxu0
    %242 = vmatprep.mubr.bf16.mxu0 0
    %243 = vmatmul.mubr.bf16.gmra.mrb[0].mxu0 %v125
    %v244 = vpop.f32.mrb[0].mxu0
    %v245 = vadd.f32 0.0, %v244
    %v246 = vpop.f32.mrb[0].mxu0
    %v247 = vpop.f32.mrb[0].mxu0
    %v248 = vadd.f32 0.0, %v247
    %v249 = vpop.f32.mrb[0].mxu0
    %250 = vmatprep.mubr.bf16.mxu0 0
    %251 = vmatmul.mubr.bf16.gmra.mrb[0].mxu0 %v126
    %v252 = vpop.f32.mrb[0].mxu0
    %v253 = vadd.f32 0.0, %v252
    %v254 = vpop.f32.mrb[0].mxu0
    %v255 = vpop.f32.mrb[0].mxu0
    %v256 = vadd.f32 0.0, %v255
    %v257 = vpop.f32.mrb[0].mxu0
    %258 = vmatprep.mubr.bf16.mxu0 0
    %259 = vmatmul.mubr.bf16.gmra.mrb[0].mxu0 %v127
    %v260 = vpop.f32.mrb[0].mxu0
    %v261 = vadd.f32 0.0, %v260
    %v262 = vpop.f32.mrb[0].mxu0
    %v263 = vpop.f32.mrb[0].mxu0
    %v264 = vadd.f32 0.0, %v263
    %v265 = vpop.f32.mrb[0].mxu0
    %266 = vmatprep.mubr.bf16.mxu0 0
    %267 = vmatmul.mubr.bf16.gmra.mrb[0].mxu0 %v128
    %v268 = vpop.f32.mrb[0].mxu0
    %v269 = vadd.f32 0.0, %v268
    %v270 = vpop.f32.mrb[0].mxu0
    %v271 = vpop.f32.mrb[0].mxu0
    %v272 = vadd.f32 0.0, %v271
    %v273 = vpop.f32.mrb[0].mxu0
    %274 = vmatprep.mubr.bf16.mxu0 0
    %275 = vmatmul.mubr.bf16.gmra.mrb[0].mxu0 %v129
    %v276 = vpop.f32.mrb[0].mxu0
    %v277 = vadd.f32 0.0, %v276
    %v278 = vpop.f32.mrb[0].mxu0
    %v279 = vpop.f32.mrb[0].mxu0
    %v280 = vadd.f32 0.0, %v279
    %v281 = vpop.f32.mrb[0].mxu0
    %282 = vdwg.mxu0
    %v283 = vadd.f32 %v42, %v221
    %v284 = vadd.f32 %v43, %v224
    %v285 = vadd.f32 %v44, %v229
    %v286 = vadd.f32 %v45, %v232
    %v287 = vadd.f32 %v46, %v237
    %v288 = vadd.f32 %v47, %v240
    %v289 = vadd.f32 %v48, %v245
    %v290 = vadd.f32 %v49, %v248
    %v291 = vadd.f32 %v50, %v253
    %v292 = vadd.f32 %v51, %v256
    %v293 = vadd.f32 %v52, %v261
    %v294 = vadd.f32 %v53, %v264
    %v295 = vadd.f32 %v54, %v269
    %v296 = vadd.f32 %v55, %v272
    %v297 = vadd.f32 %v56, %v277
    %v298 = vadd.f32 %v57, %v280
    %299 = vst [vmem:[#allocation2] sm:$0xff] %v283
    %300 = vst [vmem:[#allocation2 + $0x8] sm:$0xff] %v284
    %301 = vst [vmem:[#allocation2 + $0x10] sm:$0xff] %v285
    %302 = vst [vmem:[#allocation2 + $0x18] sm:$0xff] %v286
    %303 = vst [vmem:[#allocation2 + $0x20] sm:$0xff] %v287
    %304 = vst [vmem:[#allocation2 + $0x28] sm:$0xff] %v288
    %305 = vst [vmem:[#allocation2 + $0x30] sm:$0xff] %v289
    %306 = vst [vmem:[#allocation2 + $0x38] sm:$0xff] %v290
    %307 = vst [vmem:[#allocation2 + $0x40] sm:$0xff] %v291
    %308 = vst [vmem:[#allocation2 + $0x48] sm:$0xff] %v292
    %309 = vst [vmem:[#allocation2 + $0x50] sm:$0xff] %v293
    %310 = vst [vmem:[#allocation2 + $0x58] sm:$0xff] %v294
    %311 = vst [vmem:[#allocation2 + $0x60] sm:$0xff] %v295
    %312 = vst [vmem:[#allocation2 + $0x68] sm:$0xff] %v296
    %313 = vst [vmem:[#allocation2 + $0x70] sm:$0xff] %v297
    %314 = vst [vmem:[#allocation2 + $0x78] sm:$0xff] %v298
    // Predicated region
    $region26: #{bottleneck_forward.5} parent=1 // pred_check
      %p315 = pneg %p22
    $region27: #{bottleneck_forward.5} parent=1 // pred_check_branch
      %317 = sbr.rel (%p315) target = $region29
    $region28: #{bottleneck_forward.5} parent=1 // pred_region
      %v318 = vld [vmem:[#allocation2] sm:$0xff]
      %v319 = vld [vmem:[#allocation2 + $0x8] sm:$0xff]
      %v320 = vld [vmem:[#allocation2 + $0x10] sm:$0xff]
      %v321 = vld [vmem:[#allocation2 + $0x18] sm:$0xff]
      %v322 = vld [vmem:[#allocation2 + $0x20] sm:$0xff]
      %v323 = vld [vmem:[#allocation2 + $0x28] sm:$0xff]
      %v324 = vld [vmem:[#allocation2 + $0x30] sm:$0xff]
      %v325 = vld [vmem:[#allocation2 + $0x38] sm:$0xff]
      %v326 = vld [vmem:[#allocation2 + $0x40] sm:$0xff]
      %v327 = vld [vmem:[#allocation2 + $0x48] sm:$0xff]
      %v328 = vld [vmem:[#allocation2 + $0x50] sm:$0xff]
      %v329 = vld [vmem:[#allocation2 + $0x58] sm:$0xff]
      %v330 = vld [vmem:[#allocation2 + $0x60] sm:$0xff]
      %v331 = vld [vmem:[#allocation2 + $0x68] sm:$0xff]
      %v332 = vld [vmem:[#allocation2 + $0x70] sm:$0xff]
      %v333 = vld [vmem:[#allocation2 + $0x78] sm:$0xff]
      %v334 = vld [vmem:[%s2] sm:$0x1]
      %v336 = vlaneseq
      %v337 = vshrl.u32 %v336, 7
      %v338 = vsub.s32 0, %v337
      %v339 = vrot.slane %v334, %v338
      %v341 = vmul.f32 %v318, %v339
      %v342 = vmul.f32 %v319, %v339
      %v343 = vmul.f32 %v320, %v339
      %v344 = vmul.f32 %v321, %v339
      %v345 = vmul.f32 %v322, %v339
      %v346 = vmul.f32 %v323, %v339
      %v347 = vmul.f32 %v324, %v339
      %v348 = vmul.f32 %v325, %v339
      %v349 = vmul.f32 %v326, %v339
      %v350 = vmul.f32 %v327, %v339
      %v351 = vmul.f32 %v328, %v339
      %v352 = vmul.f32 %v329, %v339
      %v353 = vmul.f32 %v330, %v339
      %v354 = vmul.f32 %v331, %v339
      %v355 = vmul.f32 %v332, %v339
      %v356 = vmul.f32 %v333, %v339
      %v357 = vld [vmem:[%s3] sm:$0x1]
      %v359 = vlaneseq
      %v360 = vshrl.u32 %v359, 7
      %v361 = vsub.s32 0, %v360
      %v362 = vrot.slane %v357, %v361
      %v364 = vadd.f32 %v341, %v362
      %v365 = vadd.f32 %v342, %v362
      %v366 = vadd.f32 %v343, %v362
      %v367 = vadd.f32 %v344, %v362
      %v368 = vadd.f32 %v345, %v362
      %v369 = vadd.f32 %v346, %v362
      %v370 = vadd.f32 %v347, %v362
      %v371 = vadd.f32 %v348, %v362
      %v372 = vadd.f32 %v349, %v362
      %v373 = vadd.f32 %v350, %v362
      %v374 = vadd.f32 %v351, %v362
      %v375 = vadd.f32 %v352, %v362
      %v376 = vadd.f32 %v353, %v362
      %v377 = vadd.f32 %v354, %v362
      %v378 = vadd.f32 %v355, %v362
      %v379 = vadd.f32 %v356, %v362
      %v380 = vld [vmem:[%s4] sm:$0xf]
      %v381 = vld [vmem:[%s4 + $0x4] sm:$0xf]
      %v382 = vld [vmem:[%s4 + $0x8] sm:$0xf]
      %v383 = vld [vmem:[%s4 + $0xc] sm:$0xf]
      %v384 = vld [vmem:[%s4 + $0x10] sm:$0xf]
      %v385 = vld [vmem:[%s4 + $0x14] sm:$0xf]
      %v386 = vld [vmem:[%s4 + $0x18] sm:$0xf]
      %v387 = vld [vmem:[%s4 + $0x1c] sm:$0xf]
      %v388 = vld [vmem:[%s4 + $0x20] sm:$0xf]
      %v389 = vld [vmem:[%s4 + $0x24] sm:$0xf]
      %v390 = vld [vmem:[%s4 + $0x28] sm:$0xf]
      %v391 = vld [vmem:[%s4 + $0x2c] sm:$0xf]
      %v392 = vld [vmem:[%s4 + $0x30] sm:$0xf]
      %v393 = vld [vmem:[%s4 + $0x34] sm:$0xf]
      %v394 = vld [vmem:[%s4 + $0x38] sm:$0xf]
      %v395 = vld [vmem:[%s4 + $0x3c] sm:$0xf]
      %v396 = vunpack.c.l.bf16 %v380
      %v397 = vunpack.c.l.bf16 %v381
      %v398 = vunpack.c.l.bf16 %v382
      %v399 = vunpack.c.l.bf16 %v383
      %v400 = vunpack.c.l.bf16 %v384
      %v401 = vunpack.c.l.bf16 %v385
      %v402 = vunpack.c.l.bf16 %v386
      %v403 = vunpack.c.l.bf16 %v387
      %v404 = vunpack.c.l.bf16 %v388
      %v405 = vunpack.c.l.bf16 %v389
      %v406 = vunpack.c.l.bf16 %v390
      %v407 = vunpack.c.l.bf16 %v391
      %v408 = vunpack.c.l.bf16 %v392
      %v409 = vunpack.c.l.bf16 %v393
      %v410 = vunpack.c.l.bf16 %v394
      %v411 = vunpack.c.l.bf16 %v395
      %v412 = vadd.f32 %v364, %v396
      %v413 = vadd.f32 %v365, %v397
      %v414 = vadd.f32 %v366, %v398
      %v415 = vadd.f32 %v367, %v399
      %v416 = vadd.f32 %v368, %v400
      %v417 = vadd.f32 %v369, %v401
      %v418 = vadd.f32 %v370, %v402
      %v419 = vadd.f32 %v371, %v403
      %v420 = vadd.f32 %v372, %v404
      %v421 = vadd.f32 %v373, %v405
      %v422 = vadd.f32 %v374, %v406
      %v423 = vadd.f32 %v375, %v407
      %v424 = vadd.f32 %v376, %v408
      %v425 = vadd.f32 %v377, %v409
      %v426 = vadd.f32 %v378, %v410
      %v427 = vadd.f32 %v379, %v411
      %v428 = vmax.f32 %v412, 0.0
      %v429 = vmax.f32 %v413, 0.0
      %v430 = vmax.f32 %v414, 0.0
      %v431 = vmax.f32 %v415, 0.0
      %v432 = vmax.f32 %v416, 0.0
      %v433 = vmax.f32 %v417, 0.0
      %v434 = vmax.f32 %v418, 0.0
      %v435 = vmax.f32 %v419, 0.0
      %v436 = vmax.f32 %v420, 0.0
      %v437 = vmax.f32 %v421, 0.0
      %v438 = vmax.f32 %v422, 0.0
      %v439 = vmax.f32 %v423, 0.0
      %v440 = vmax.f32 %v424, 0.0
      %v441 = vmax.f32 %v425, 0.0
      %v442 = vmax.f32 %v426, 0.0
      %v443 = vmax.f32 %v427, 0.0
      %444 = vst [vmem:[#allocation3] sm:$0xff] %v428
      %445 = vst [vmem:[#allocation3 + $0x8] sm:$0xff] %v429
      %446 = vst [vmem:[#allocation3 + $0x10] sm:$0xff] %v430
      %447 = vst [vmem:[#allocation3 + $0x18] sm:$0xff] %v431
      %448 = vst [vmem:[#allocation3 + $0x20] sm:$0xff] %v432
      %449 = vst [vmem:[#allocation3 + $0x28] sm:$0xff] %v433
      %450 = vst [vmem:[#allocation3 + $0x30] sm:$0xff] %v434
      %451 = vst [vmem:[#allocation3 + $0x38] sm:$0xff] %v435
      %452 = vst [vmem:[#allocation3 + $0x40] sm:$0xff] %v436
      %453 = vst [vmem:[#allocation3 + $0x48] sm:$0xff] %v437
      %454 = vst [vmem:[#allocation3 + $0x50] sm:$0xff] %v438
      %455 = vst [vmem:[#allocation3 + $0x58] sm:$0xff] %v439
      %456 = vst [vmem:[#allocation3 + $0x60] sm:$0xff] %v440
      %457 = vst [vmem:[#allocation3 + $0x68] sm:$0xff] %v441
      %458 = vst [vmem:[#allocation3 + $0x70] sm:$0xff] %v442
      %459 = vst [vmem:[#allocation3 + $0x78] sm:$0xff] %v443
    $region29: #{bottleneck_forward.5} parent=1 // pred_fallthru
      _
    // Predicated region
    $region30: #{bottleneck_forward.5} parent=1 // pred_check
      _
    $region31: #{bottleneck_forward.5} parent=1 // pred_check_branch
      %461 = sbr.rel (0) target = $region33
    $region32: #{bottleneck_forward.5} parent=1 // pred_region
      %s463 = ssub.s32 2048, 2048
      %464 = vsyncadd [#allocation4], %s463
      %s465 = sshll.u32 [#allocation3], 4
      %s466 = int_to_ptr.vmem [resolvable:$true] %s465
      %471 = dma.vmem_to_hbm [thread:$0]  %s466, 2048, %s5, [#allocation4], 128, 128, 8
    $region33: #{bottleneck_forward.5} parent=1 // pred_fallthru
      _
    // Predicated region
    $region34: #{bottleneck_forward.5} parent=1 // pred_check
      _
    $region35: #{bottleneck_forward.5} parent=1 // pred_check_branch
      %473 = sbr.rel (0) target = $region37
    $region36: #{bottleneck_forward.5} parent=1 // pred_region
      %474 = dma.done [#allocation4], 2048
    $region37: #{bottleneck_forward.5} parent=1 // pred_fallthru
      _
    %475 = vsyncpa [#allocation4], 1

// kernel: bottleneck_forward.3
$region0: #{bottleneck_forward.3}
  #allocation0 [shape = 'u32[]', space=smem, size = 0x4, offset = 0x4, fixed_abs, tag = 'smem constant byte address 0x4 - core index']
  #allocation1 [shape = 'u32[144,128]{1,0:T(1,128)}', space=vmem, size = 0x12000, scoped, tag = 'internal scratch']
  #allocation2 [shape = 'f32[128,128]{1,0:T(8,128)}', space=vmem, size = 0x10000, scoped, tag = 'scratch operand']
  %s0 = inlined_call_operand.vmem [shape: bf16[2,16,16,128], index: 0, kind: input, shape index: {}]
  %s1 = inlined_call_operand.vmem [shape: bf16[2,2,16,128], index: 1, kind: input, shape index: {}]
  %s2 = inlined_call_operand.vmem [shape: bf16[128,128], index: 2, kind: input, shape index: {}]
  %s3 = inlined_call_operand.vmem [shape: f32[1,128], index: 3, kind: input, shape index: {}]
  %s4 = inlined_call_operand.vmem [shape: f32[1,128], index: 4, kind: input, shape index: {}]
  %s5 = inlined_call_operand.vmem [shape: bf16[3,384,128], index: 5, kind: input, shape index: {}]
  %s6 = inlined_call_operand.vmem [shape: f32[1,128], index: 6, kind: input, shape index: {}]
  %s7 = inlined_call_operand.vmem [shape: f32[1,128], index: 7, kind: input, shape index: {}]
  %s8 = inlined_call_operand.vmem [shape: bf16[2,8,8,128], index: 8, kind: output, shape index: {}]
  %s9 = sld [smem:[#allocation0]]
  $region65: #{bottleneck_forward.3} parent=0
    _
  %s11 = ssub.s32 1, %s9
  %s12 = scalar_select 0, %s11, %s9
  loop: start=0, step=1, limit=4
  $region2: #{bottleneck_forward.3} parent=0 // loop_pre_header
    _
  $region3: #{bottleneck_forward.3} parent=0 // loop_header
    %s14 = sphi 0, %s18
    %p15 = scmp.ge.s32.totalorder %s14, 4
    %s21 = sphi 0, %s33
    %s22 = sphi 0, %s29
    %s23 = sphi 0, %s21
    %s24 = sphi 0, %s22
    %s25 = sphi 0, %s23
    %s26 = sphi 0, %s24
    %s38 = sphi 0, %s40
    %s41 = sphi 0, %s38
    %s42 = sphi 0, %s41
    %s58 = sphi 0, %s42
    %s66 = sphi 0, %s68
    %s69 = sphi 0, %s66
    %s70 = sphi 0, %s69
    %s86 = sphi 0, %s70
    %s90 = sphi 0, %s90
    %s92 = sphi 0, %s90
    %s93 = sphi 0, %s92
    %s107 = sphi 0, %s93
    %s111 = sphi 0, %s111
    %s113 = sphi 0, %s111
    %s114 = sphi 0, %s113
    %s128 = sphi 0, %s114
    %s132 = sphi 0, %s132
    %s134 = sphi 0, %s132
    %s135 = sphi 0, %s134
    %s149 = sphi 0, %s135
    %s153 = sphi 0, %s153
    %s155 = sphi 0, %s153
    %s156 = sphi 0, %s155
    %s170 = sphi 0, %s156
    %s174 = sphi 0, %s174
    %s176 = sphi 0, %s174
    %s177 = sphi 0, %s176
    %s191 = sphi 0, %s177
    %s195 = sphi 0, %s195
    %s197 = sphi 0, %s195
    %s198 = sphi 0, %s197
    %s212 = sphi 0, %s198
    %s220 = sphi 0, %s222
    %s223 = sphi 0, %s220
    %s224 = sphi 0, %s223
    %s240 = sphi 0, %s224
  $region4: #{bottleneck_forward.3} parent=0 // loop_header_branch
    %17 = sbr.rel (%p15) target = $region8
  $region5: #{bottleneck_forward.3} parent=0 // loop_body
    %s19 = ssub.s32 %s14, 1
    %s20 = ssub.s32 %s14, 2
    %s27 = sadd.s32 1, %s22
    %p28 = scmp.ge.s32.totalorder %s27, 1
    %s29 = scalar_select %p28, 0, %s27
    %s30 = sadd.s32 1, %s21
    %s31 = scalar_select %p28, %s30, %s21
    %p32 = scmp.ge.s32.totalorder %s31, 2
    %s33 = scalar_select %p32, 0, %s31
    %s34 = ssub.s32 %s21, %s33
    %s35 = ssub.s32 %s22, %s29
    %s36 = sor.u32 %s34, %s35
    %p37 = scmp.eq.s32.totalorder %s36, 0
    %s39 = sadd.s32 %s38, 1
    %s40 = scalar_select %p37, %s38, %s39
    %p43 = pneg %p37
    %p44 = scmp.eq.s32.totalorder %s14, 1
    %p45 = por %p43, %p44
    %p46 = scmp.ne.s32.totalorder %s38, %s41
    %p47 = scmp.eq.s32.totalorder %s14, 0
    %p48 = por %p46, %p47
    %p49 = scmp.ne.s32.totalorder %s38, %s41
    %p50 = scmp.eq.s32.totalorder %s19, 1
    %p51 = por %p49, %p50
    %p52 = scmp.ne.s32.totalorder %s41, %s42
    %p53 = scmp.eq.s32.totalorder %s19, 0
    %p54 = por %p52, %p53
    %p55 = scmp.ne.s32.totalorder %s41, %s42
    %p56 = scmp.eq.s32.totalorder %s20, 1
    %p57 = por %p55, %p56
    %p59 = scmp.ne.s32.totalorder %s42, %s58
    %p60 = scmp.eq.s32.totalorder %s20, 0
    %p61 = por %p59, %p60
    %s62 = sadd.s32 %s21, %s22
    %s63 = sadd.s32 %s33, %s29
    %s64 = ssub.s32 %s62, %s63
    %p65 = scmp.eq.s32.totalorder %s64, 0
    %s67 = sadd.s32 %s66, 1
    %s68 = scalar_select %p65, %s66, %s67
    %p71 = pneg %p65
    %p72 = scmp.eq.s32.totalorder %s14, 1
    %p73 = por %p71, %p72
    %p74 = scmp.ne.s32.totalorder %s66, %s69
    %p75 = scmp.eq.s32.totalorder %s14, 0
    %p76 = por %p74, %p75
    %p77 = scmp.ne.s32.totalorder %s66, %s69
    %p78 = scmp.eq.s32.totalorder %s19, 1
    %p79 = por %p77, %p78
    %p80 = scmp.ne.s32.totalorder %s69, %s70
    %p81 = scmp.eq.s32.totalorder %s19, 0
    %p82 = por %p80, %p81
    %p83 = scmp.ne.s32.totalorder %s69, %s70
    %p84 = scmp.eq.s32.totalorder %s20, 1
    %p85 = por %p83, %p84
    %p87 = scmp.ne.s32.totalorder %s70, %s86
    %p88 = scmp.eq.s32.totalorder %s20, 0
    %p89 = por %p87, %p88
    %s91 = sadd.s32 %s90, 1
    %p94 = scmp.eq.s32.totalorder %s14, 1
    %p95 = scmp.ne.s32.totalorder %s90, %s92
    %p96 = scmp.eq.s32.totalorder %s14, 0
    %p97 = por %p95, %p96
    %p98 = scmp.ne.s32.totalorder %s90, %s92
    %p99 = scmp.eq.s32.totalorder %s19, 1
    %p100 = por %p98, %p99
    %p101 = scmp.ne.s32.totalorder %s92, %s93
    %p102 = scmp.eq.s32.totalorder %s19, 0
    %p103 = por %p101, %p102
    %p104 = scmp.ne.s32.totalorder %s92, %s93
    %p105 = scmp.eq.s32.totalorder %s20, 1
    %p106 = por %p104, %p105
    %p108 = scmp.ne.s32.totalorder %s93, %s107
    %p109 = scmp.eq.s32.totalorder %s20, 0
    %p110 = por %p108, %p109
    %s112 = sadd.s32 %s111, 1
    %p115 = scmp.eq.s32.totalorder %s14, 1
    %p116 = scmp.ne.s32.totalorder %s111, %s113
    %p117 = scmp.eq.s32.totalorder %s14, 0
    %p118 = por %p116, %p117
    %p119 = scmp.ne.s32.totalorder %s111, %s113
    %p120 = scmp.eq.s32.totalorder %s19, 1
    %p121 = por %p119, %p120
    %p122 = scmp.ne.s32.totalorder %s113, %s114
    %p123 = scmp.eq.s32.totalorder %s19, 0
    %p124 = por %p122, %p123
    %p125 = scmp.ne.s32.totalorder %s113, %s114
    %p126 = scmp.eq.s32.totalorder %s20, 1
    %p127 = por %p125, %p126
    %p129 = scmp.ne.s32.totalorder %s114, %s128
    %p130 = scmp.eq.s32.totalorder %s20, 0
    %p131 = por %p129, %p130
    %s133 = sadd.s32 %s132, 1
    %p136 = scmp.eq.s32.totalorder %s14, 1
    %p137 = scmp.ne.s32.totalorder %s132, %s134
    %p138 = scmp.eq.s32.totalorder %s14, 0
    %p139 = por %p137, %p138
    %p140 = scmp.ne.s32.totalorder %s132, %s134
    %p141 = scmp.eq.s32.totalorder %s19, 1
    %p142 = por %p140, %p141
    %p143 = scmp.ne.s32.totalorder %s134, %s135
    %p144 = scmp.eq.s32.totalorder %s19, 0
    %p145 = por %p143, %p144
    %p146 = scmp.ne.s32.totalorder %s134, %s135
    %p147 = scmp.eq.s32.totalorder %s20, 1
    %p148 = por %p146, %p147
    %p150 = scmp.ne.s32.totalorder %s135, %s149
    %p151 = scmp.eq.s32.totalorder %s20, 0
    %p152 = por %p150, %p151
    %s154 = sadd.s32 %s153, 1
    %p157 = scmp.eq.s32.totalorder %s14, 1
    %p158 = scmp.ne.s32.totalorder %s153, %s155
    %p159 = scmp.eq.s32.totalorder %s14, 0
    %p160 = por %p158, %p159
    %p161 = scmp.ne.s32.totalorder %s153, %s155
    %p162 = scmp.eq.s32.totalorder %s19, 1
    %p163 = por %p161, %p162
    %p164 = scmp.ne.s32.totalorder %s155, %s156
    %p165 = scmp.eq.s32.totalorder %s19, 0
    %p166 = por %p164, %p165
    %p167 = scmp.ne.s32.totalorder %s155, %s156
    %p168 = scmp.eq.s32.totalorder %s20, 1
    %p169 = por %p167, %p168
    %p171 = scmp.ne.s32.totalorder %s156, %s170
    %p172 = scmp.eq.s32.totalorder %s20, 0
    %p173 = por %p171, %p172
    %s175 = sadd.s32 %s174, 1
    %p178 = scmp.eq.s32.totalorder %s14, 1
    %p179 = scmp.ne.s32.totalorder %s174, %s176
    %p180 = scmp.eq.s32.totalorder %s14, 0
    %p181 = por %p179, %p180
    %p182 = scmp.ne.s32.totalorder %s174, %s176
    %p183 = scmp.eq.s32.totalorder %s19, 1
    %p184 = por %p182, %p183
    %p185 = scmp.ne.s32.totalorder %s176, %s177
    %p186 = scmp.eq.s32.totalorder %s19, 0
    %p187 = por %p185, %p186
    %p188 = scmp.ne.s32.totalorder %s176, %s177
    %p189 = scmp.eq.s32.totalorder %s20, 1
    %p190 = por %p188, %p189
    %p192 = scmp.ne.s32.totalorder %s177, %s191
    %p193 = scmp.eq.s32.totalorder %s20, 0
    %p194 = por %p192, %p193
    %s196 = sadd.s32 %s195, 1
    %p199 = scmp.eq.s32.totalorder %s14, 1
    %p200 = scmp.ne.s32.totalorder %s195, %s197
    %p201 = scmp.eq.s32.totalorder %s14, 0
    %p202 = por %p200, %p201
    %p203 = scmp.ne.s32.totalorder %s195, %s197
    %p204 = scmp.eq.s32.totalorder %s19, 1
    %p205 = por %p203, %p204
    %p206 = scmp.ne.s32.totalorder %s197, %s198
    %p207 = scmp.eq.s32.totalorder %s19, 0
    %p208 = por %p206, %p207
    %p209 = scmp.ne.s32.totalorder %s197, %s198
    %p210 = scmp.eq.s32.totalorder %s20, 1
    %p211 = por %p209, %p210
    %p213 = scmp.ne.s32.totalorder %s198, %s212
    %p214 = scmp.eq.s32.totalorder %s20, 0
    %p215 = por %p213, %p214
    %s216 = ssub.s32 %s21, %s33
    %s217 = ssub.s32 %s22, %s29
    %s218 = sor.u32 %s216, %s217
    %p219 = scmp.eq.s32.totalorder %s218, 0
    %s221 = sadd.s32 %s220, 1
    %s222 = scalar_select %p219, %s220, %s221
    %p225 = pneg %p219
    %p226 = scmp.eq.s32.totalorder %s14, 1
    %p227 = por %p225, %p226
    %p228 = scmp.ne.s32.totalorder %s220, %s223
    %p229 = scmp.eq.s32.totalorder %s14, 0
    %p230 = por %p228, %p229
    %p231 = scmp.ne.s32.totalorder %s220, %s223
    %p232 = scmp.eq.s32.totalorder %s19, 1
    %p233 = por %p231, %p232
    %p234 = scmp.ne.s32.totalorder %s223, %s224
    %p235 = scmp.eq.s32.totalorder %s19, 0
    %p236 = por %p234, %p235
    %p237 = scmp.ne.s32.totalorder %s223, %s224
    %p238 = scmp.eq.s32.totalorder %s20, 1
    %p239 = por %p237, %p238
    %p241 = scmp.ne.s32.totalorder %s224, %s240
    %p242 = scmp.eq.s32.totalorder %s20, 0
    %p243 = por %p241, %p242
    %p244 = scmp.le.s32.totalorder 1, %s14
    %p245 = scmp.lt.s32.totalorder %s14, 3
    %p246 = pnand %p244, %p245
    %p247 = pneg %p246
    // Predicated region
    $region9: #{bottleneck_forward.3} parent=5 // pred_check
      _
    $region10: #{bottleneck_forward.3} parent=5 // pred_check_branch
      %249 = sbr.rel (%p246) target = $region12
    $region11: #{bottleneck_forward.3} parent=5 // pred_region
      %s250 = ssub.s32 %s14, 1
      // Predicated region
      $region13: #{bottleneck_forward.3} parent=11 // pred_check
        %p251 = pneg %p103
      $region14: #{bottleneck_forward.3} parent=11 // pred_check_branch
        %253 = sbr.rel (%p251) target = $region16
      $region15: #{bottleneck_forward.3} parent=11 // pred_region
        _
      $region16: #{bottleneck_forward.3} parent=11 // pred_fallthru
        _
      // Predicated region
      $region17: #{bottleneck_forward.3} parent=11 // pred_check
        %p254 = pneg %p124
      $region18: #{bottleneck_forward.3} parent=11 // pred_check_branch
        %256 = sbr.rel (%p254) target = $region20
      $region19: #{bottleneck_forward.3} parent=11 // pred_region
        _
      $region20: #{bottleneck_forward.3} parent=11 // pred_fallthru
        _
      // Predicated region
      $region21: #{bottleneck_forward.3} parent=11 // pred_check
        %p257 = pneg %p145
      $region22: #{bottleneck_forward.3} parent=11 // pred_check_branch
        %259 = sbr.rel (%p257) target = $region24
      $region23: #{bottleneck_forward.3} parent=11 // pred_region
        _
      $region24: #{bottleneck_forward.3} parent=11 // pred_fallthru
        _
      // Predicated region
      $region25: #{bottleneck_forward.3} parent=11 // pred_check
        %p260 = pneg %p166
      $region26: #{bottleneck_forward.3} parent=11 // pred_check_branch
        %262 = sbr.rel (%p260) target = $region28
      $region27: #{bottleneck_forward.3} parent=11 // pred_region
        _
      $region28: #{bottleneck_forward.3} parent=11 // pred_fallthru
        _
      // Predicated region
      $region29: #{bottleneck_forward.3} parent=11 // pred_check
        %p263 = pneg %p187
      $region30: #{bottleneck_forward.3} parent=11 // pred_check_branch
        %265 = sbr.rel (%p263) target = $region32
      $region31: #{bottleneck_forward.3} parent=11 // pred_region
        _
      $region32: #{bottleneck_forward.3} parent=11 // pred_fallthru
        _
      // Predicated region
      $region33: #{bottleneck_forward.3} parent=11 // pred_check
        %p266 = pneg %p208
      $region34: #{bottleneck_forward.3} parent=11 // pred_check_branch
        %268 = sbr.rel (%p266) target = $region36
      $region35: #{bottleneck_forward.3} parent=11 // pred_region
        _
      $region36: #{bottleneck_forward.3} parent=11 // pred_fallthru
        _
    $region12: #{bottleneck_forward.3} parent=5 // pred_fallthru
      _
    %p269 = scmp.lt.s32.totalorder %s14, 2
    // Predicated region
    $region37: #{bottleneck_forward.3} parent=5 // pred_check
      %p270 = pneg %p269
    $region38: #{bottleneck_forward.3} parent=5 // pred_check_branch
      %272 = sbr.rel (%p270) target = $region40
    $region39: #{bottleneck_forward.3} parent=5 // pred_region
      // Predicated region
      $region41: #{bottleneck_forward.3} parent=39 // pred_check
        %p273 = pneg %p48
      $region42: #{bottleneck_forward.3} parent=39 // pred_check_branch
        %275 = sbr.rel (%p273) target = $region44
      $region43: #{bottleneck_forward.3} parent=39 // pred_region
        %s276 = smul.u32 16, %s22
        %p277 = scmp.lt.s32.totalorder %s21, 1
        %s278 = scalar_select %p277, %s21, 1
        %p279 = scmp.lt.s32.totalorder %s276, 15
        %s280 = scalar_select %p279, %s276, 15
        %s281 = smul.addr %s280, 2
        %s282 = smul.addr %s278, 32
        %s283 = sadd.s32 %s281, %s282
        %s284 = smul.addr %s283, 4
        %s285 = scalar_lea.vmem %s0, %s284
        %s286 = smul.u32 16, %s22
      $region44: #{bottleneck_forward.3} parent=39 // pred_fallthru
        _
      // Predicated region
      $region45: #{bottleneck_forward.3} parent=39 // pred_check
        %p287 = pneg %p76
      $region46: #{bottleneck_forward.3} parent=39 // pred_check_branch
        %289 = sbr.rel (%p287) target = $region48
      $region47: #{bottleneck_forward.3} parent=39 // pred_region
        %s290 = sadd.s32 %s21, %s22
        %p291 = scmp.lt.s32.totalorder %s290, 1
        %s292 = scalar_select %p291, %s290, 1
        %s293 = smul.addr %s292, 4
        %s294 = smul.addr %s293, 4
        %s295 = scalar_lea.vmem %s1, %s294
        %s296 = sadd.s32 %s21, %s22
      $region48: #{bottleneck_forward.3} parent=39 // pred_fallthru
        _
    $region40: #{bottleneck_forward.3} parent=5 // pred_fallthru
      _
    %p297 = scmp.le.s32.totalorder 1, %s14
    %p298 = scmp.lt.s32.totalorder %s14, 3
    %p299 = pnand %p297, %p298
    %p300 = pneg %p299
    // Predicated region
    $region49: #{bottleneck_forward.3} parent=5 // pred_check
      _
    $region50: #{bottleneck_forward.3} parent=5 // pred_check_branch
      %302 = sbr.rel (%p299) target = $region52
    $region51: #{bottleneck_forward.3} parent=5 // pred_region
      %s303 = ssub.s32 %s14, 1
      %s304 = smul.u32 16, %s24
      %p305 = scmp.lt.s32.totalorder %s23, 1
      %s306 = scalar_select %p305, %s23, 1
      %p307 = scmp.lt.s32.totalorder %s304, 15
      %s308 = scalar_select %p307, %s304, 15
      %s309 = smul.addr %s308, 2
      %s310 = smul.addr %s306, 32
      %s311 = sadd.s32 %s309, %s310
      %s312 = smul.addr %s311, 4
      %s313 = scalar_lea.vmem %s0, %s312
      %p314 = pneg %p54
      %p315 = pneg %p51
      %s316 = sadd.s32 %s23, %s24
      %p317 = scmp.lt.s32.totalorder %s316, 1
      %s318 = scalar_select %p317, %s316, 1
      %s319 = smul.addr %s318, 4
      %s320 = smul.addr %s319, 4
      %s321 = scalar_lea.vmem %s1, %s320
      %p322 = pneg %p82
      %p323 = pneg %p79
      %p324 = pneg %p103
      %p325 = pneg %p100
      %p326 = pneg %p124
      %p327 = pneg %p121
      %p328 = pneg %p145
      %p329 = pneg %p142
      %p330 = pneg %p166
      %p331 = pneg %p163
      %p332 = pneg %p187
      %p333 = pneg %p184
      %p334 = pneg %p208
      %p335 = pneg %p205
      %p336 = pneg %p236
      %p337 = pneg %p233
      %s338 = smul.u32 8, %s24
      %p339 = scmp.lt.s32.totalorder %s23, 1
      %s340 = scalar_select %p339, %s23, 1
      %p341 = scmp.lt.s32.totalorder %s338, 7
      %s342 = scalar_select %p341, %s338, 7
      %s343 = smul.addr %s340, 8
      %s344 = sadd.s32 %s342, %s343
      %s345 = smul.addr %s344, 4
      %s346 = scalar_lea.vmem %s8, %s345
      %s347 = smul.u32 16, %s24
      %p348 = scmp.lt.s32.totalorder %s23, 1
      %s349 = scalar_select %p348, %s23, 1
      %p350 = scmp.lt.s32.totalorder %s347, 15
      %s351 = scalar_select %p350, %s347, 15
      %s352 = smul.addr %s351, 2
      %s353 = smul.addr %s349, 32
      %s354 = sadd.s32 %s352, %s353
      %s355 = smul.addr %s354, 4
      %s356 = scalar_lea.vmem %s0, %s355
      %s357 = smul.u32 16, %s24
      %s358 = sadd.s32 %s23, %s24
      %p359 = scmp.lt.s32.totalorder %s358, 1
      %s360 = scalar_select %p359, %s358, 1
      %s361 = smul.addr %s360, 4
      %s362 = smul.addr %s361, 4
      %s363 = scalar_lea.vmem %s1, %s362
      %s364 = sadd.s32 %s23, %s24
      %s365 = smul.u32 8, %s24
      %p366 = scmp.lt.s32.totalorder %s23, 1
      %s367 = scalar_select %p366, %s23, 1
      %p368 = scmp.lt.s32.totalorder %s365, 7
      %s369 = scalar_select %p368, %s365, 7
      %s370 = smul.addr %s367, 8
      %s371 = sadd.s32 %s369, %s370
      %s372 = smul.addr %s371, 4
      %s373 = scalar_lea.vmem %s8, %s372
      %s374 = smul.u32 8, %s24
      %v376 = vld [vmem:[%s363] sm:$0xf]
      %v377 = vld [vmem:[%s363 + $0x4] sm:$0xf]
      %v378 = vld [vmem:[%s363 + $0x8] sm:$0xf]
      %v379 = vld [vmem:[%s363 + $0xc] sm:$0xf]
      %v380 = vld [vmem:[%s356] sm:$0xf]
      %v381 = vld [vmem:[%s356 + $0x4] sm:$0xf]
      %v382 = vld [vmem:[%s356 + $0x8] sm:$0xf]
      %v383 = vld [vmem:[%s356 + $0xc] sm:$0xf]
      %v384 = vld [vmem:[%s356 + $0x10] sm:$0xf]
      %v385 = vld [vmem:[%s356 + $0x14] sm:$0xf]
      %v386 = vld [vmem:[%s356 + $0x18] sm:$0xf]
      %v387 = vld [vmem:[%s356 + $0x1c] sm:$0xf]
      %v388 = vld [vmem:[%s356 + $0x20] sm:$0xf]
      %v389 = vld [vmem:[%s356 + $0x24] sm:$0xf]
      %v390 = vld [vmem:[%s356 + $0x28] sm:$0xf]
      %v391 = vld [vmem:[%s356 + $0x2c] sm:$0xf]
      %v392 = vld [vmem:[%s356 + $0x30] sm:$0xf]
      %v393 = vld [vmem:[%s356 + $0x34] sm:$0xf]
      %v394 = vld [vmem:[%s356 + $0x38] sm:$0xf]
      %v395 = vld [vmem:[%s356 + $0x3c] sm:$0xf]
      %v396 = vld [vmem:[%s356 + $0x40] sm:$0xf]
      %v397 = vld [vmem:[%s356 + $0x44] sm:$0xf]
      %v398 = vld [vmem:[%s356 + $0x48] sm:$0xf]
      %v399 = vld [vmem:[%s356 + $0x4c] sm:$0xf]
      %v400 = vld [vmem:[%s356 + $0x50] sm:$0xf]
      %v401 = vld [vmem:[%s356 + $0x54] sm:$0xf]
      %v402 = vld [vmem:[%s356 + $0x58] sm:$0xf]
      %v403 = vld [vmem:[%s356 + $0x5c] sm:$0xf]
      %v404 = vld [vmem:[%s356 + $0x60] sm:$0xf]
      %v405 = vld [vmem:[%s356 + $0x64] sm:$0xf]
      %v406 = vld [vmem:[%s356 + $0x68] sm:$0xf]
      %v407 = vld [vmem:[%s356 + $0x6c] sm:$0xf]
      %v408 = vld [vmem:[%s356 + $0x70] sm:$0xf]
      %v409 = vld [vmem:[%s356 + $0x74] sm:$0xf]
      %v410 = vld [vmem:[%s356 + $0x78] sm:$0xf]
      %v411 = vld [vmem:[%s356 + $0x7c] sm:$0xf]
      %v412 = vld [vmem:[%s2] sm:$0xf]
      %v413 = vld [vmem:[%s2 + $0x4] sm:$0xf]
      %v414 = vld [vmem:[%s2 + $0x8] sm:$0xf]
      %v415 = vld [vmem:[%s2 + $0xc] sm:$0xf]
      %v416 = vld [vmem:[%s2 + $0x10] sm:$0xf]
      %v417 = vld [vmem:[%s2 + $0x14] sm:$0xf]
      %v418 = vld [vmem:[%s2 + $0x18] sm:$0xf]
      %v419 = vld [vmem:[%s2 + $0x1c] sm:$0xf]
      %v420 = vld [vmem:[%s2 + $0x20] sm:$0xf]
      %v421 = vld [vmem:[%s2 + $0x24] sm:$0xf]
      %v422 = vld [vmem:[%s2 + $0x28] sm:$0xf]
      %v423 = vld [vmem:[%s2 + $0x2c] sm:$0xf]
      %v424 = vld [vmem:[%s2 + $0x30] sm:$0xf]
      %v425 = vld [vmem:[%s2 + $0x34] sm:$0xf]
      %v426 = vld [vmem:[%s2 + $0x38] sm:$0xf]
      %v427 = vld [vmem:[%s2 + $0x3c] sm:$0xf]
      %v464 = vunpack.c.l.b16 %v376
      %v465 = vunpack.c.l.b16 %v377
      %v466 = vunpack.c.l.b16 %v380
      %v467 = vunpack.c.l.b16 %v381
      %v468 = vunpack.c.l.b16 %v382
      %v469 = vunpack.c.l.b16 %v383
      %v470 = vunpack.c.l.b16 %v384
      %v471 = vunpack.c.l.b16 %v385
      %v472 = vunpack.c.l.b16 %v386
      %v473 = vunpack.c.l.b16 %v387
      %v474 = vunpack.c.l.b16 %v388
      %v475 = vunpack.c.l.b16 %v389
      %v476 = vunpack.c.l.b16 %v390
      %v477 = vunpack.c.l.b16 %v391
      %v478 = vunpack.c.l.b16 %v392
      %v479 = vunpack.c.l.b16 %v393
      %v480 = vunpack.c.l.b16 %v394
      %v481 = vunpack.c.l.b16 %v395
      %v482 = vunpack.c.l.b16 %v396
      %v483 = vunpack.c.l.b16 %v397
      %v484 = vunpack.c.l.b16 %v398
      %v485 = vunpack.c.l.b16 %v399
      %v486 = vunpack.c.l.b16 %v400
      %v487 = vunpack.c.l.b16 %v401
      %v488 = vunpack.c.l.b16 %v402
      %v489 = vunpack.c.l.b16 %v403
      %v490 = vunpack.c.l.b16 %v404
      %v491 = vunpack.c.l.b16 %v405
      %v492 = vunpack.c.l.b16 %v406
      %v493 = vunpack.c.l.b16 %v407
      %v494 = vunpack.c.l.b16 %v408
      %v495 = vunpack.c.l.b16 %v409
      %v496 = vunpack.c.l.b16 %v410
      %v497 = vunpack.c.l.b16 %v411
      %v498 = vunpack.c.l.b16 %v378
      %v499 = vunpack.c.l.b16 %v379
      %v500 = vpack.c.b16 %v465, %v464
      %v501 = vpack.c.b16 %v467, %v466
      %v502 = vpack.c.b16 %v469, %v468
      %v503 = vpack.c.b16 %v471, %v470
      %v504 = vpack.c.b16 %v473, %v472
      %v505 = vpack.c.b16 %v475, %v474
      %v506 = vpack.c.b16 %v477, %v476
      %v507 = vpack.c.b16 %v479, %v478
      %v508 = vpack.c.b16 %v481, %v480
      %v509 = vpack.c.b16 %v483, %v482
      %v510 = vpack.c.b16 %v485, %v484
      %v511 = vpack.c.b16 %v487, %v486
      %v512 = vpack.c.b16 %v489, %v488
      %v513 = vpack.c.b16 %v491, %v490
      %v514 = vpack.c.b16 %v493, %v492
      %v515 = vpack.c.b16 %v495, %v494
      %v516 = vpack.c.b16 %v497, %v496
      %v517 = vpack.c.b16 %v499, %v498
      %v552 = vunpack.c.l.b16 %v412
      %v553 = vunpack.c.l.b16 %v413
      %v554 = vunpack.c.l.b16 %v414
      %v555 = vunpack.c.l.b16 %v415
      %v556 = vunpack.c.l.b16 %v416
      %v557 = vunpack.c.l.b16 %v417
      %v558 = vunpack.c.l.b16 %v418
      %v559 = vunpack.c.l.b16 %v419
      %v560 = vunpack.c.l.b16 %v420
      %v561 = vunpack.c.l.b16 %v421
      %v562 = vunpack.c.l.b16 %v422
      %v563 = vunpack.c.l.b16 %v423
      %v564 = vunpack.c.l.b16 %v424
      %v565 = vunpack.c.l.b16 %v425
      %v566 = vunpack.c.l.b16 %v426
      %v567 = vunpack.c.l.b16 %v427
      %v568 = vpack.c.b16 %v553, %v552
      %v569 = vpack.c.b16 %v555, %v554
      %v570 = vpack.c.b16 %v557, %v556
      %v571 = vpack.c.b16 %v559, %v558
      %v572 = vpack.c.b16 %v561, %v560
      %v573 = vpack.c.b16 %v563, %v562
      %v574 = vpack.c.b16 %v565, %v564
      %v575 = vpack.c.b16 %v567, %v566
      %584 = vmatprep.subr.bf16.mxu0 0
      %585 = vmatpush1.bf16.msra.mxu0 %v568
      %586 = vmatprep.subr.bf16.mxu0 0
      %587 = vmatpush1.bf16.msra.mxu0 %v569
      %588 = vmatprep.subr.bf16.mxu0 0
      %589 = vmatpush1.bf16.msra.mxu0 %v570
      %590 = vmatprep.subr.bf16.mxu0 0
      %591 = vmatpush1.bf16.msra.mxu0 %v571
      %592 = vmatprep.subr.bf16.mxu0 0
      %593 = vmatpush1.bf16.msra.mxu0 %v572
      %594 = vmatprep.subr.bf16.mxu0 0
      %595 = vmatpush1.bf16.msra.mxu0 %v573
      %596 = vmatprep.subr.bf16.mxu0 0
      %597 = vmatpush1.bf16.msra.mxu0 %v574
      %598 = vmatprep.subr.bf16.mxu0 0
      %599 = vmatpush1.bf16.msra.mxu0 %v575
      %600 = vmatprep.subr.bf16.mxu0 0
      %601 = vmatpush1.bf16.msra.mxu0 0
      %602 = vmatprep.subr.bf16.mxu0 0
      %603 = vmatpush1.bf16.msra.mxu0 0
      %604 = vmatprep.subr.bf16.mxu0 0
      %605 = vmatpush1.bf16.msra.mxu0 0
      %606 = vmatprep.subr.bf16.mxu0 0
      %607 = vmatpush1.bf16.msra.mxu0 0
      %608 = vmatprep.subr.bf16.mxu0 0
      %609 = vmatpush1.bf16.msra.mxu0 0
      %610 = vmatprep.subr.bf16.mxu0 0
      %611 = vmatpush1.bf16.msra.mxu0 0
      %612 = vmatprep.subr.bf16.mxu0 0
      %613 = vmatpush1.bf16.msra.mxu0 0
      %614 = vmatprep.subr.bf16.mxu0 0
      %615 = vmatpush1.bf16.msra.mxu0 0
      %616 = vmatprep.mubr.bf16.mxu0 0
      %617 = vmatmul.mubr.bf16.gmra.mrb[0].mxu0 %v500
      %v618 = vpop.f32.mrb[0].mxu0
      %v619 = vadd.f32 0.0, %v618
      %v620 = vpop.f32.mrb[0].mxu0
      %v621 = vpop.f32.mrb[0].mxu0
      %v622 = vadd.f32 0.0, %v621
      %v623 = vpop.f32.mrb[0].mxu0
      %624 = vmatprep.mubr.bf16.mxu0 0
      %625 = vmatmul.mubr.bf16.gmra.mrb[0].mxu0 %v501
      %v626 = vpop.f32.mrb[0].mxu0
      %v627 = vadd.f32 0.0, %v626
      %v628 = vpop.f32.mrb[0].mxu0
      %v629 = vpop.f32.mrb[0].mxu0
      %v630 = vadd.f32 0.0, %v629
      %v631 = vpop.f32.mrb[0].mxu0
      %632 = vmatprep.mubr.bf16.mxu0 0
      %633 = vmatmul.mubr.bf16.gmra.mrb[0].mxu0 %v502
      %v634 = vpop.f32.mrb[0].mxu0
      %v635 = vadd.f32 0.0, %v634
      %v636 = vpop.f32.mrb[0].mxu0
      %v637 = vpop.f32.mrb[0].mxu0
      %v638 = vadd.f32 0.0, %v637
      %v639 = vpop.f32.mrb[0].mxu0
      %640 = vmatprep.mubr.bf16.mxu0 0
      %641 = vmatmul.mubr.bf16.gmra.mrb[0].mxu0 %v503
      %v642 = vpop.f32.mrb[0].mxu0
      %v643 = vadd.f32 0.0, %v642
      %v644 = vpop.f32.mrb[0].mxu0
      %v645 = vpop.f32.mrb[0].mxu0
      %v646 = vadd.f32 0.0, %v645
      %v647 = vpop.f32.mrb[0].mxu0
      %648 = vmatprep.mubr.bf16.mxu0 0
      %649 = vmatmul.mubr.bf16.gmra.mrb[0].mxu0 %v504
      %v650 = vpop.f32.mrb[0].mxu0
      %v651 = vadd.f32 0.0, %v650
      %v652 = vpop.f32.mrb[0].mxu0
      %v653 = vpop.f32.mrb[0].mxu0
      %v654 = vadd.f32 0.0, %v653
      %v655 = vpop.f32.mrb[0].mxu0
      %656 = vmatprep.mubr.bf16.mxu0 0
      %657 = vmatmul.mubr.bf16.gmra.mrb[0].mxu0 %v505
      %v658 = vpop.f32.mrb[0].mxu0
      %v659 = vadd.f32 0.0, %v658
      %v660 = vpop.f32.mrb[0].mxu0
      %v661 = vpop.f32.mrb[0].mxu0
      %v662 = vadd.f32 0.0, %v661
      %v663 = vpop.f32.mrb[0].mxu0
      %664 = vmatprep.mubr.bf16.mxu0 0
      %665 = vmatmul.mubr.bf16.gmra.mrb[0].mxu0 %v506
      %v666 = vpop.f32.mrb[0].mxu0
      %v667 = vadd.f32 0.0, %v666
      %v668 = vpop.f32.mrb[0].mxu0
      %v669 = vpop.f32.mrb[0].mxu0
      %v670 = vadd.f32 0.0, %v669
      %v671 = vpop.f32.mrb[0].mxu0
      %672 = vmatprep.mubr.bf16.mxu0 0
      %673 = vmatmul.mubr.bf16.gmra.mrb[0].mxu0 %v507
      %v674 = vpop.f32.mrb[0].mxu0
      %v675 = vadd.f32 0.0, %v674
      %v676 = vpop.f32.mrb[0].mxu0
      %v677 = vpop.f32.mrb[0].mxu0
      %v678 = vadd.f32 0.0, %v677
      %v679 = vpop.f32.mrb[0].mxu0
      %680 = vmatprep.mubr.bf16.mxu0 0
      %681 = vmatmul.mubr.bf16.gmra.mrb[0].mxu0 %v508
      %v682 = vpop.f32.mrb[0].mxu0
      %v683 = vadd.f32 0.0, %v682
      %v684 = vpop.f32.mrb[0].mxu0
      %v685 = vpop.f32.mrb[0].mxu0
      %v686 = vadd.f32 0.0, %v685
      %v687 = vpop.f32.mrb[0].mxu0
      %688 = vmatprep.mubr.bf16.mxu0 0
      %689 = vmatmul.mubr.bf16.gmra.mrb[0].mxu0 %v509
      %v690 = vpop.f32.mrb[0].mxu0
      %v691 = vadd.f32 0.0, %v690
      %v692 = vpop.f32.mrb[0].mxu0
      %v693 = vpop.f32.mrb[0].mxu0
      %v694 = vadd.f32 0.0, %v693
      %v695 = vpop.f32.mrb[0].mxu0
      %696 = vmatprep.mubr.bf16.mxu0 0
      %697 = vmatmul.mubr.bf16.gmra.mrb[0].mxu0 %v510
      %v698 = vpop.f32.mrb[0].mxu0
      %v699 = vadd.f32 0.0, %v698
      %v700 = vpop.f32.mrb[0].mxu0
      %v701 = vpop.f32.mrb[0].mxu0
      %v702 = vadd.f32 0.0, %v701
      %v703 = vpop.f32.mrb[0].mxu0
      %704 = vmatprep.mubr.bf16.mxu0 0
      %705 = vmatmul.mubr.bf16.gmra.mrb[0].mxu0 %v511
      %v706 = vpop.f32.mrb[0].mxu0
      %v707 = vadd.f32 0.0, %v706
      %v708 = vpop.f32.mrb[0].mxu0
      %v709 = vpop.f32.mrb[0].mxu0
      %v710 = vadd.f32 0.0, %v709
      %v711 = vpop.f32.mrb[0].mxu0
      %712 = vmatprep.mubr.bf16.mxu0 0
      %713 = vmatmul.mubr.bf16.gmra.mrb[0].mxu0 %v512
      %v714 = vpop.f32.mrb[0].mxu0
      %v715 = vadd.f32 0.0, %v714
      %v716 = vpop.f32.mrb[0].mxu0
      %v717 = vpop.f32.mrb[0].mxu0
      %v718 = vadd.f32 0.0, %v717
      %v719 = vpop.f32.mrb[0].mxu0
      %720 = vmatprep.mubr.bf16.mxu0 0
      %721 = vmatmul.mubr.bf16.gmra.mrb[0].mxu0 %v513
      %v722 = vpop.f32.mrb[0].mxu0
      %v723 = vadd.f32 0.0, %v722
      %v724 = vpop.f32.mrb[0].mxu0
      %v725 = vpop.f32.mrb[0].mxu0
      %v726 = vadd.f32 0.0, %v725
      %v727 = vpop.f32.mrb[0].mxu0
      %728 = vmatprep.mubr.bf16.mxu0 0
      %729 = vmatmul.mubr.bf16.gmra.mrb[0].mxu0 %v514
      %v730 = vpop.f32.mrb[0].mxu0
      %v731 = vadd.f32 0.0, %v730
      %v732 = vpop.f32.mrb[0].mxu0
      %v733 = vpop.f32.mrb[0].mxu0
      %v734 = vadd.f32 0.0, %v733
      %v735 = vpop.f32.mrb[0].mxu0
      %736 = vmatprep.mubr.bf16.mxu0 0
      %737 = vmatmul.mubr.bf16.gmra.mrb[0].mxu0 %v515
      %v738 = vpop.f32.mrb[0].mxu0
      %v739 = vadd.f32 0.0, %v738
      %v740 = vpop.f32.mrb[0].mxu0
      %v741 = vpop.f32.mrb[0].mxu0
      %v742 = vadd.f32 0.0, %v741
      %v743 = vpop.f32.mrb[0].mxu0
      %744 = vmatprep.mubr.bf16.mxu0 0
      %745 = vmatmul.mubr.bf16.gmra.mrb[0].mxu0 %v516
      %v746 = vpop.f32.mrb[0].mxu0
      %v747 = vadd.f32 0.0, %v746
      %v748 = vpop.f32.mrb[0].mxu0
      %v749 = vpop.f32.mrb[0].mxu0
      %v750 = vadd.f32 0.0, %v749
      %v751 = vpop.f32.mrb[0].mxu0
      %752 = vmatprep.mubr.bf16.mxu0 0
      %753 = vmatmul.mubr.bf16.gmra.mrb[0].mxu0 %v517
      %v754 = vpop.f32.mrb[0].mxu0
      %v755 = vadd.f32 0.0, %v754
      %v756 = vpop.f32.mrb[0].mxu0
      %v757 = vpop.f32.mrb[0].mxu0
      %v758 = vadd.f32 0.0, %v757
      %v759 = vpop.f32.mrb[0].mxu0
      %760 = vdwg.mxu0
      %v761 = vld [vmem:[%s3] sm:$0x1]
      %v763 = vlaneseq
      %v764 = vshrl.u32 %v763, 7
      %v765 = vsub.s32 0, %v764
      %v766 = vrot.slane %v761, %v765
      %v768 = vmul.f32 %v619, %v766
      %v769 = vmul.f32 %v622, %v766
      %v770 = vmul.f32 %v627, %v766
      %v771 = vmul.f32 %v630, %v766
      %v772 = vmul.f32 %v635, %v766
      %v773 = vmul.f32 %v638, %v766
      %v774 = vmul.f32 %v643, %v766
      %v775 = vmul.f32 %v646, %v766
      %v776 = vmul.f32 %v651, %v766
      %v777 = vmul.f32 %v654, %v766
      %v778 = vmul.f32 %v659, %v766
      %v779 = vmul.f32 %v662, %v766
      %v780 = vmul.f32 %v667, %v766
      %v781 = vmul.f32 %v670, %v766
      %v782 = vmul.f32 %v675, %v766
      %v783 = vmul.f32 %v678, %v766
      %v784 = vmul.f32 %v683, %v766
      %v785 = vmul.f32 %v686, %v766
      %v786 = vmul.f32 %v691, %v766
      %v787 = vmul.f32 %v694, %v766
      %v788 = vmul.f32 %v699, %v766
      %v789 = vmul.f32 %v702, %v766
      %v790 = vmul.f32 %v707, %v766
      %v791 = vmul.f32 %v710, %v766
      %v792 = vmul.f32 %v715, %v766
      %v793 = vmul.f32 %v718, %v766
      %v794 = vmul.f32 %v723, %v766
      %v795 = vmul.f32 %v726, %v766
      %v796 = vmul.f32 %v731, %v766
      %v797 = vmul.f32 %v734, %v766
      %v798 = vmul.f32 %v739, %v766
      %v799 = vmul.f32 %v742, %v766
      %v800 = vmul.f32 %v747, %v766
      %v801 = vmul.f32 %v750, %v766
      %v802 = vmul.f32 %v755, %v766
      %v803 = vmul.f32 %v758, %v766
      %v804 = vld [vmem:[%s4] sm:$0x1]
      %v806 = vlaneseq
      %v807 = vshrl.u32 %v806, 7
      %v808 = vsub.s32 0, %v807
      %v809 = vrot.slane %v804, %v808
      %v811 = vadd.f32 %v768, %v809
      %v812 = vadd.f32 %v769, %v809
      %v813 = vadd.f32 %v770, %v809
      %v814 = vadd.f32 %v771, %v809
      %v815 = vadd.f32 %v772, %v809
      %v816 = vadd.f32 %v773, %v809
      %v817 = vadd.f32 %v774, %v809
      %v818 = vadd.f32 %v775, %v809
      %v819 = vadd.f32 %v776, %v809
      %v820 = vadd.f32 %v777, %v809
      %v821 = vadd.f32 %v778, %v809
      %v822 = vadd.f32 %v779, %v809
      %v823 = vadd.f32 %v780, %v809
      %v824 = vadd.f32 %v781, %v809
      %v825 = vadd.f32 %v782, %v809
      %v826 = vadd.f32 %v783, %v809
      %v827 = vadd.f32 %v784, %v809
      %v828 = vadd.f32 %v785, %v809
      %v829 = vadd.f32 %v786, %v809
      %v830 = vadd.f32 %v787, %v809
      %v831 = vadd.f32 %v788, %v809
      %v832 = vadd.f32 %v789, %v809
      %v833 = vadd.f32 %v790, %v809
      %v834 = vadd.f32 %v791, %v809
      %v835 = vadd.f32 %v792, %v809
      %v836 = vadd.f32 %v793, %v809
      %v837 = vadd.f32 %v794, %v809
      %v838 = vadd.f32 %v795, %v809
      %v839 = vadd.f32 %v796, %v809
      %v840 = vadd.f32 %v797, %v809
      %v841 = vadd.f32 %v798, %v809
      %v842 = vadd.f32 %v799, %v809
      %v843 = vadd.f32 %v800, %v809
      %v844 = vadd.f32 %v801, %v809
      %v845 = vadd.f32 %v802, %v809
      %v846 = vadd.f32 %v803, %v809
      %v847 = vmax.f32 %v811, 0.0
      %v848 = vmax.f32 %v812, 0.0
      %v849 = vmax.f32 %v813, 0.0
      %v850 = vmax.f32 %v814, 0.0
      %v851 = vmax.f32 %v815, 0.0
      %v852 = vmax.f32 %v816, 0.0
      %v853 = vmax.f32 %v817, 0.0
      %v854 = vmax.f32 %v818, 0.0
      %v855 = vmax.f32 %v819, 0.0
      %v856 = vmax.f32 %v820, 0.0
      %v857 = vmax.f32 %v821, 0.0
      %v858 = vmax.f32 %v822, 0.0
      %v859 = vmax.f32 %v823, 0.0
      %v860 = vmax.f32 %v824, 0.0
      %v861 = vmax.f32 %v825, 0.0
      %v862 = vmax.f32 %v826, 0.0
      %v863 = vmax.f32 %v827, 0.0
      %v864 = vmax.f32 %v828, 0.0
      %v865 = vmax.f32 %v829, 0.0
      %v866 = vmax.f32 %v830, 0.0
      %v867 = vmax.f32 %v831, 0.0
      %v868 = vmax.f32 %v832, 0.0
      %v869 = vmax.f32 %v833, 0.0
      %v870 = vmax.f32 %v834, 0.0
      %v871 = vmax.f32 %v835, 0.0
      %v872 = vmax.f32 %v836, 0.0
      %v873 = vmax.f32 %v837, 0.0
      %v874 = vmax.f32 %v838, 0.0
      %v875 = vmax.f32 %v839, 0.0
      %v876 = vmax.f32 %v840, 0.0
      %v877 = vmax.f32 %v841, 0.0
      %v878 = vmax.f32 %v842, 0.0
      %v879 = vmax.f32 %v843, 0.0
      %v880 = vmax.f32 %v844, 0.0
      %v881 = vmax.f32 %v845, 0.0
      %v882 = vmax.f32 %v846, 0.0
      %p883 = scmp.eq.s32.totalorder %s24, 0
      %s884 = scalar_select %p883, 1, 0
      %v885 = vstv %s884
      %vm886 = vcmp.eq.s32.totalorder %v885, 1
      %v887 = vsel %vm886, 1, 0
      %v888 = vcvt.s32.f32 %v887
      %v889 = vcvt.s32.f32 0
      %v890 = vsub.f32 1.0, %v888
      %v891 = vsub.f32 1.0, %v889
      %v892 = vmul.f32 %v847, %v890
      %v893 = vmul.f32 %v848, %v890
      %v894 = vmul.f32 %v849, %v891
      %v895 = vmul.f32 %v850, %v891
      %v896 = vmul.f32 %v851, %v891
      %v897 = vmul.f32 %v852, %v891
      %v898 = vmul.f32 %v853, %v891
      %v899 = vmul.f32 %v854, %v891
      %v900 = vmul.f32 %v855, %v891
      %v901 = vmul.f32 %v856, %v891
      %v902 = vmul.f32 %v857, %v891
      %v903 = vmul.f32 %v858, %v891
      %v904 = vmul.f32 %v859, %v891
      %v905 = vmul.f32 %v860, %v891
      %v906 = vmul.f32 %v861, %v891
      %v907 = vmul.f32 %v862, %v891
      %v908 = vmul.f32 %v863, %v891
      %v909 = vmul.f32 %v864, %v891
      %v910 = vmul.f32 %v865, %v891
      %v911 = vmul.f32 %v866, %v891
      %v912 = vmul.f32 %v867, %v891
      %v913 = vmul.f32 %v868, %v891
      %v914 = vmul.f32 %v869, %v891
      %v915 = vmul.f32 %v870, %v891
      %v916 = vmul.f32 %v871, %v891
      %v917 = vmul.f32 %v872, %v891
      %v918 = vmul.f32 %v873, %v891
      %v919 = vmul.f32 %v874, %v891
      %v920 = vmul.f32 %v875, %v891
      %v921 = vmul.f32 %v876, %v891
      %v922 = vmul.f32 %v877, %v891
      %v923 = vmul.f32 %v878, %v891
      %v924 = vmul.f32 %v879, %v891
      %v925 = vmul.f32 %v880, %v891
      %v926 = vmul.f32 %v881, %v890
      %v927 = vmul.f32 %v882, %v890
      %v928 = vlaneseq
      %v929 = vshrl.u32 %v928, 7
      %v930 = vadd.s32 %v929, 8
      %vm931 = vcmp.ge.s32.totalorder %v929, 1
      %vm932 = vcmp.ge.s32.totalorder %v930, 1
      %v933 = vsel %vm931, 1, 0
      %v934 = vsel %vm932, 1, 0
      %v935 = vcvt.s32.f32 %v933
      %v936 = vcvt.s32.f32 %v934
      %vm937 = vcmp.lt.s32.totalorder %v929, 15
      %vm938 = vcmp.lt.s32.totalorder %v930, 15
      %v939 = vsel %vm937, 1, 0
      %v940 = vsel %vm938, 1, 0
      %v941 = vcvt.s32.f32 %v939
      %v942 = vcvt.s32.f32 %v940
      %v943 = vrot.slane %v892, 7
      %v944 = vrot.slane %v894, 7
      %v945 = vrot.slane %v896, 7
      %v946 = vrot.slane %v898, 7
      %v947 = vrot.slane %v900, 7
      %v948 = vrot.slane %v902, 7
      %v949 = vrot.slane %v904, 7
      %v950 = vrot.slane %v906, 7
      %v951 = vrot.slane %v908, 7
      %v952 = vrot.slane %v910, 7
      %v953 = vrot.slane %v912, 7
      %v954 = vrot.slane %v914, 7
      %v955 = vrot.slane %v916, 7
      %v956 = vrot.slane %v918, 7
      %v957 = vrot.slane %v920, 7
      %v958 = vrot.slane %v922, 7
      %v959 = vrot.slane %v924, 7
      %v960 = vrot.slane %v926, 7
      %v961 = vrot.slane %v893, 7
      %v962 = vrot.slane %v895, 7
      %v963 = vrot.slane %v897, 7
      %v964 = vrot.slane %v899, 7
      %v965 = vrot.slane %v901, 7
      %v966 = vrot.slane %v903, 7
      %v967 = vrot.slane %v905, 7
      %v968 = vrot.slane %v907, 7
      %v969 = vrot.slane %v909, 7
      %v970 = vrot.slane %v911, 7
      %v971 = vrot.slane %v913, 7
      %v972 = vrot.slane %v915, 7
      %v973 = vrot.slane %v917, 7
      %v974 = vrot.slane %v919, 7
      %v975 = vrot.slane %v921, 7
      %v976 = vrot.slane %v923, 7
      %v977 = vrot.slane %v925, 7
      %v978 = vrot.slane %v927, 7
      %vm979 = vcmp.lt.s32.totalorder %v929, 1
      %v980 = vsel %vm979, %v943, %v961
      %v981 = vsel %vm979, %v944, %v962
      %v982 = vsel %vm979, %v945, %v963
      %v983 = vsel %vm979, %v946, %v964
      %v984 = vsel %vm979, %v947, %v965
      %v985 = vsel %vm979, %v948, %v966
      %v986 = vsel %vm979, %v949, %v967
      %v987 = vsel %vm979, %v950, %v968
      %v988 = vsel %vm979, %v951, %v969
      %v989 = vsel %vm979, %v952, %v970
      %v990 = vsel %vm979, %v953, %v971
      %v991 = vsel %vm979, %v954, %v972
      %v992 = vsel %vm979, %v955, %v973
      %v993 = vsel %vm979, %v956, %v974
      %v994 = vsel %vm979, %v957, %v975
      %v995 = vsel %vm979, %v958, %v976
      %v996 = vsel %vm979, %v959, %v977
      %v997 = vsel %vm979, %v960, %v978
      %v998 = vsel %vm979, %v961, %v943
      %v999 = vsel %vm979, %v962, %v944
      %v1000 = vsel %vm979, %v963, %v945
      %v1001 = vsel %vm979, %v964, %v946
      %v1002 = vsel %vm979, %v965, %v947
      %v1003 = vsel %vm979, %v966, %v948
      %v1004 = vsel %vm979, %v967, %v949
      %v1005 = vsel %vm979, %v968, %v950
      %v1006 = vsel %vm979, %v969, %v951
      %v1007 = vsel %vm979, %v970, %v952
      %v1008 = vsel %vm979, %v971, %v953
      %v1009 = vsel %vm979, %v972, %v954
      %v1010 = vsel %vm979, %v973, %v955
      %v1011 = vsel %vm979, %v974, %v956
      %v1012 = vsel %vm979, %v975, %v957
      %v1013 = vsel %vm979, %v976, %v958
      %v1014 = vsel %vm979, %v977, %v959
      %v1015 = vsel %vm979, %v978, %v960
      %v1016 = vmul.f32 %v998, %v935
      %v1017 = vmul.f32 %v980, %v936
      %v1018 = vmul.f32 %v999, %v935
      %v1019 = vmul.f32 %v981, %v936
      %v1020 = vmul.f32 %v1000, %v935
      %v1021 = vmul.f32 %v982, %v936
      %v1022 = vmul.f32 %v1001, %v935
      %v1023 = vmul.f32 %v983, %v936
      %v1024 = vmul.f32 %v1002, %v935
      %v1025 = vmul.f32 %v984, %v936
      %v1026 = vmul.f32 %v1003, %v935
      %v1027 = vmul.f32 %v985, %v936
      %v1028 = vmul.f32 %v1004, %v935
      %v1029 = vmul.f32 %v986, %v936
      %v1030 = vmul.f32 %v1005, %v935
      %v1031 = vmul.f32 %v987, %v936
      %v1032 = vmul.f32 %v1006, %v935
      %v1033 = vmul.f32 %v988, %v936
      %v1034 = vmul.f32 %v1007, %v935
      %v1035 = vmul.f32 %v989, %v936
      %v1036 = vmul.f32 %v1008, %v935
      %v1037 = vmul.f32 %v990, %v936
      %v1038 = vmul.f32 %v1009, %v935
      %v1039 = vmul.f32 %v991, %v936
      %v1040 = vmul.f32 %v1010, %v935
      %v1041 = vmul.f32 %v992, %v936
      %v1042 = vmul.f32 %v1011, %v935
      %v1043 = vmul.f32 %v993, %v936
      %v1044 = vmul.f32 %v1012, %v935
      %v1045 = vmul.f32 %v994, %v936
      %v1046 = vmul.f32 %v1013, %v935
      %v1047 = vmul.f32 %v995, %v936
      %v1048 = vmul.f32 %v1014, %v935
      %v1049 = vmul.f32 %v996, %v936
      %v1050 = vmul.f32 %v1015, %v935
      %v1051 = vmul.f32 %v997, %v936
      %v1052 = vpack.c.bf16 %v1017, %v1016
      %v1053 = vpack.c.bf16 %v1019, %v1018
      %v1054 = vpack.c.bf16 %v1021, %v1020
      %v1055 = vpack.c.bf16 %v1023, %v1022
      %v1056 = vpack.c.bf16 %v1025, %v1024
      %v1057 = vpack.c.bf16 %v1027, %v1026
      %v1058 = vpack.c.bf16 %v1029, %v1028
      %v1059 = vpack.c.bf16 %v1031, %v1030
      %v1060 = vpack.c.bf16 %v1033, %v1032
      %v1061 = vpack.c.bf16 %v1035, %v1034
      %v1062 = vpack.c.bf16 %v1037, %v1036
      %v1063 = vpack.c.bf16 %v1039, %v1038
      %v1064 = vpack.c.bf16 %v1041, %v1040
      %v1065 = vpack.c.bf16 %v1043, %v1042
      %v1066 = vpack.c.bf16 %v1045, %v1044
      %v1067 = vpack.c.bf16 %v1047, %v1046
      %v1068 = vpack.c.bf16 %v1049, %v1048
      %v1069 = vpack.c.bf16 %v1051, %v1050
      %v1070 = vpack.c.bf16 %v893, %v892
      %v1071 = vpack.c.bf16 %v895, %v894
      %v1072 = vpack.c.bf16 %v897, %v896
      %v1073 = vpack.c.bf16 %v899, %v898
      %v1074 = vpack.c.bf16 %v901, %v900
      %v1075 = vpack.c.bf16 %v903, %v902
      %v1076 = vpack.c.bf16 %v905, %v904
      %v1077 = vpack.c.bf16 %v907, %v906
      %v1078 = vpack.c.bf16 %v909, %v908
      %v1079 = vpack.c.bf16 %v911, %v910
      %v1080 = vpack.c.bf16 %v913, %v912
      %v1081 = vpack.c.bf16 %v915, %v914
      %v1082 = vpack.c.bf16 %v917, %v916
      %v1083 = vpack.c.bf16 %v919, %v918
      %v1084 = vpack.c.bf16 %v921, %v920
      %v1085 = vpack.c.bf16 %v923, %v922
      %v1086 = vpack.c.bf16 %v925, %v924
      %v1087 = vpack.c.bf16 %v927, %v926
      %v1088 = vrot.slane %v892, 1
      %v1089 = vrot.slane %v894, 1
      %v1090 = vrot.slane %v896, 1
      %v1091 = vrot.slane %v898, 1
      %v1092 = vrot.slane %v900, 1
      %v1093 = vrot.slane %v902, 1
      %v1094 = vrot.slane %v904, 1
      %v1095 = vrot.slane %v906, 1
      %v1096 = vrot.slane %v908, 1
      %v1097 = vrot.slane %v910, 1
      %v1098 = vrot.slane %v912, 1
      %v1099 = vrot.slane %v914, 1
      %v1100 = vrot.slane %v916, 1
      %v1101 = vrot.slane %v918, 1
      %v1102 = vrot.slane %v920, 1
      %v1103 = vrot.slane %v922, 1
      %v1104 = vrot.slane %v924, 1
      %v1105 = vrot.slane %v926, 1
      %v1106 = vrot.slane %v893, 1
      %v1107 = vrot.slane %v895, 1
      %v1108 = vrot.slane %v897, 1
      %v1109 = vrot.slane %v899, 1
      %v1110 = vrot.slane %v901, 1
      %v1111 = vrot.slane %v903, 1
      %v1112 = vrot.slane %v905, 1
      %v1113 = vrot.slane %v907, 1
      %v1114 = vrot.slane %v909, 1
      %v1115 = vrot.slane %v911, 1
      %v1116 = vrot.slane %v913, 1
      %v1117 = vrot.slane %v915, 1
      %v1118 = vrot.slane %v917, 1
      %v1119 = vrot.slane %v919, 1
      %v1120 = vrot.slane %v921, 1
      %v1121 = vrot.slane %v923, 1
      %v1122 = vrot.slane %v925, 1
      %v1123 = vrot.slane %v927, 1
      %vm1124 = vcmp.lt.s32.totalorder %v929, 7
      %v1125 = vsel %vm1124, %v1088, %v1106
      %v1126 = vsel %vm1124, %v1089, %v1107
      %v1127 = vsel %vm1124, %v1090, %v1108
      %v1128 = vsel %vm1124, %v1091, %v1109
      %v1129 = vsel %vm1124, %v1092, %v1110
      %v1130 = vsel %vm1124, %v1093, %v1111
      %v1131 = vsel %vm1124, %v1094, %v1112
      %v1132 = vsel %vm1124, %v1095, %v1113
      %v1133 = vsel %vm1124, %v1096, %v1114
      %v1134 = vsel %vm1124, %v1097, %v1115
      %v1135 = vsel %vm1124, %v1098, %v1116
      %v1136 = vsel %vm1124, %v1099, %v1117
      %v1137 = vsel %vm1124, %v1100, %v1118
      %v1138 = vsel %vm1124, %v1101, %v1119
      %v1139 = vsel %vm1124, %v1102, %v1120
      %v1140 = vsel %vm1124, %v1103, %v1121
      %v1141 = vsel %vm1124, %v1104, %v1122
      %v1142 = vsel %vm1124, %v1105, %v1123
      %v1143 = vsel %vm1124, %v1106, %v1088
      %v1144 = vsel %vm1124, %v1107, %v1089
      %v1145 = vsel %vm1124, %v1108, %v1090
      %v1146 = vsel %vm1124, %v1109, %v1091
      %v1147 = vsel %vm1124, %v1110, %v1092
      %v1148 = vsel %vm1124, %v1111, %v1093
      %v1149 = vsel %vm1124, %v1112, %v1094
      %v1150 = vsel %vm1124, %v1113, %v1095
      %v1151 = vsel %vm1124, %v1114, %v1096
      %v1152 = vsel %vm1124, %v1115, %v1097
      %v1153 = vsel %vm1124, %v1116, %v1098
      %v1154 = vsel %vm1124, %v1117, %v1099
      %v1155 = vsel %vm1124, %v1118, %v1100
      %v1156 = vsel %vm1124, %v1119, %v1101
      %v1157 = vsel %vm1124, %v1120, %v1102
      %v1158 = vsel %vm1124, %v1121, %v1103
      %v1159 = vsel %vm1124, %v1122, %v1104
      %v1160 = vsel %vm1124, %v1123, %v1105
      %v1161 = vmul.f32 %v1125, %v941
      %v1162 = vmul.f32 %v1143, %v942
      %v1163 = vmul.f32 %v1126, %v941
      %v1164 = vmul.f32 %v1144, %v942
      %v1165 = vmul.f32 %v1127, %v941
      %v1166 = vmul.f32 %v1145, %v942
      %v1167 = vmul.f32 %v1128, %v941
      %v1168 = vmul.f32 %v1146, %v942
      %v1169 = vmul.f32 %v1129, %v941
      %v1170 = vmul.f32 %v1147, %v942
      %v1171 = vmul.f32 %v1130, %v941
      %v1172 = vmul.f32 %v1148, %v942
      %v1173 = vmul.f32 %v1131, %v941
      %v1174 = vmul.f32 %v1149, %v942
      %v1175 = vmul.f32 %v1132, %v941
      %v1176 = vmul.f32 %v1150, %v942
      %v1177 = vmul.f32 %v1133, %v941
      %v1178 = vmul.f32 %v1151, %v942
      %v1179 = vmul.f32 %v1134, %v941
      %v1180 = vmul.f32 %v1152, %v942
      %v1181 = vmul.f32 %v1135, %v941
      %v1182 = vmul.f32 %v1153, %v942
      %v1183 = vmul.f32 %v1136, %v941
      %v1184 = vmul.f32 %v1154, %v942
      %v1185 = vmul.f32 %v1137, %v941
      %v1186 = vmul.f32 %v1155, %v942
      %v1187 = vmul.f32 %v1138, %v941
      %v1188 = vmul.f32 %v1156, %v942
      %v1189 = vmul.f32 %v1139, %v941
      %v1190 = vmul.f32 %v1157, %v942
      %v1191 = vmul.f32 %v1140, %v941
      %v1192 = vmul.f32 %v1158, %v942
      %v1193 = vmul.f32 %v1141, %v941
      %v1194 = vmul.f32 %v1159, %v942
      %v1195 = vmul.f32 %v1142, %v941
      %v1196 = vmul.f32 %v1160, %v942
      %v1197 = vpack.c.bf16 %v1162, %v1161
      %v1198 = vpack.c.bf16 %v1164, %v1163
      %v1199 = vpack.c.bf16 %v1166, %v1165
      %v1200 = vpack.c.bf16 %v1168, %v1167
      %v1201 = vpack.c.bf16 %v1170, %v1169
      %v1202 = vpack.c.bf16 %v1172, %v1171
      %v1203 = vpack.c.bf16 %v1174, %v1173
      %v1204 = vpack.c.bf16 %v1176, %v1175
      %v1205 = vpack.c.bf16 %v1178, %v1177
      %v1206 = vpack.c.bf16 %v1180, %v1179
      %v1207 = vpack.c.bf16 %v1182, %v1181
      %v1208 = vpack.c.bf16 %v1184, %v1183
      %v1209 = vpack.c.bf16 %v1186, %v1185
      %v1210 = vpack.c.bf16 %v1188, %v1187
      %v1211 = vpack.c.bf16 %v1190, %v1189
      %v1212 = vpack.c.bf16 %v1192, %v1191
      %v1213 = vpack.c.bf16 %v1194, %v1193
      %v1214 = vpack.c.bf16 %v1196, %v1195
      %v1215 = vld [vmem:[%s5] sm:$0xf]
      %v1216 = vld [vmem:[%s5 + $0x4] sm:$0xf]
      %v1217 = vld [vmem:[%s5 + $0x8] sm:$0xf]
      %v1218 = vld [vmem:[%s5 + $0xc] sm:$0xf]
      %v1219 = vld [vmem:[%s5 + $0x10] sm:$0xf]
      %v1220 = vld [vmem:[%s5 + $0x14] sm:$0xf]
      %v1221 = vld [vmem:[%s5 + $0x18] sm:$0xf]
      %v1222 = vld [vmem:[%s5 + $0x1c] sm:$0xf]
      %v1223 = vld [vmem:[%s5 + $0x20] sm:$0xf]
      %v1224 = vld [vmem:[%s5 + $0x24] sm:$0xf]
      %v1225 = vld [vmem:[%s5 + $0x28] sm:$0xf]
      %v1226 = vld [vmem:[%s5 + $0x2c] sm:$0xf]
      %v1227 = vld [vmem:[%s5 + $0x30] sm:$0xf]
      %v1228 = vld [vmem:[%s5 + $0x34] sm:$0xf]
      %v1229 = vld [vmem:[%s5 + $0x38] sm:$0xf]
      %v1230 = vld [vmem:[%s5 + $0x3c] sm:$0xf]
      %v1231 = vld [vmem:[%s5 + $0x40] sm:$0xf]
      %v1232 = vld [vmem:[%s5 + $0x44] sm:$0xf]
      %v1233 = vld [vmem:[%s5 + $0x48] sm:$0xf]
      %v1234 = vld [vmem:[%s5 + $0x4c] sm:$0xf]
      %v1235 = vld [vmem:[%s5 + $0x50] sm:$0xf]
      %v1236 = vld [vmem:[%s5 + $0x54] sm:$0xf]
      %v1237 = vld [vmem:[%s5 + $0x58] sm:$0xf]
      %v1238 = vld [vmem:[%s5 + $0x5c] sm:$0xf]
      %v1239 = vld [vmem:[%s5 + $0x60] sm:$0xf]
      %v1240 = vld [vmem:[%s5 + $0x64] sm:$0xf]
      %v1241 = vld [vmem:[%s5 + $0x68] sm:$0xf]
      %v1242 = vld [vmem:[%s5 + $0x6c] sm:$0xf]
      %v1243 = vld [vmem:[%s5 + $0x70] sm:$0xf]
      %v1244 = vld [vmem:[%s5 + $0x74] sm:$0xf]
      %v1245 = vld [vmem:[%s5 + $0x78] sm:$0xf]
      %v1246 = vld [vmem:[%s5 + $0x7c] sm:$0xf]
      %v1247 = vld [vmem:[%s5 + $0x80] sm:$0xf]
      %v1248 = vld [vmem:[%s5 + $0x84] sm:$0xf]
      %v1249 = vld [vmem:[%s5 + $0x88] sm:$0xf]
      %v1250 = vld [vmem:[%s5 + $0x8c] sm:$0xf]
      %v1251 = vld [vmem:[%s5 + $0x90] sm:$0xf]
      %v1252 = vld [vmem:[%s5 + $0x94] sm:$0xf]
      %v1253 = vld [vmem:[%s5 + $0x98] sm:$0xf]
      %v1254 = vld [vmem:[%s5 + $0x9c] sm:$0xf]
      %v1255 = vld [vmem:[%s5 + $0xa0] sm:$0xf]
      %v1256 = vld [vmem:[%s5 + $0xa4] sm:$0xf]
      %v1257 = vld [vmem:[%s5 + $0xa8] sm:$0xf]
      %v1258 = vld [vmem:[%s5 + $0xac] sm:$0xf]
      %v1259 = vld [vmem:[%s5 + $0xb0] sm:$0xf]
      %v1260 = vld [vmem:[%s5 + $0xb4] sm:$0xf]
      %v1261 = vld [vmem:[%s5 + $0xb8] sm:$0xf]
      %v1262 = vld [vmem:[%s5 + $0xbc] sm:$0xf]
      %s1263 = scalar_lea.vmem %s5, 192
      %v1264 = vld [vmem:[%s1263] sm:$0xf]
      %v1265 = vld [vmem:[%s1263 + $0x4] sm:$0xf]
      %v1266 = vld [vmem:[%s1263 + $0x8] sm:$0xf]
      %v1267 = vld [vmem:[%s1263 + $0xc] sm:$0xf]
      %v1268 = vld [vmem:[%s1263 + $0x10] sm:$0xf]
      %v1269 = vld [vmem:[%s1263 + $0x14] sm:$0xf]
      %v1270 = vld [vmem:[%s1263 + $0x18] sm:$0xf]
      %v1271 = vld [vmem:[%s1263 + $0x1c] sm:$0xf]
      %v1272 = vld [vmem:[%s1263 + $0x20] sm:$0xf]
      %v1273 = vld [vmem:[%s1263 + $0x24] sm:$0xf]
      %v1274 = vld [vmem:[%s1263 + $0x28] sm:$0xf]
      %v1275 = vld [vmem:[%s1263 + $0x2c] sm:$0xf]
      %v1276 = vld [vmem:[%s1263 + $0x30] sm:$0xf]
      %v1277 = vld [vmem:[%s1263 + $0x34] sm:$0xf]
      %v1278 = vld [vmem:[%s1263 + $0x38] sm:$0xf]
      %v1279 = vld [vmem:[%s1263 + $0x3c] sm:$0xf]
      %v1280 = vld [vmem:[%s1263 + $0x40] sm:$0xf]
      %v1281 = vld [vmem:[%s1263 + $0x44] sm:$0xf]
      %v1282 = vld [vmem:[%s1263 + $0x48] sm:$0xf]
      %v1283 = vld [vmem:[%s1263 + $0x4c] sm:$0xf]
      %v1284 = vld [vmem:[%s1263 + $0x50] sm:$0xf]
      %v1285 = vld [vmem:[%s1263 + $0x54] sm:$0xf]
      %v1286 = vld [vmem:[%s1263 + $0x58] sm:$0xf]
      %v1287 = vld [vmem:[%s1263 + $0x5c] sm:$0xf]
      %v1288 = vld [vmem:[%s1263 + $0x60] sm:$0xf]
      %v1289 = vld [vmem:[%s1263 + $0x64] sm:$0xf]
      %v1290 = vld [vmem:[%s1263 + $0x68] sm:$0xf]
      %v1291 = vld [vmem:[%s1263 + $0x6c] sm:$0xf]
      %v1292 = vld [vmem:[%s1263 + $0x70] sm:$0xf]
      %v1293 = vld [vmem:[%s1263 + $0x74] sm:$0xf]
      %v1294 = vld [vmem:[%s1263 + $0x78] sm:$0xf]
      %v1295 = vld [vmem:[%s1263 + $0x7c] sm:$0xf]
      %v1296 = vld [vmem:[%s1263 + $0x80] sm:$0xf]
      %v1297 = vld [vmem:[%s1263 + $0x84] sm:$0xf]
      %v1298 = vld [vmem:[%s1263 + $0x88] sm:$0xf]
      %v1299 = vld [vmem:[%s1263 + $0x8c] sm:$0xf]
      %v1300 = vld [vmem:[%s1263 + $0x90] sm:$0xf]
      %v1301 = vld [vmem:[%s1263 + $0x94] sm:$0xf]
      %v1302 = vld [vmem:[%s1263 + $0x98] sm:$0xf]
      %v1303 = vld [vmem:[%s1263 + $0x9c] sm:$0xf]
      %v1304 = vld [vmem:[%s1263 + $0xa0] sm:$0xf]
      %v1305 = vld [vmem:[%s1263 + $0xa4] sm:$0xf]
      %v1306 = vld [vmem:[%s1263 + $0xa8] sm:$0xf]
      %v1307 = vld [vmem:[%s1263 + $0xac] sm:$0xf]
      %v1308 = vld [vmem:[%s1263 + $0xb0] sm:$0xf]
      %v1309 = vld [vmem:[%s1263 + $0xb4] sm:$0xf]
      %v1310 = vld [vmem:[%s1263 + $0xb8] sm:$0xf]
      %v1311 = vld [vmem:[%s1263 + $0xbc] sm:$0xf]
      %v1360 = vunpack.c.l.b16 %v1264
      %v1361 = vunpack.c.l.b16 %v1265
      %v1362 = vunpack.c.l.b16 %v1266
      %v1363 = vunpack.c.l.b16 %v1267
      %v1364 = vunpack.c.l.b16 %v1268
      %v1365 = vunpack.c.l.b16 %v1269
      %v1366 = vunpack.c.l.b16 %v1270
      %v1367 = vunpack.c.l.b16 %v1271
      %v1368 = vunpack.c.l.b16 %v1272
      %v1369 = vunpack.c.l.b16 %v1273
      %v1370 = vunpack.c.l.b16 %v1274
      %v1371 = vunpack.c.l.b16 %v1275
      %v1372 = vunpack.c.l.b16 %v1276
      %v1373 = vunpack.c.l.b16 %v1277
      %v1374 = vunpack.c.l.b16 %v1278
      %v1375 = vunpack.c.l.b16 %v1279
      %v1376 = vunpack.c.l.b16 %v1280
      %v1377 = vunpack.c.l.b16 %v1281
      %v1378 = vunpack.c.l.b16 %v1282
      %v1379 = vunpack.c.l.b16 %v1283
      %v1380 = vunpack.c.l.b16 %v1284
      %v1381 = vunpack.c.l.b16 %v1285
      %v1382 = vunpack.c.l.b16 %v1286
      %v1383 = vunpack.c.l.b16 %v1287
      %v1384 = vunpack.c.l.b16 %v1288
      %v1385 = vunpack.c.l.b16 %v1289
      %v1386 = vunpack.c.l.b16 %v1290
      %v1387 = vunpack.c.l.b16 %v1291
      %v1388 = vunpack.c.l.b16 %v1292
      %v1389 = vunpack.c.l.b16 %v1293
      %v1390 = vunpack.c.l.b16 %v1294
      %v1391 = vunpack.c.l.b16 %v1295
      %v1392 = vunpack.c.l.b16 %v1296
      %v1393 = vunpack.c.l.b16 %v1297
      %v1394 = vunpack.c.l.b16 %v1298
      %v1395 = vunpack.c.l.b16 %v1299
      %v1396 = vunpack.c.l.b16 %v1300
      %v1397 = vunpack.c.l.b16 %v1301
      %v1398 = vunpack.c.l.b16 %v1302
      %v1399 = vunpack.c.l.b16 %v1303
      %v1400 = vunpack.c.l.b16 %v1304
      %v1401 = vunpack.c.l.b16 %v1305
      %v1402 = vunpack.c.l.b16 %v1306
      %v1403 = vunpack.c.l.b16 %v1307
      %v1404 = vunpack.c.l.b16 %v1308
      %v1405 = vunpack.c.l.b16 %v1309
      %v1406 = vunpack.c.l.b16 %v1310
      %v1407 = vunpack.c.l.b16 %v1311
      %v1408 = vpack.c.b16 %v1361, %v1360
      %v1409 = vpack.c.b16 %v1363, %v1362
      %v1410 = vpack.c.b16 %v1365, %v1364
      %v1411 = vpack.c.b16 %v1367, %v1366
      %v1412 = vpack.c.b16 %v1369, %v1368
      %v1413 = vpack.c.b16 %v1371, %v1370
      %v1414 = vpack.c.b16 %v1373, %v1372
      %v1415 = vpack.c.b16 %v1375, %v1374
      %v1416 = vpack.c.b16 %v1377, %v1376
      %v1417 = vpack.c.b16 %v1379, %v1378
      %v1418 = vpack.c.b16 %v1381, %v1380
      %v1419 = vpack.c.b16 %v1383, %v1382
      %v1420 = vpack.c.b16 %v1385, %v1384
      %v1421 = vpack.c.b16 %v1387, %v1386
      %v1422 = vpack.c.b16 %v1389, %v1388
      %v1423 = vpack.c.b16 %v1391, %v1390
      %v1424 = vpack.c.b16 %v1393, %v1392
      %v1425 = vpack.c.b16 %v1395, %v1394
      %v1426 = vpack.c.b16 %v1397, %v1396
      %v1427 = vpack.c.b16 %v1399, %v1398
      %v1428 = vpack.c.b16 %v1401, %v1400
      %v1429 = vpack.c.b16 %v1403, %v1402
      %v1430 = vpack.c.b16 %v1405, %v1404
      %v1431 = vpack.c.b16 %v1407, %v1406
      %1456 = vmatprep.subr.bf16.mxu0 0
      %1457 = vmatpush1.bf16.msra.mxu0 %v1408
      %1458 = vmatprep.subr.bf16.mxu0 0
      %1459 = vmatpush1.bf16.msra.mxu0 %v1409
      %1460 = vmatprep.subr.bf16.mxu0 0
      %1461 = vmatpush1.bf16.msra.mxu0 %v1410
      %1462 = vmatprep.subr.bf16.mxu0 0
      %1463 = vmatpush1.bf16.msra.mxu0 %v1411
      %1464 = vmatprep.subr.bf16.mxu0 0
      %1465 = vmatpush1.bf16.msra.mxu0 %v1412
      %1466 = vmatprep.subr.bf16.mxu0 0
      %1467 = vmatpush1.bf16.msra.mxu0 %v1413
      %1468 = vmatprep.subr.bf16.mxu0 0
      %1469 = vmatpush1.bf16.msra.mxu0 %v1414
      %1470 = vmatprep.subr.bf16.mxu0 0
      %1471 = vmatpush1.bf16.msra.mxu0 %v1415
      %1472 = vmatprep.subr.bf16.mxu0 0
      %1473 = vmatpush1.bf16.msra.mxu0 %v1416
      %1474 = vmatprep.subr.bf16.mxu0 0
      %1475 = vmatpush1.bf16.msra.mxu0 %v1417
      %1476 = vmatprep.subr.bf16.mxu0 0
      %1477 = vmatpush1.bf16.msra.mxu0 %v1418
      %1478 = vmatprep.subr.bf16.mxu0 0
      %1479 = vmatpush1.bf16.msra.mxu0 %v1419
      %1480 = vmatprep.subr.bf16.mxu0 0
      %1481 = vmatpush1.bf16.msra.mxu0 %v1420
      %1482 = vmatprep.subr.bf16.mxu0 0
      %1483 = vmatpush1.bf16.msra.mxu0 %v1421
      %1484 = vmatprep.subr.bf16.mxu0 0
      %1485 = vmatpush1.bf16.msra.mxu0 %v1422
      %1486 = vmatprep.subr.bf16.mxu0 0
      %1487 = vmatpush1.bf16.msra.mxu0 %v1423
      %1488 = vmatprep.mubr.bf16.mxu0 %v1071
      %1489 = vmatmul.mubr.bf16.gmra.mrb[0].mxu0 %v1053
      %v1490 = vpop.f32.mrb[0].mxu0
      %v1491 = vadd.f32 0.0, %v1490
      %v1492 = vpop.f32.mrb[0].mxu0
      %v1493 = vpop.f32.mrb[0].mxu0
      %v1494 = vadd.f32 0.0, %v1493
      %v1495 = vpop.f32.mrb[0].mxu0
      %1496 = vmatprep.mubr.bf16.mxu0 %v1072
      %1497 = vmatmul.mubr.bf16.gmra.mrb[0].mxu0 %v1054
      %v1498 = vpop.f32.mrb[0].mxu0
      %v1499 = vadd.f32 0.0, %v1498
      %v1500 = vpop.f32.mrb[0].mxu0
      %v1501 = vpop.f32.mrb[0].mxu0
      %v1502 = vadd.f32 0.0, %v1501
      %v1503 = vpop.f32.mrb[0].mxu0
      %1504 = vmatprep.mubr.bf16.mxu0 %v1073
      %1505 = vmatmul.mubr.bf16.gmra.mrb[0].mxu0 %v1055
      %v1506 = vpop.f32.mrb[0].mxu0
      %v1507 = vadd.f32 0.0, %v1506
      %v1508 = vpop.f32.mrb[0].mxu0
      %v1509 = vpop.f32.mrb[0].mxu0
      %v1510 = vadd.f32 0.0, %v1509
      %v1511 = vpop.f32.mrb[0].mxu0
      %1512 = vmatprep.mubr.bf16.mxu0 %v1074
      %1513 = vmatmul.mubr.bf16.gmra.mrb[0].mxu0 %v1056
      %v1514 = vpop.f32.mrb[0].mxu0
      %v1515 = vadd.f32 0.0, %v1514
      %v1516 = vpop.f32.mrb[0].mxu0
      %v1517 = vpop.f32.mrb[0].mxu0
      %v1518 = vadd.f32 0.0, %v1517
      %v1519 = vpop.f32.mrb[0].mxu0
      %1520 = vmatprep.mubr.bf16.mxu0 %v1075
      %1521 = vmatmul.mubr.bf16.gmra.mrb[0].mxu0 %v1057
      %v1522 = vpop.f32.mrb[0].mxu0
      %v1523 = vadd.f32 0.0, %v1522
      %v1524 = vpop.f32.mrb[0].mxu0
      %v1525 = vpop.f32.mrb[0].mxu0
      %v1526 = vadd.f32 0.0, %v1525
      %v1527 = vpop.f32.mrb[0].mxu0
      %1528 = vmatprep.mubr.bf16.mxu0 %v1076
      %1529 = vmatmul.mubr.bf16.gmra.mrb[0].mxu0 %v1058
      %v1530 = vpop.f32.mrb[0].mxu0
      %v1531 = vadd.f32 0.0, %v1530
      %v1532 = vpop.f32.mrb[0].mxu0
      %v1533 = vpop.f32.mrb[0].mxu0
      %v1534 = vadd.f32 0.0, %v1533
      %v1535 = vpop.f32.mrb[0].mxu0
      %1536 = vmatprep.mubr.bf16.mxu0 %v1077
      %1537 = vmatmul.mubr.bf16.gmra.mrb[0].mxu0 %v1059
      %v1538 = vpop.f32.mrb[0].mxu0
      %v1539 = vadd.f32 0.0, %v1538
      %v1540 = vpop.f32.mrb[0].mxu0
      %v1541 = vpop.f32.mrb[0].mxu0
      %v1542 = vadd.f32 0.0, %v1541
      %v1543 = vpop.f32.mrb[0].mxu0
      %1544 = vmatprep.mubr.bf16.mxu0 %v1078
      %1545 = vmatmul.mubr.bf16.gmra.mrb[0].mxu0 %v1060
      %v1546 = vpop.f32.mrb[0].mxu0
      %v1547 = vadd.f32 0.0, %v1546
      %v1548 = vpop.f32.mrb[0].mxu0
      %v1549 = vpop.f32.mrb[0].mxu0
      %v1550 = vadd.f32 0.0, %v1549
      %v1551 = vpop.f32.mrb[0].mxu0
      %1552 = vmatprep.mubr.bf16.mxu0 %v1079
      %1553 = vmatmul.mubr.bf16.gmra.mrb[0].mxu0 %v1061
      %v1554 = vpop.f32.mrb[0].mxu0
      %v1555 = vadd.f32 0.0, %v1554
      %v1556 = vpop.f32.mrb[0].mxu0
      %v1557 = vpop.f32.mrb[0].mxu0
      %v1558 = vadd.f32 0.0, %v1557
      %v1559 = vpop.f32.mrb[0].mxu0
      %1560 = vmatprep.mubr.bf16.mxu0 %v1080
      %1561 = vmatmul.mubr.bf16.gmra.mrb[0].mxu0 %v1062
      %v1562 = vpop.f32.mrb[0].mxu0
      %v1563 = vadd.f32 0.0, %v1562
      %v1564 = vpop.f32.mrb[0].mxu0
      %v1565 = vpop.f32.mrb[0].mxu0
      %v1566 = vadd.f32 0.0, %v1565
      %v1567 = vpop.f32.mrb[0].mxu0
      %1568 = vmatprep.mubr.bf16.mxu0 %v1081
      %1569 = vmatmul.mubr.bf16.gmra.mrb[0].mxu0 %v1063
      %v1570 = vpop.f32.mrb[0].mxu0
      %v1571 = vadd.f32 0.0, %v1570
      %v1572 = vpop.f32.mrb[0].mxu0
      %v1573 = vpop.f32.mrb[0].mxu0
      %v1574 = vadd.f32 0.0, %v1573
      %v1575 = vpop.f32.mrb[0].mxu0
      %1576 = vmatprep.mubr.bf16.mxu0 %v1082
      %1577 = vmatmul.mubr.bf16.gmra.mrb[0].mxu0 %v1064
      %v1578 = vpop.f32.mrb[0].mxu0
      %v1579 = vadd.f32 0.0, %v1578
      %v1580 = vpop.f32.mrb[0].mxu0
      %v1581 = vpop.f32.mrb[0].mxu0
      %v1582 = vadd.f32 0.0, %v1581
      %v1583 = vpop.f32.mrb[0].mxu0
      %1584 = vmatprep.mubr.bf16.mxu0 %v1083
      %1585 = vmatmul.mubr.bf16.gmra.mrb[0].mxu0 %v1065
      %v1586 = vpop.f32.mrb[0].mxu0
      %v1587 = vadd.f32 0.0, %v1586
      %v1588 = vpop.f32.mrb[0].mxu0
      %v1589 = vpop.f32.mrb[0].mxu0
      %v1590 = vadd.f32 0.0, %v1589
      %v1591 = vpop.f32.mrb[0].mxu0
      %1592 = vmatprep.mubr.bf16.mxu0 %v1084
      %1593 = vmatmul.mubr.bf16.gmra.mrb[0].mxu0 %v1066
      %v1594 = vpop.f32.mrb[0].mxu0
      %v1595 = vadd.f32 0.0, %v1594
      %v1596 = vpop.f32.mrb[0].mxu0
      %v1597 = vpop.f32.mrb[0].mxu0
      %v1598 = vadd.f32 0.0, %v1597
      %v1599 = vpop.f32.mrb[0].mxu0
      %1600 = vmatprep.mubr.bf16.mxu0 %v1085
      %1601 = vmatmul.mubr.bf16.gmra.mrb[0].mxu0 %v1067
      %v1602 = vpop.f32.mrb[0].mxu0
      %v1603 = vadd.f32 0.0, %v1602
      %v1604 = vpop.f32.mrb[0].mxu0
      %v1605 = vpop.f32.mrb[0].mxu0
      %v1606 = vadd.f32 0.0, %v1605
      %v1607 = vpop.f32.mrb[0].mxu0
      %1608 = vmatprep.mubr.bf16.mxu0 %v1086
      %1609 = vmatmul.mubr.bf16.gmra.mrb[0].mxu0 %v1068
      %v1610 = vpop.f32.mrb[0].mxu0
      %v1611 = vadd.f32 0.0, %v1610
      %v1612 = vpop.f32.mrb[0].mxu0
      %v1613 = vpop.f32.mrb[0].mxu0
      %v1614 = vadd.f32 0.0, %v1613
      %v1615 = vpop.f32.mrb[0].mxu0
      %1616 = vdwg.mxu0
      %1617 = vmatprep.subr.bf16.mxu0 0
      %1618 = vmatpush1.bf16.msra.mxu0 %v1424
      %1619 = vmatprep.subr.bf16.mxu0 0
      %1620 = vmatpush1.bf16.msra.mxu0 %v1425
      %1621 = vmatprep.subr.bf16.mxu0 0
      %1622 = vmatpush1.bf16.msra.mxu0 %v1426
      %1623 = vmatprep.subr.bf16.mxu0 0
      %1624 = vmatpush1.bf16.msra.mxu0 %v1427
      %1625 = vmatprep.subr.bf16.mxu0 0
      %1626 = vmatpush1.bf16.msra.mxu0 %v1428
      %1627 = vmatprep.subr.bf16.mxu0 0
      %1628 = vmatpush1.bf16.msra.mxu0 %v1429
      %1629 = vmatprep.subr.bf16.mxu0 0
      %1630 = vmatpush1.bf16.msra.mxu0 %v1430
      %1631 = vmatprep.subr.bf16.mxu0 0
      %1632 = vmatpush1.bf16.msra.mxu0 %v1431
      %1633 = vmatprep.subr.bf16.mxu0 0
      %1634 = vmatpush1.bf16.msra.mxu0 0
      %1635 = vmatprep.subr.bf16.mxu0 0
      %1636 = vmatpush1.bf16.msra.mxu0 0
      %1637 = vmatprep.subr.bf16.mxu0 0
      %1638 = vmatpush1.bf16.msra.mxu0 0
      %1639 = vmatprep.subr.bf16.mxu0 0
      %1640 = vmatpush1.bf16.msra.mxu0 0
      %1641 = vmatprep.subr.bf16.mxu0 0
      %1642 = vmatpush1.bf16.msra.mxu0 0
      %1643 = vmatprep.subr.bf16.mxu0 0
      %1644 = vmatpush1.bf16.msra.mxu0 0
      %1645 = vmatprep.subr.bf16.mxu0 0
      %1646 = vmatpush1.bf16.msra.mxu0 0
      %1647 = vmatprep.subr.bf16.mxu0 0
      %1648 = vmatpush1.bf16.msra.mxu0 0
      %1649 = vmatprep.mubr.bf16.mxu0 0
      %1650 = vmatmul.mubr.bf16.gmra.mrb[0].mxu0 %v1198
      %v1651 = vpop.f32.mrb[0].mxu0
      %v1652 = vadd.f32 %v1491, %v1651
      %v1653 = vpop.f32.mrb[0].mxu0
      %v1654 = vpop.f32.mrb[0].mxu0
      %v1655 = vadd.f32 %v1494, %v1654
      %v1656 = vpop.f32.mrb[0].mxu0
      %1657 = vmatprep.mubr.bf16.mxu0 0
      %1658 = vmatmul.mubr.bf16.gmra.mrb[0].mxu0 %v1199
      %v1659 = vpop.f32.mrb[0].mxu0
      %v1660 = vadd.f32 %v1499, %v1659
      %v1661 = vpop.f32.mrb[0].mxu0
      %v1662 = vpop.f32.mrb[0].mxu0
      %v1663 = vadd.f32 %v1502, %v1662
      %v1664 = vpop.f32.mrb[0].mxu0
      %1665 = vmatprep.mubr.bf16.mxu0 0
      %1666 = vmatmul.mubr.bf16.gmra.mrb[0].mxu0 %v1200
      %v1667 = vpop.f32.mrb[0].mxu0
      %v1668 = vadd.f32 %v1507, %v1667
      %v1669 = vpop.f32.mrb[0].mxu0
      %v1670 = vpop.f32.mrb[0].mxu0
      %v1671 = vadd.f32 %v1510, %v1670
      %v1672 = vpop.f32.mrb[0].mxu0
      %1673 = vmatprep.mubr.bf16.mxu0 0
      %1674 = vmatmul.mubr.bf16.gmra.mrb[0].mxu0 %v1201
      %v1675 = vpop.f32.mrb[0].mxu0
      %v1676 = vadd.f32 %v1515, %v1675
      %v1677 = vpop.f32.mrb[0].mxu0
      %v1678 = vpop.f32.mrb[0].mxu0
      %v1679 = vadd.f32 %v1518, %v1678
      %v1680 = vpop.f32.mrb[0].mxu0
      %1681 = vmatprep.mubr.bf16.mxu0 0
      %1682 = vmatmul.mubr.bf16.gmra.mrb[0].mxu0 %v1202
      %v1683 = vpop.f32.mrb[0].mxu0
      %v1684 = vadd.f32 %v1523, %v1683
      %v1685 = vpop.f32.mrb[0].mxu0
      %v1686 = vpop.f32.mrb[0].mxu0
      %v1687 = vadd.f32 %v1526, %v1686
      %v1688 = vpop.f32.mrb[0].mxu0
      %1689 = vmatprep.mubr.bf16.mxu0 0
      %1690 = vmatmul.mubr.bf16.gmra.mrb[0].mxu0 %v1203
      %v1691 = vpop.f32.mrb[0].mxu0
      %v1692 = vadd.f32 %v1531, %v1691
      %v1693 = vpop.f32.mrb[0].mxu0
      %v1694 = vpop.f32.mrb[0].mxu0
      %v1695 = vadd.f32 %v1534, %v1694
      %v1696 = vpop.f32.mrb[0].mxu0
      %1697 = vmatprep.mubr.bf16.mxu0 0
      %1698 = vmatmul.mubr.bf16.gmra.mrb[0].mxu0 %v1204
      %v1699 = vpop.f32.mrb[0].mxu0
      %v1700 = vadd.f32 %v1539, %v1699
      %v1701 = vpop.f32.mrb[0].mxu0
      %v1702 = vpop.f32.mrb[0].mxu0
      %v1703 = vadd.f32 %v1542, %v1702
      %v1704 = vpop.f32.mrb[0].mxu0
      %1705 = vmatprep.mubr.bf16.mxu0 0
      %1706 = vmatmul.mubr.bf16.gmra.mrb[0].mxu0 %v1205
      %v1707 = vpop.f32.mrb[0].mxu0
      %v1708 = vadd.f32 %v1547, %v1707
      %v1709 = vpop.f32.mrb[0].mxu0
      %v1710 = vpop.f32.mrb[0].mxu0
      %v1711 = vadd.f32 %v1550, %v1710
      %v1712 = vpop.f32.mrb[0].mxu0
      %1713 = vmatprep.mubr.bf16.mxu0 0
      %1714 = vmatmul.mubr.bf16.gmra.mrb[0].mxu0 %v1206
      %v1715 = vpop.f32.mrb[0].mxu0
      %v1716 = vadd.f32 %v1555, %v1715
      %v1717 = vpop.f32.mrb[0].mxu0
      %v1718 = vpop.f32.mrb[0].mxu0
      %v1719 = vadd.f32 %v1558, %v1718
      %v1720 = vpop.f32.mrb[0].mxu0
      %1721 = vmatprep.mubr.bf16.mxu0 0
      %1722 = vmatmul.mubr.bf16.gmra.mrb[0].mxu0 %v1207
      %v1723 = vpop.f32.mrb[0].mxu0
      %v1724 = vadd.f32 %v1563, %v1723
      %v1725 = vpop.f32.mrb[0].mxu0
      %v1726 = vpop.f32.mrb[0].mxu0
      %v1727 = vadd.f32 %v1566, %v1726
      %v1728 = vpop.f32.mrb[0].mxu0
      %1729 = vmatprep.mubr.bf16.mxu0 0
      %1730 = vmatmul.mubr.bf16.gmra.mrb[0].mxu0 %v1208
      %v1731 = vpop.f32.mrb[0].mxu0
      %v1732 = vadd.f32 %v1571, %v1731
      %v1733 = vpop.f32.mrb[0].mxu0
      %v1734 = vpop.f32.mrb[0].mxu0
      %v1735 = vadd.f32 %v1574, %v1734
      %v1736 = vpop.f32.mrb[0].mxu0
      %1737 = vmatprep.mubr.bf16.mxu0 0
      %1738 = vmatmul.mubr.bf16.gmra.mrb[0].mxu0 %v1209
      %v1739 = vpop.f32.mrb[0].mxu0
      %v1740 = vadd.f32 %v1579, %v1739
      %v1741 = vpop.f32.mrb[0].mxu0
      %v1742 = vpop.f32.mrb[0].mxu0
      %v1743 = vadd.f32 %v1582, %v1742
      %v1744 = vpop.f32.mrb[0].mxu0
      %1745 = vmatprep.mubr.bf16.mxu0 0
      %1746 = vmatmul.mubr.bf16.gmra.mrb[0].mxu0 %v1210
      %v1747 = vpop.f32.mrb[0].mxu0
      %v1748 = vadd.f32 %v1587, %v1747
      %v1749 = vpop.f32.mrb[0].mxu0
      %v1750 = vpop.f32.mrb[0].mxu0
      %v1751 = vadd.f32 %v1590, %v1750
      %v1752 = vpop.f32.mrb[0].mxu0
      %1753 = vmatprep.mubr.bf16.mxu0 0
      %1754 = vmatmul.mubr.bf16.gmra.mrb[0].mxu0 %v1211
      %v1755 = vpop.f32.mrb[0].mxu0
      %v1756 = vadd.f32 %v1595, %v1755
      %v1757 = vpop.f32.mrb[0].mxu0
      %v1758 = vpop.f32.mrb[0].mxu0
      %v1759 = vadd.f32 %v1598, %v1758
      %v1760 = vpop.f32.mrb[0].mxu0
      %1761 = vmatprep.mubr.bf16.mxu0 0
      %1762 = vmatmul.mubr.bf16.gmra.mrb[0].mxu0 %v1212
      %v1763 = vpop.f32.mrb[0].mxu0
      %v1764 = vadd.f32 %v1603, %v1763
      %v1765 = vpop.f32.mrb[0].mxu0
      %v1766 = vpop.f32.mrb[0].mxu0
      %v1767 = vadd.f32 %v1606, %v1766
      %v1768 = vpop.f32.mrb[0].mxu0
      %1769 = vmatprep.mubr.bf16.mxu0 0
      %1770 = vmatmul.mubr.bf16.gmra.mrb[0].mxu0 %v1213
      %v1771 = vpop.f32.mrb[0].mxu0
      %v1772 = vadd.f32 %v1611, %v1771
      %v1773 = vpop.f32.mrb[0].mxu0
      %v1774 = vpop.f32.mrb[0].mxu0
      %v1775 = vadd.f32 %v1614, %v1774
      %v1776 = vpop.f32.mrb[0].mxu0
      %1777 = vdwg.mxu0
      %v1826 = vunpack.c.l.b16 %v1215
      %v1827 = vunpack.c.l.b16 %v1216
      %v1828 = vunpack.c.l.b16 %v1217
      %v1829 = vunpack.c.l.b16 %v1218
      %v1830 = vunpack.c.l.b16 %v1219
      %v1831 = vunpack.c.l.b16 %v1220
      %v1832 = vunpack.c.l.b16 %v1221
      %v1833 = vunpack.c.l.b16 %v1222
      %v1834 = vunpack.c.l.b16 %v1223
      %v1835 = vunpack.c.l.b16 %v1224
      %v1836 = vunpack.c.l.b16 %v1225
      %v1837 = vunpack.c.l.b16 %v1226
      %v1838 = vunpack.c.l.b16 %v1227
      %v1839 = vunpack.c.l.b16 %v1228
      %v1840 = vunpack.c.l.b16 %v1229
      %v1841 = vunpack.c.l.b16 %v1230
      %v1842 = vunpack.c.l.b16 %v1231
      %v1843 = vunpack.c.l.b16 %v1232
      %v1844 = vunpack.c.l.b16 %v1233
      %v1845 = vunpack.c.l.b16 %v1234
      %v1846 = vunpack.c.l.b16 %v1235
      %v1847 = vunpack.c.l.b16 %v1236
      %v1848 = vunpack.c.l.b16 %v1237
      %v1849 = vunpack.c.l.b16 %v1238
      %v1850 = vunpack.c.l.b16 %v1239
      %v1851 = vunpack.c.l.b16 %v1240
      %v1852 = vunpack.c.l.b16 %v1241
      %v1853 = vunpack.c.l.b16 %v1242
      %v1854 = vunpack.c.l.b16 %v1243
      %v1855 = vunpack.c.l.b16 %v1244
      %v1856 = vunpack.c.l.b16 %v1245
      %v1857 = vunpack.c.l.b16 %v1246
      %v1858 = vunpack.c.l.b16 %v1247
      %v1859 = vunpack.c.l.b16 %v1248
      %v1860 = vunpack.c.l.b16 %v1249
      %v1861 = vunpack.c.l.b16 %v1250
      %v1862 = vunpack.c.l.b16 %v1251
      %v1863 = vunpack.c.l.b16 %v1252
      %v1864 = vunpack.c.l.b16 %v1253
      %v1865 = vunpack.c.l.b16 %v1254
      %v1866 = vunpack.c.l.b16 %v1255
      %v1867 = vunpack.c.l.b16 %v1256
      %v1868 = vunpack.c.l.b16 %v1257
      %v1869 = vunpack.c.l.b16 %v1258
      %v1870 = vunpack.c.l.b16 %v1259
      %v1871 = vunpack.c.l.b16 %v1260
      %v1872 = vunpack.c.l.b16 %v1261
      %v1873 = vunpack.c.l.b16 %v1262
      %v1874 = vpack.c.b16 %v1827, %v1826
      %v1875 = vpack.c.b16 %v1829, %v1828
      %v1876 = vpack.c.b16 %v1831, %v1830
      %v1877 = vpack.c.b16 %v1833, %v1832
      %v1878 = vpack.c.b16 %v1835, %v1834
      %v1879 = vpack.c.b16 %v1837, %v1836
      %v1880 = vpack.c.b16 %v1839, %v1838
      %v1881 = vpack.c.b16 %v1841, %v1840
      %v1882 = vpack.c.b16 %v1843, %v1842
      %v1883 = vpack.c.b16 %v1845, %v1844
      %v1884 = vpack.c.b16 %v1847, %v1846
      %v1885 = vpack.c.b16 %v1849, %v1848
      %v1886 = vpack.c.b16 %v1851, %v1850
      %v1887 = vpack.c.b16 %v1853, %v1852
      %v1888 = vpack.c.b16 %v1855, %v1854
      %v1889 = vpack.c.b16 %v1857, %v1856
      %v1890 = vpack.c.b16 %v1859, %v1858
      %v1891 = vpack.c.b16 %v1861, %v1860
      %v1892 = vpack.c.b16 %v1863, %v1862
      %v1893 = vpack.c.b16 %v1865, %v1864
      %v1894 = vpack.c.b16 %v1867, %v1866
      %v1895 = vpack.c.b16 %v1869, %v1868
      %v1896 = vpack.c.b16 %v1871, %v1870
      %v1897 = vpack.c.b16 %v1873, %v1872
      %1922 = vmatprep.subr.bf16.mxu0 0
      %1923 = vmatpush1.bf16.msra.mxu0 %v1874
      %1924 = vmatprep.subr.bf16.mxu0 0
      %1925 = vmatpush1.bf16.msra.mxu0 %v1875
      %1926 = vmatprep.subr.bf16.mxu0 0
      %1927 = vmatpush1.bf16.msra.mxu0 %v1876
      %1928 = vmatprep.subr.bf16.mxu0 0
      %1929 = vmatpush1.bf16.msra.mxu0 %v1877
      %1930 = vmatprep.subr.bf16.mxu0 0
      %1931 = vmatpush1.bf16.msra.mxu0 %v1878
      %1932 = vmatprep.subr.bf16.mxu0 0
      %1933 = vmatpush1.bf16.msra.mxu0 %v1879
      %1934 = vmatprep.subr.bf16.mxu0 0
      %1935 = vmatpush1.bf16.msra.mxu0 %v1880
      %1936 = vmatprep.subr.bf16.mxu0 0
      %1937 = vmatpush1.bf16.msra.mxu0 %v1881
      %1938 = vmatprep.subr.bf16.mxu0 0
      %1939 = vmatpush1.bf16.msra.mxu0 %v1882
      %1940 = vmatprep.subr.bf16.mxu0 0
      %1941 = vmatpush1.bf16.msra.mxu0 %v1883
      %1942 = vmatprep.subr.bf16.mxu0 0
      %1943 = vmatpush1.bf16.msra.mxu0 %v1884
      %1944 = vmatprep.subr.bf16.mxu0 0
      %1945 = vmatpush1.bf16.msra.mxu0 %v1885
      %1946 = vmatprep.subr.bf16.mxu0 0
      %1947 = vmatpush1.bf16.msra.mxu0 %v1886
      %1948 = vmatprep.subr.bf16.mxu0 0
      %1949 = vmatpush1.bf16.msra.mxu0 %v1887
      %1950 = vmatprep.subr.bf16.mxu0 0
      %1951 = vmatpush1.bf16.msra.mxu0 %v1888
      %1952 = vmatprep.subr.bf16.mxu0 0
      %1953 = vmatpush1.bf16.msra.mxu0 %v1889
      %1954 = vmatprep.mubr.bf16.mxu0 %v1070
      %1955 = vmatmul.mubr.bf16.gmra.mrb[0].mxu0 %v1052
      %v1956 = vpop.f32.mrb[0].mxu0
      %v1957 = vadd.f32 %v1652, %v1956
      %v1958 = vpop.f32.mrb[0].mxu0
      %v1959 = vpop.f32.mrb[0].mxu0
      %v1960 = vadd.f32 %v1655, %v1959
      %v1961 = vpop.f32.mrb[0].mxu0
      %1962 = vmatprep.mubr.bf16.mxu0 %v1071
      %1963 = vmatmul.mubr.bf16.gmra.mrb[0].mxu0 %v1053
      %v1964 = vpop.f32.mrb[0].mxu0
      %v1965 = vadd.f32 %v1660, %v1964
      %v1966 = vpop.f32.mrb[0].mxu0
      %v1967 = vpop.f32.mrb[0].mxu0
      %v1968 = vadd.f32 %v1663, %v1967
      %v1969 = vpop.f32.mrb[0].mxu0
      %1970 = vmatprep.mubr.bf16.mxu0 %v1072
      %1971 = vmatmul.mubr.bf16.gmra.mrb[0].mxu0 %v1054
      %v1972 = vpop.f32.mrb[0].mxu0
      %v1973 = vadd.f32 %v1668, %v1972
      %v1974 = vpop.f32.mrb[0].mxu0
      %v1975 = vpop.f32.mrb[0].mxu0
      %v1976 = vadd.f32 %v1671, %v1975
      %v1977 = vpop.f32.mrb[0].mxu0
      %1978 = vmatprep.mubr.bf16.mxu0 %v1073
      %1979 = vmatmul.mubr.bf16.gmra.mrb[0].mxu0 %v1055
      %v1980 = vpop.f32.mrb[0].mxu0
      %v1981 = vadd.f32 %v1676, %v1980
      %v1982 = vpop.f32.mrb[0].mxu0
      %v1983 = vpop.f32.mrb[0].mxu0
      %v1984 = vadd.f32 %v1679, %v1983
      %v1985 = vpop.f32.mrb[0].mxu0
      %1986 = vmatprep.mubr.bf16.mxu0 %v1074
      %1987 = vmatmul.mubr.bf16.gmra.mrb[0].mxu0 %v1056
      %v1988 = vpop.f32.mrb[0].mxu0
      %v1989 = vadd.f32 %v1684, %v1988
      %v1990 = vpop.f32.mrb[0].mxu0
      %v1991 = vpop.f32.mrb[0].mxu0
      %v1992 = vadd.f32 %v1687, %v1991
      %v1993 = vpop.f32.mrb[0].mxu0
      %1994 = vmatprep.mubr.bf16.mxu0 %v1075
      %1995 = vmatmul.mubr.bf16.gmra.mrb[0].mxu0 %v1057
      %v1996 = vpop.f32.mrb[0].mxu0
      %v1997 = vadd.f32 %v1692, %v1996
      %v1998 = vpop.f32.mrb[0].mxu0
      %v1999 = vpop.f32.mrb[0].mxu0
      %v2000 = vadd.f32 %v1695, %v1999
      %v2001 = vpop.f32.mrb[0].mxu0
      %2002 = vmatprep.mubr.bf16.mxu0 %v1076
      %2003 = vmatmul.mubr.bf16.gmra.mrb[0].mxu0 %v1058
      %v2004 = vpop.f32.mrb[0].mxu0
      %v2005 = vadd.f32 %v1700, %v2004
      %v2006 = vpop.f32.mrb[0].mxu0
      %v2007 = vpop.f32.mrb[0].mxu0
      %v2008 = vadd.f32 %v1703, %v2007
      %v2009 = vpop.f32.mrb[0].mxu0
      %2010 = vmatprep.mubr.bf16.mxu0 %v1077
      %2011 = vmatmul.mubr.bf16.gmra.mrb[0].mxu0 %v1059
      %v2012 = vpop.f32.mrb[0].mxu0
      %v2013 = vadd.f32 %v1708, %v2012
      %v2014 = vpop.f32.mrb[0].mxu0
      %v2015 = vpop.f32.mrb[0].mxu0
      %v2016 = vadd.f32 %v1711, %v2015
      %v2017 = vpop.f32.mrb[0].mxu0
      %2018 = vmatprep.mubr.bf16.mxu0 %v1078
      %2019 = vmatmul.mubr.bf16.gmra.mrb[0].mxu0 %v1060
      %v2020 = vpop.f32.mrb[0].mxu0
      %v2021 = vadd.f32 %v1716, %v2020
      %v2022 = vpop.f32.mrb[0].mxu0
      %v2023 = vpop.f32.mrb[0].mxu0
      %v2024 = vadd.f32 %v1719, %v2023
      %v2025 = vpop.f32.mrb[0].mxu0
      %2026 = vmatprep.mubr.bf16.mxu0 %v1079
      %2027 = vmatmul.mubr.bf16.gmra.mrb[0].mxu0 %v1061
      %v2028 = vpop.f32.mrb[0].mxu0
      %v2029 = vadd.f32 %v1724, %v2028
      %v2030 = vpop.f32.mrb[0].mxu0
      %v2031 = vpop.f32.mrb[0].mxu0
      %v2032 = vadd.f32 %v1727, %v2031
      %v2033 = vpop.f32.mrb[0].mxu0
      %2034 = vmatprep.mubr.bf16.mxu0 %v1080
      %2035 = vmatmul.mubr.bf16.gmra.mrb[0].mxu0 %v1062
      %v2036 = vpop.f32.mrb[0].mxu0
      %v2037 = vadd.f32 %v1732, %v2036
      %v2038 = vpop.f32.mrb[0].mxu0
      %v2039 = vpop.f32.mrb[0].mxu0
      %v2040 = vadd.f32 %v1735, %v2039
      %v2041 = vpop.f32.mrb[0].mxu0
      %2042 = vmatprep.mubr.bf16.mxu0 %v1081
      %2043 = vmatmul.mubr.bf16.gmra.mrb[0].mxu0 %v1063
      %v2044 = vpop.f32.mrb[0].mxu0
      %v2045 = vadd.f32 %v1740, %v2044
      %v2046 = vpop.f32.mrb[0].mxu0
      %v2047 = vpop.f32.mrb[0].mxu0
      %v2048 = vadd.f32 %v1743, %v2047
      %v2049 = vpop.f32.mrb[0].mxu0
      %2050 = vmatprep.mubr.bf16.mxu0 %v1082
      %2051 = vmatmul.mubr.bf16.gmra.mrb[0].mxu0 %v1064
      %v2052 = vpop.f32.mrb[0].mxu0
      %v2053 = vadd.f32 %v1748, %v2052
      %v2054 = vpop.f32.mrb[0].mxu0
      %v2055 = vpop.f32.mrb[0].mxu0
      %v2056 = vadd.f32 %v1751, %v2055
      %v2057 = vpop.f32.mrb[0].mxu0
      %2058 = vmatprep.mubr.bf16.mxu0 %v1083
      %2059 = vmatmul.mubr.bf16.gmra.mrb[0].mxu0 %v1065
      %v2060 = vpop.f32.mrb[0].mxu0
      %v2061 = vadd.f32 %v1756, %v2060
      %v2062 = vpop.f32.mrb[0].mxu0
      %v2063 = vpop.f32.mrb[0].mxu0
      %v2064 = vadd.f32 %v1759, %v2063
      %v2065 = vpop.f32.mrb[0].mxu0
      %2066 = vmatprep.mubr.bf16.mxu0 %v1084
      %2067 = vmatmul.mubr.bf16.gmra.mrb[0].mxu0 %v1066
      %v2068 = vpop.f32.mrb[0].mxu0
      %v2069 = vadd.f32 %v1764, %v2068
      %v2070 = vpop.f32.mrb[0].mxu0
      %v2071 = vpop.f32.mrb[0].mxu0
      %v2072 = vadd.f32 %v1767, %v2071
      %v2073 = vpop.f32.mrb[0].mxu0
      %2074 = vmatprep.mubr.bf16.mxu0 %v1085
      %2075 = vmatmul.mubr.bf16.gmra.mrb[0].mxu0 %v1067
      %v2076 = vpop.f32.mrb[0].mxu0
      %v2077 = vadd.f32 %v1772, %v2076
      %v2078 = vpop.f32.mrb[0].mxu0
      %v2079 = vpop.f32.mrb[0].mxu0
      %v2080 = vadd.f32 %v1775, %v2079
      %v2081 = vpop.f32.mrb[0].mxu0
      %2082 = vdwg.mxu0
      %2083 = vmatprep.subr.bf16.mxu0 0
      %2084 = vmatpush1.bf16.msra.mxu0 %v1890
      %2085 = vmatprep.subr.bf16.mxu0 0
      %2086 = vmatpush1.bf16.msra.mxu0 %v1891
      %2087 = vmatprep.subr.bf16.mxu0 0
      %2088 = vmatpush1.bf16.msra.mxu0 %v1892
      %2089 = vmatprep.subr.bf16.mxu0 0
      %2090 = vmatpush1.bf16.msra.mxu0 %v1893
      %2091 = vmatprep.subr.bf16.mxu0 0
      %2092 = vmatpush1.bf16.msra.mxu0 %v1894
      %2093 = vmatprep.subr.bf16.mxu0 0
      %2094 = vmatpush1.bf16.msra.mxu0 %v1895
      %2095 = vmatprep.subr.bf16.mxu0 0
      %2096 = vmatpush1.bf16.msra.mxu0 %v1896
      %2097 = vmatprep.subr.bf16.mxu0 0
      %2098 = vmatpush1.bf16.msra.mxu0 %v1897
      %2099 = vmatprep.subr.bf16.mxu0 0
      %2100 = vmatpush1.bf16.msra.mxu0 0
      %2101 = vmatprep.subr.bf16.mxu0 0
      %2102 = vmatpush1.bf16.msra.mxu0 0
      %2103 = vmatprep.subr.bf16.mxu0 0
      %2104 = vmatpush1.bf16.msra.mxu0 0
      %2105 = vmatprep.subr.bf16.mxu0 0
      %2106 = vmatpush1.bf16.msra.mxu0 0
      %2107 = vmatprep.subr.bf16.mxu0 0
      %2108 = vmatpush1.bf16.msra.mxu0 0
      %2109 = vmatprep.subr.bf16.mxu0 0
      %2110 = vmatpush1.bf16.msra.mxu0 0
      %2111 = vmatprep.subr.bf16.mxu0 0
      %2112 = vmatpush1.bf16.msra.mxu0 0
      %2113 = vmatprep.subr.bf16.mxu0 0
      %2114 = vmatpush1.bf16.msra.mxu0 0
      %2115 = vmatprep.mubr.bf16.mxu0 0
      %2116 = vmatmul.mubr.bf16.gmra.mrb[0].mxu0 %v1197
      %v2117 = vpop.f32.mrb[0].mxu0
      %v2118 = vadd.f32 %v1957, %v2117
      %v2119 = vpop.f32.mrb[0].mxu0
      %v2120 = vpop.f32.mrb[0].mxu0
      %v2121 = vadd.f32 %v1960, %v2120
      %v2122 = vpop.f32.mrb[0].mxu0
      %2123 = vmatprep.mubr.bf16.mxu0 0
      %2124 = vmatmul.mubr.bf16.gmra.mrb[0].mxu0 %v1198
      %v2125 = vpop.f32.mrb[0].mxu0
      %v2126 = vadd.f32 %v1965, %v2125
      %v2127 = vpop.f32.mrb[0].mxu0
      %v2128 = vpop.f32.mrb[0].mxu0
      %v2129 = vadd.f32 %v1968, %v2128
      %v2130 = vpop.f32.mrb[0].mxu0
      %2131 = vmatprep.mubr.bf16.mxu0 0
      %2132 = vmatmul.mubr.bf16.gmra.mrb[0].mxu0 %v1199
      %v2133 = vpop.f32.mrb[0].mxu0
      %v2134 = vadd.f32 %v1973, %v2133
      %v2135 = vpop.f32.mrb[0].mxu0
      %v2136 = vpop.f32.mrb[0].mxu0
      %v2137 = vadd.f32 %v1976, %v2136
      %v2138 = vpop.f32.mrb[0].mxu0
      %2139 = vmatprep.mubr.bf16.mxu0 0
      %2140 = vmatmul.mubr.bf16.gmra.mrb[0].mxu0 %v1200
      %v2141 = vpop.f32.mrb[0].mxu0
      %v2142 = vadd.f32 %v1981, %v2141
      %v2143 = vpop.f32.mrb[0].mxu0
      %v2144 = vpop.f32.mrb[0].mxu0
      %v2145 = vadd.f32 %v1984, %v2144
      %v2146 = vpop.f32.mrb[0].mxu0
      %2147 = vmatprep.mubr.bf16.mxu0 0
      %2148 = vmatmul.mubr.bf16.gmra.mrb[0].mxu0 %v1201
      %v2149 = vpop.f32.mrb[0].mxu0
      %v2150 = vadd.f32 %v1989, %v2149
      %v2151 = vpop.f32.mrb[0].mxu0
      %v2152 = vpop.f32.mrb[0].mxu0
      %v2153 = vadd.f32 %v1992, %v2152
      %v2154 = vpop.f32.mrb[0].mxu0
      %2155 = vmatprep.mubr.bf16.mxu0 0
      %2156 = vmatmul.mubr.bf16.gmra.mrb[0].mxu0 %v1202
      %v2157 = vpop.f32.mrb[0].mxu0
      %v2158 = vadd.f32 %v1997, %v2157
      %v2159 = vpop.f32.mrb[0].mxu0
      %v2160 = vpop.f32.mrb[0].mxu0
      %v2161 = vadd.f32 %v2000, %v2160
      %v2162 = vpop.f32.mrb[0].mxu0
      %2163 = vmatprep.mubr.bf16.mxu0 0
      %2164 = vmatmul.mubr.bf16.gmra.mrb[0].mxu0 %v1203
      %v2165 = vpop.f32.mrb[0].mxu0
      %v2166 = vadd.f32 %v2005, %v2165
      %v2167 = vpop.f32.mrb[0].mxu0
      %v2168 = vpop.f32.mrb[0].mxu0
      %v2169 = vadd.f32 %v2008, %v2168
      %v2170 = vpop.f32.mrb[0].mxu0
      %2171 = vmatprep.mubr.bf16.mxu0 0
      %2172 = vmatmul.mubr.bf16.gmra.mrb[0].mxu0 %v1204
      %v2173 = vpop.f32.mrb[0].mxu0
      %v2174 = vadd.f32 %v2013, %v2173
      %v2175 = vpop.f32.mrb[0].mxu0
      %v2176 = vpop.f32.mrb[0].mxu0
      %v2177 = vadd.f32 %v2016, %v2176
      %v2178 = vpop.f32.mrb[0].mxu0
      %2179 = vmatprep.mubr.bf16.mxu0 0
      %2180 = vmatmul.mubr.bf16.gmra.mrb[0].mxu0 %v1205
      %v2181 = vpop.f32.mrb[0].mxu0
      %v2182 = vadd.f32 %v2021, %v2181
      %v2183 = vpop.f32.mrb[0].mxu0
      %v2184 = vpop.f32.mrb[0].mxu0
      %v2185 = vadd.f32 %v2024, %v2184
      %v2186 = vpop.f32.mrb[0].mxu0
      %2187 = vmatprep.mubr.bf16.mxu0 0
      %2188 = vmatmul.mubr.bf16.gmra.mrb[0].mxu0 %v1206
      %v2189 = vpop.f32.mrb[0].mxu0
      %v2190 = vadd.f32 %v2029, %v2189
      %v2191 = vpop.f32.mrb[0].mxu0
      %v2192 = vpop.f32.mrb[0].mxu0
      %v2193 = vadd.f32 %v2032, %v2192
      %v2194 = vpop.f32.mrb[0].mxu0
      %2195 = vmatprep.mubr.bf16.mxu0 0
      %2196 = vmatmul.mubr.bf16.gmra.mrb[0].mxu0 %v1207
      %v2197 = vpop.f32.mrb[0].mxu0
      %v2198 = vadd.f32 %v2037, %v2197
      %v2199 = vpop.f32.mrb[0].mxu0
      %v2200 = vpop.f32.mrb[0].mxu0
      %v2201 = vadd.f32 %v2040, %v2200
      %v2202 = vpop.f32.mrb[0].mxu0
      %2203 = vmatprep.mubr.bf16.mxu0 0
      %2204 = vmatmul.mubr.bf16.gmra.mrb[0].mxu0 %v1208
      %v2205 = vpop.f32.mrb[0].mxu0
      %v2206 = vadd.f32 %v2045, %v2205
      %v2207 = vpop.f32.mrb[0].mxu0
      %v2208 = vpop.f32.mrb[0].mxu0
      %v2209 = vadd.f32 %v2048, %v2208
      %v2210 = vpop.f32.mrb[0].mxu0
      %2211 = vmatprep.mubr.bf16.mxu0 0
      %2212 = vmatmul.mubr.bf16.gmra.mrb[0].mxu0 %v1209
      %v2213 = vpop.f32.mrb[0].mxu0
      %v2214 = vadd.f32 %v2053, %v2213
      %v2215 = vpop.f32.mrb[0].mxu0
      %v2216 = vpop.f32.mrb[0].mxu0
      %v2217 = vadd.f32 %v2056, %v2216
      %v2218 = vpop.f32.mrb[0].mxu0
      %2219 = vmatprep.mubr.bf16.mxu0 0
      %2220 = vmatmul.mubr.bf16.gmra.mrb[0].mxu0 %v1210
      %v2221 = vpop.f32.mrb[0].mxu0
      %v2222 = vadd.f32 %v2061, %v2221
      %v2223 = vpop.f32.mrb[0].mxu0
      %v2224 = vpop.f32.mrb[0].mxu0
      %v2225 = vadd.f32 %v2064, %v2224
      %v2226 = vpop.f32.mrb[0].mxu0
      %2227 = vmatprep.mubr.bf16.mxu0 0
      %2228 = vmatmul.mubr.bf16.gmra.mrb[0].mxu0 %v1211
      %v2229 = vpop.f32.mrb[0].mxu0
      %v2230 = vadd.f32 %v2069, %v2229
      %v2231 = vpop.f32.mrb[0].mxu0
      %v2232 = vpop.f32.mrb[0].mxu0
      %v2233 = vadd.f32 %v2072, %v2232
      %v2234 = vpop.f32.mrb[0].mxu0
      %2235 = vmatprep.mubr.bf16.mxu0 0
      %2236 = vmatmul.mubr.bf16.gmra.mrb[0].mxu0 %v1212
      %v2237 = vpop.f32.mrb[0].mxu0
      %v2238 = vadd.f32 %v2077, %v2237
      %v2239 = vpop.f32.mrb[0].mxu0
      %v2240 = vpop.f32.mrb[0].mxu0
      %v2241 = vadd.f32 %v2080, %v2240
      %v2242 = vpop.f32.mrb[0].mxu0
      %2243 = vdwg.mxu0
      %s2244 = scalar_lea.vmem %s5, 384
      %v2245 = vld [vmem:[%s2244] sm:$0xf]
      %v2246 = vld [vmem:[%s2244 + $0x4] sm:$0xf]
      %v2247 = vld [vmem:[%s2244 + $0x8] sm:$0xf]
      %v2248 = vld [vmem:[%s2244 + $0xc] sm:$0xf]
      %v2249 = vld [vmem:[%s2244 + $0x10] sm:$0xf]
      %v2250 = vld [vmem:[%s2244 + $0x14] sm:$0xf]
      %v2251 = vld [vmem:[%s2244 + $0x18] sm:$0xf]
      %v2252 = vld [vmem:[%s2244 + $0x1c] sm:$0xf]
      %v2253 = vld [vmem:[%s2244 + $0x20] sm:$0xf]
      %v2254 = vld [vmem:[%s2244 + $0x24] sm:$0xf]
      %v2255 = vld [vmem:[%s2244 + $0x28] sm:$0xf]
      %v2256 = vld [vmem:[%s2244 + $0x2c] sm:$0xf]
      %v2257 = vld [vmem:[%s2244 + $0x30] sm:$0xf]
      %v2258 = vld [vmem:[%s2244 + $0x34] sm:$0xf]
      %v2259 = vld [vmem:[%s2244 + $0x38] sm:$0xf]
      %v2260 = vld [vmem:[%s2244 + $0x3c] sm:$0xf]
      %v2261 = vld [vmem:[%s2244 + $0x40] sm:$0xf]
      %v2262 = vld [vmem:[%s2244 + $0x44] sm:$0xf]
      %v2263 = vld [vmem:[%s2244 + $0x48] sm:$0xf]
      %v2264 = vld [vmem:[%s2244 + $0x4c] sm:$0xf]
      %v2265 = vld [vmem:[%s2244 + $0x50] sm:$0xf]
      %v2266 = vld [vmem:[%s2244 + $0x54] sm:$0xf]
      %v2267 = vld [vmem:[%s2244 + $0x58] sm:$0xf]
      %v2268 = vld [vmem:[%s2244 + $0x5c] sm:$0xf]
      %v2269 = vld [vmem:[%s2244 + $0x60] sm:$0xf]
      %v2270 = vld [vmem:[%s2244 + $0x64] sm:$0xf]
      %v2271 = vld [vmem:[%s2244 + $0x68] sm:$0xf]
      %v2272 = vld [vmem:[%s2244 + $0x6c] sm:$0xf]
      %v2273 = vld [vmem:[%s2244 + $0x70] sm:$0xf]
      %v2274 = vld [vmem:[%s2244 + $0x74] sm:$0xf]
      %v2275 = vld [vmem:[%s2244 + $0x78] sm:$0xf]
      %v2276 = vld [vmem:[%s2244 + $0x7c] sm:$0xf]
      %v2277 = vld [vmem:[%s2244 + $0x80] sm:$0xf]
      %v2278 = vld [vmem:[%s2244 + $0x84] sm:$0xf]
      %v2279 = vld [vmem:[%s2244 + $0x88] sm:$0xf]
      %v2280 = vld [vmem:[%s2244 + $0x8c] sm:$0xf]
      %v2281 = vld [vmem:[%s2244 + $0x90] sm:$0xf]
      %v2282 = vld [vmem:[%s2244 + $0x94] sm:$0xf]
      %v2283 = vld [vmem:[%s2244 + $0x98] sm:$0xf]
      %v2284 = vld [vmem:[%s2244 + $0x9c] sm:$0xf]
      %v2285 = vld [vmem:[%s2244 + $0xa0] sm:$0xf]
      %v2286 = vld [vmem:[%s2244 + $0xa4] sm:$0xf]
      %v2287 = vld [vmem:[%s2244 + $0xa8] sm:$0xf]
      %v2288 = vld [vmem:[%s2244 + $0xac] sm:$0xf]
      %v2289 = vld [vmem:[%s2244 + $0xb0] sm:$0xf]
      %v2290 = vld [vmem:[%s2244 + $0xb4] sm:$0xf]
      %v2291 = vld [vmem:[%s2244 + $0xb8] sm:$0xf]
      %v2292 = vld [vmem:[%s2244 + $0xbc] sm:$0xf]
      %v2341 = vunpack.c.l.b16 %v2245
      %v2342 = vunpack.c.l.b16 %v2246
      %v2343 = vunpack.c.l.b16 %v2247
      %v2344 = vunpack.c.l.b16 %v2248
      %v2345 = vunpack.c.l.b16 %v2249
      %v2346 = vunpack.c.l.b16 %v2250
      %v2347 = vunpack.c.l.b16 %v2251
      %v2348 = vunpack.c.l.b16 %v2252
      %v2349 = vunpack.c.l.b16 %v2253
      %v2350 = vunpack.c.l.b16 %v2254
      %v2351 = vunpack.c.l.b16 %v2255
      %v2352 = vunpack.c.l.b16 %v2256
      %v2353 = vunpack.c.l.b16 %v2257
      %v2354 = vunpack.c.l.b16 %v2258
      %v2355 = vunpack.c.l.b16 %v2259
      %v2356 = vunpack.c.l.b16 %v2260
      %v2357 = vunpack.c.l.b16 %v2261
      %v2358 = vunpack.c.l.b16 %v2262
      %v2359 = vunpack.c.l.b16 %v2263
      %v2360 = vunpack.c.l.b16 %v2264
      %v2361 = vunpack.c.l.b16 %v2265
      %v2362 = vunpack.c.l.b16 %v2266
      %v2363 = vunpack.c.l.b16 %v2267
      %v2364 = vunpack.c.l.b16 %v2268
      %v2365 = vunpack.c.l.b16 %v2269
      %v2366 = vunpack.c.l.b16 %v2270
      %v2367 = vunpack.c.l.b16 %v2271
      %v2368 = vunpack.c.l.b16 %v2272
      %v2369 = vunpack.c.l.b16 %v2273
      %v2370 = vunpack.c.l.b16 %v2274
      %v2371 = vunpack.c.l.b16 %v2275
      %v2372 = vunpack.c.l.b16 %v2276
      %v2373 = vunpack.c.l.b16 %v2277
      %v2374 = vunpack.c.l.b16 %v2278
      %v2375 = vunpack.c.l.b16 %v2279
      %v2376 = vunpack.c.l.b16 %v2280
      %v2377 = vunpack.c.l.b16 %v2281
      %v2378 = vunpack.c.l.b16 %v2282
      %v2379 = vunpack.c.l.b16 %v2283
      %v2380 = vunpack.c.l.b16 %v2284
      %v2381 = vunpack.c.l.b16 %v2285
      %v2382 = vunpack.c.l.b16 %v2286
      %v2383 = vunpack.c.l.b16 %v2287
      %v2384 = vunpack.c.l.b16 %v2288
      %v2385 = vunpack.c.l.b16 %v2289
      %v2386 = vunpack.c.l.b16 %v2290
      %v2387 = vunpack.c.l.b16 %v2291
      %v2388 = vunpack.c.l.b16 %v2292
      %v2389 = vpack.c.b16 %v2342, %v2341
      %v2390 = vpack.c.b16 %v2344, %v2343
      %v2391 = vpack.c.b16 %v2346, %v2345
      %v2392 = vpack.c.b16 %v2348, %v2347
      %v2393 = vpack.c.b16 %v2350, %v2349
      %v2394 = vpack.c.b16 %v2352, %v2351
      %v2395 = vpack.c.b16 %v2354, %v2353
      %v2396 = vpack.c.b16 %v2356, %v2355
      %v2397 = vpack.c.b16 %v2358, %v2357
      %v2398 = vpack.c.b16 %v2360, %v2359
      %v2399 = vpack.c.b16 %v2362, %v2361
      %v2400 = vpack.c.b16 %v2364, %v2363
      %v2401 = vpack.c.b16 %v2366, %v2365
      %v2402 = vpack.c.b16 %v2368, %v2367
      %v2403 = vpack.c.b16 %v2370, %v2369
      %v2404 = vpack.c.b16 %v2372, %v2371
      %v2405 = vpack.c.b16 %v2374, %v2373
      %v2406 = vpack.c.b16 %v2376, %v2375
      %v2407 = vpack.c.b16 %v2378, %v2377
      %v2408 = vpack.c.b16 %v2380, %v2379
      %v2409 = vpack.c.b16 %v2382, %v2381
      %v2410 = vpack.c.b16 %v2384, %v2383
      %v2411 = vpack.c.b16 %v2386, %v2385
      %v2412 = vpack.c.b16 %v2388, %v2387
      %2437 = vmatprep.subr.bf16.mxu0 0
      %2438 = vmatpush1.bf16.msra.mxu0 %v2389
      %2439 = vmatprep.subr.bf16.mxu0 0
      %2440 = vmatpush1.bf16.msra.mxu0 %v2390
      %2441 = vmatprep.subr.bf16.mxu0 0
      %2442 = vmatpush1.bf16.msra.mxu0 %v2391
      %2443 = vmatprep.subr.bf16.mxu0 0
      %2444 = vmatpush1.bf16.msra.mxu0 %v2392
      %2445 = vmatprep.subr.bf16.mxu0 0
      %2446 = vmatpush1.bf16.msra.mxu0 %v2393
      %2447 = vmatprep.subr.bf16.mxu0 0
      %2448 = vmatpush1.bf16.msra.mxu0 %v2394
      %2449 = vmatprep.subr.bf16.mxu0 0
      %2450 = vmatpush1.bf16.msra.mxu0 %v2395
      %2451 = vmatprep.subr.bf16.mxu0 0
      %2452 = vmatpush1.bf16.msra.mxu0 %v2396
      %2453 = vmatprep.subr.bf16.mxu0 0
      %2454 = vmatpush1.bf16.msra.mxu0 %v2397
      %2455 = vmatprep.subr.bf16.mxu0 0
      %2456 = vmatpush1.bf16.msra.mxu0 %v2398
      %2457 = vmatprep.subr.bf16.mxu0 0
      %2458 = vmatpush1.bf16.msra.mxu0 %v2399
      %2459 = vmatprep.subr.bf16.mxu0 0
      %2460 = vmatpush1.bf16.msra.mxu0 %v2400
      %2461 = vmatprep.subr.bf16.mxu0 0
      %2462 = vmatpush1.bf16.msra.mxu0 %v2401
      %2463 = vmatprep.subr.bf16.mxu0 0
      %2464 = vmatpush1.bf16.msra.mxu0 %v2402
      %2465 = vmatprep.subr.bf16.mxu0 0
      %2466 = vmatpush1.bf16.msra.mxu0 %v2403
      %2467 = vmatprep.subr.bf16.mxu0 0
      %2468 = vmatpush1.bf16.msra.mxu0 %v2404
      %2469 = vmatprep.mubr.bf16.mxu0 %v1072
      %2470 = vmatmul.mubr.bf16.gmra.mrb[0].mxu0 %v1054
      %v2471 = vpop.f32.mrb[0].mxu0
      %v2472 = vadd.f32 0.0, %v2471
      %v2473 = vpop.f32.mrb[0].mxu0
      %v2474 = vpop.f32.mrb[0].mxu0
      %v2475 = vadd.f32 0.0, %v2474
      %v2476 = vpop.f32.mrb[0].mxu0
      %2477 = vmatprep.mubr.bf16.mxu0 %v1073
      %2478 = vmatmul.mubr.bf16.gmra.mrb[0].mxu0 %v1055
      %v2479 = vpop.f32.mrb[0].mxu0
      %v2480 = vadd.f32 0.0, %v2479
      %v2481 = vpop.f32.mrb[0].mxu0
      %v2482 = vpop.f32.mrb[0].mxu0
      %v2483 = vadd.f32 0.0, %v2482
      %v2484 = vpop.f32.mrb[0].mxu0
      %2485 = vmatprep.mubr.bf16.mxu0 %v1074
      %2486 = vmatmul.mubr.bf16.gmra.mrb[0].mxu0 %v1056
      %v2487 = vpop.f32.mrb[0].mxu0
      %v2488 = vadd.f32 0.0, %v2487
      %v2489 = vpop.f32.mrb[0].mxu0
      %v2490 = vpop.f32.mrb[0].mxu0
      %v2491 = vadd.f32 0.0, %v2490
      %v2492 = vpop.f32.mrb[0].mxu0
      %2493 = vmatprep.mubr.bf16.mxu0 %v1075
      %2494 = vmatmul.mubr.bf16.gmra.mrb[0].mxu0 %v1057
      %v2495 = vpop.f32.mrb[0].mxu0
      %v2496 = vadd.f32 0.0, %v2495
      %v2497 = vpop.f32.mrb[0].mxu0
      %v2498 = vpop.f32.mrb[0].mxu0
      %v2499 = vadd.f32 0.0, %v2498
      %v2500 = vpop.f32.mrb[0].mxu0
      %2501 = vmatprep.mubr.bf16.mxu0 %v1076
      %2502 = vmatmul.mubr.bf16.gmra.mrb[0].mxu0 %v1058
      %v2503 = vpop.f32.mrb[0].mxu0
      %v2504 = vadd.f32 0.0, %v2503
      %v2505 = vpop.f32.mrb[0].mxu0
      %v2506 = vpop.f32.mrb[0].mxu0
      %v2507 = vadd.f32 0.0, %v2506
      %v2508 = vpop.f32.mrb[0].mxu0
      %2509 = vmatprep.mubr.bf16.mxu0 %v1077
      %2510 = vmatmul.mubr.bf16.gmra.mrb[0].mxu0 %v1059
      %v2511 = vpop.f32.mrb[0].mxu0
      %v2512 = vadd.f32 0.0, %v2511
      %v2513 = vpop.f32.mrb[0].mxu0
      %v2514 = vpop.f32.mrb[0].mxu0
      %v2515 = vadd.f32 0.0, %v2514
      %v2516 = vpop.f32.mrb[0].mxu0
      %2517 = vmatprep.mubr.bf16.mxu0 %v1078
      %2518 = vmatmul.mubr.bf16.gmra.mrb[0].mxu0 %v1060
      %v2519 = vpop.f32.mrb[0].mxu0
      %v2520 = vadd.f32 0.0, %v2519
      %v2521 = vpop.f32.mrb[0].mxu0
      %v2522 = vpop.f32.mrb[0].mxu0
      %v2523 = vadd.f32 0.0, %v2522
      %v2524 = vpop.f32.mrb[0].mxu0
      %2525 = vmatprep.mubr.bf16.mxu0 %v1079
      %2526 = vmatmul.mubr.bf16.gmra.mrb[0].mxu0 %v1061
      %v2527 = vpop.f32.mrb[0].mxu0
      %v2528 = vadd.f32 0.0, %v2527
      %v2529 = vpop.f32.mrb[0].mxu0
      %v2530 = vpop.f32.mrb[0].mxu0
      %v2531 = vadd.f32 0.0, %v2530
      %v2532 = vpop.f32.mrb[0].mxu0
      %2533 = vmatprep.mubr.bf16.mxu0 %v1080
      %2534 = vmatmul.mubr.bf16.gmra.mrb[0].mxu0 %v1062
      %v2535 = vpop.f32.mrb[0].mxu0
      %v2536 = vadd.f32 0.0, %v2535
      %v2537 = vpop.f32.mrb[0].mxu0
      %v2538 = vpop.f32.mrb[0].mxu0
      %v2539 = vadd.f32 0.0, %v2538
      %v2540 = vpop.f32.mrb[0].mxu0
      %2541 = vmatprep.mubr.bf16.mxu0 %v1081
      %2542 = vmatmul.mubr.bf16.gmra.mrb[0].mxu0 %v1063
      %v2543 = vpop.f32.mrb[0].mxu0
      %v2544 = vadd.f32 0.0, %v2543
      %v2545 = vpop.f32.mrb[0].mxu0
      %v2546 = vpop.f32.mrb[0].mxu0
      %v2547 = vadd.f32 0.0, %v2546
      %v2548 = vpop.f32.mrb[0].mxu0
      %2549 = vmatprep.mubr.bf16.mxu0 %v1082
      %2550 = vmatmul.mubr.bf16.gmra.mrb[0].mxu0 %v1064
      %v2551 = vpop.f32.mrb[0].mxu0
      %v2552 = vadd.f32 0.0, %v2551
      %v2553 = vpop.f32.mrb[0].mxu0
      %v2554 = vpop.f32.mrb[0].mxu0
      %v2555 = vadd.f32 0.0, %v2554
      %v2556 = vpop.f32.mrb[0].mxu0
      %2557 = vmatprep.mubr.bf16.mxu0 %v1083
      %2558 = vmatmul.mubr.bf16.gmra.mrb[0].mxu0 %v1065
      %v2559 = vpop.f32.mrb[0].mxu0
      %v2560 = vadd.f32 0.0, %v2559
      %v2561 = vpop.f32.mrb[0].mxu0
      %v2562 = vpop.f32.mrb[0].mxu0
      %v2563 = vadd.f32 0.0, %v2562
      %v2564 = vpop.f32.mrb[0].mxu0
      %2565 = vmatprep.mubr.bf16.mxu0 %v1084
      %2566 = vmatmul.mubr.bf16.gmra.mrb[0].mxu0 %v1066
      %v2567 = vpop.f32.mrb[0].mxu0
      %v2568 = vadd.f32 0.0, %v2567
      %v2569 = vpop.f32.mrb[0].mxu0
      %v2570 = vpop.f32.mrb[0].mxu0
      %v2571 = vadd.f32 0.0, %v2570
      %v2572 = vpop.f32.mrb[0].mxu0
      %2573 = vmatprep.mubr.bf16.mxu0 %v1085
      %2574 = vmatmul.mubr.bf16.gmra.mrb[0].mxu0 %v1067
      %v2575 = vpop.f32.mrb[0].mxu0
      %v2576 = vadd.f32 0.0, %v2575
      %v2577 = vpop.f32.mrb[0].mxu0
      %v2578 = vpop.f32.mrb[0].mxu0
      %v2579 = vadd.f32 0.0, %v2578
      %v2580 = vpop.f32.mrb[0].mxu0
      %2581 = vmatprep.mubr.bf16.mxu0 %v1086
      %2582 = vmatmul.mubr.bf16.gmra.mrb[0].mxu0 %v1068
      %v2583 = vpop.f32.mrb[0].mxu0
      %v2584 = vadd.f32 0.0, %v2583
      %v2585 = vpop.f32.mrb[0].mxu0
      %v2586 = vpop.f32.mrb[0].mxu0
      %v2587 = vadd.f32 0.0, %v2586
      %v2588 = vpop.f32.mrb[0].mxu0
      %2589 = vmatprep.mubr.bf16.mxu0 %v1087
      %2590 = vmatmul.mubr.bf16.gmra.mrb[0].mxu0 %v1069
      %v2591 = vpop.f32.mrb[0].mxu0
      %v2592 = vadd.f32 0.0, %v2591
      %v2593 = vpop.f32.mrb[0].mxu0
      %v2594 = vpop.f32.mrb[0].mxu0
      %v2595 = vadd.f32 0.0, %v2594
      %v2596 = vpop.f32.mrb[0].mxu0
      %2597 = vdwg.mxu0
      %2598 = vmatprep.subr.bf16.mxu0 0
      %2599 = vmatpush1.bf16.msra.mxu0 %v2405
      %2600 = vmatprep.subr.bf16.mxu0 0
      %2601 = vmatpush1.bf16.msra.mxu0 %v2406
      %2602 = vmatprep.subr.bf16.mxu0 0
      %2603 = vmatpush1.bf16.msra.mxu0 %v2407
      %2604 = vmatprep.subr.bf16.mxu0 0
      %2605 = vmatpush1.bf16.msra.mxu0 %v2408
      %2606 = vmatprep.subr.bf16.mxu0 0
      %2607 = vmatpush1.bf16.msra.mxu0 %v2409
      %2608 = vmatprep.subr.bf16.mxu0 0
      %2609 = vmatpush1.bf16.msra.mxu0 %v2410
      %2610 = vmatprep.subr.bf16.mxu0 0
      %2611 = vmatpush1.bf16.msra.mxu0 %v2411
      %2612 = vmatprep.subr.bf16.mxu0 0
      %2613 = vmatpush1.bf16.msra.mxu0 %v2412
      %2614 = vmatprep.subr.bf16.mxu0 0
      %2615 = vmatpush1.bf16.msra.mxu0 0
      %2616 = vmatprep.subr.bf16.mxu0 0
      %2617 = vmatpush1.bf16.msra.mxu0 0
      %2618 = vmatprep.subr.bf16.mxu0 0
      %2619 = vmatpush1.bf16.msra.mxu0 0
      %2620 = vmatprep.subr.bf16.mxu0 0
      %2621 = vmatpush1.bf16.msra.mxu0 0
      %2622 = vmatprep.subr.bf16.mxu0 0
      %2623 = vmatpush1.bf16.msra.mxu0 0
      %2624 = vmatprep.subr.bf16.mxu0 0
      %2625 = vmatpush1.bf16.msra.mxu0 0
      %2626 = vmatprep.subr.bf16.mxu0 0
      %2627 = vmatpush1.bf16.msra.mxu0 0
      %2628 = vmatprep.subr.bf16.mxu0 0
      %2629 = vmatpush1.bf16.msra.mxu0 0
      %2630 = vmatprep.mubr.bf16.mxu0 0
      %2631 = vmatmul.mubr.bf16.gmra.mrb[0].mxu0 %v1199
      %v2632 = vpop.f32.mrb[0].mxu0
      %v2633 = vadd.f32 %v2472, %v2632
      %v2634 = vpop.f32.mrb[0].mxu0
      %v2635 = vpop.f32.mrb[0].mxu0
      %v2636 = vadd.f32 %v2475, %v2635
      %v2637 = vpop.f32.mrb[0].mxu0
      %2638 = vmatprep.mubr.bf16.mxu0 0
      %2639 = vmatmul.mubr.bf16.gmra.mrb[0].mxu0 %v1200
      %v2640 = vpop.f32.mrb[0].mxu0
      %v2641 = vadd.f32 %v2480, %v2640
      %v2642 = vpop.f32.mrb[0].mxu0
      %v2643 = vpop.f32.mrb[0].mxu0
      %v2644 = vadd.f32 %v2483, %v2643
      %v2645 = vpop.f32.mrb[0].mxu0
      %2646 = vmatprep.mubr.bf16.mxu0 0
      %2647 = vmatmul.mubr.bf16.gmra.mrb[0].mxu0 %v1201
      %v2648 = vpop.f32.mrb[0].mxu0
      %v2649 = vadd.f32 %v2488, %v2648
      %v2650 = vpop.f32.mrb[0].mxu0
      %v2651 = vpop.f32.mrb[0].mxu0
      %v2652 = vadd.f32 %v2491, %v2651
      %v2653 = vpop.f32.mrb[0].mxu0
      %2654 = vmatprep.mubr.bf16.mxu0 0
      %2655 = vmatmul.mubr.bf16.gmra.mrb[0].mxu0 %v1202
      %v2656 = vpop.f32.mrb[0].mxu0
      %v2657 = vadd.f32 %v2496, %v2656
      %v2658 = vpop.f32.mrb[0].mxu0
      %v2659 = vpop.f32.mrb[0].mxu0
      %v2660 = vadd.f32 %v2499, %v2659
      %v2661 = vpop.f32.mrb[0].mxu0
      %2662 = vmatprep.mubr.bf16.mxu0 0
      %2663 = vmatmul.mubr.bf16.gmra.mrb[0].mxu0 %v1203
      %v2664 = vpop.f32.mrb[0].mxu0
      %v2665 = vadd.f32 %v2504, %v2664
      %v2666 = vpop.f32.mrb[0].mxu0
      %v2667 = vpop.f32.mrb[0].mxu0
      %v2668 = vadd.f32 %v2507, %v2667
      %v2669 = vpop.f32.mrb[0].mxu0
      %2670 = vmatprep.mubr.bf16.mxu0 0
      %2671 = vmatmul.mubr.bf16.gmra.mrb[0].mxu0 %v1204
      %v2672 = vpop.f32.mrb[0].mxu0
      %v2673 = vadd.f32 %v2512, %v2672
      %v2674 = vpop.f32.mrb[0].mxu0
      %v2675 = vpop.f32.mrb[0].mxu0
      %v2676 = vadd.f32 %v2515, %v2675
      %v2677 = vpop.f32.mrb[0].mxu0
      %2678 = vmatprep.mubr.bf16.mxu0 0
      %2679 = vmatmul.mubr.bf16.gmra.mrb[0].mxu0 %v1205
      %v2680 = vpop.f32.mrb[0].mxu0
      %v2681 = vadd.f32 %v2520, %v2680
      %v2682 = vpop.f32.mrb[0].mxu0
      %v2683 = vpop.f32.mrb[0].mxu0
      %v2684 = vadd.f32 %v2523, %v2683
      %v2685 = vpop.f32.mrb[0].mxu0
      %2686 = vmatprep.mubr.bf16.mxu0 0
      %2687 = vmatmul.mubr.bf16.gmra.mrb[0].mxu0 %v1206
      %v2688 = vpop.f32.mrb[0].mxu0
      %v2689 = vadd.f32 %v2528, %v2688
      %v2690 = vpop.f32.mrb[0].mxu0
      %v2691 = vpop.f32.mrb[0].mxu0
      %v2692 = vadd.f32 %v2531, %v2691
      %v2693 = vpop.f32.mrb[0].mxu0
      %2694 = vmatprep.mubr.bf16.mxu0 0
      %2695 = vmatmul.mubr.bf16.gmra.mrb[0].mxu0 %v1207
      %v2696 = vpop.f32.mrb[0].mxu0
      %v2697 = vadd.f32 %v2536, %v2696
      %v2698 = vpop.f32.mrb[0].mxu0
      %v2699 = vpop.f32.mrb[0].mxu0
      %v2700 = vadd.f32 %v2539, %v2699
      %v2701 = vpop.f32.mrb[0].mxu0
      %2702 = vmatprep.mubr.bf16.mxu0 0
      %2703 = vmatmul.mubr.bf16.gmra.mrb[0].mxu0 %v1208
      %v2704 = vpop.f32.mrb[0].mxu0
      %v2705 = vadd.f32 %v2544, %v2704
      %v2706 = vpop.f32.mrb[0].mxu0
      %v2707 = vpop.f32.mrb[0].mxu0
      %v2708 = vadd.f32 %v2547, %v2707
      %v2709 = vpop.f32.mrb[0].mxu0
      %2710 = vmatprep.mubr.bf16.mxu0 0
      %2711 = vmatmul.mubr.bf16.gmra.mrb[0].mxu0 %v1209
      %v2712 = vpop.f32.mrb[0].mxu0
      %v2713 = vadd.f32 %v2552, %v2712
      %v2714 = vpop.f32.mrb[0].mxu0
      %v2715 = vpop.f32.mrb[0].mxu0
      %v2716 = vadd.f32 %v2555, %v2715
      %v2717 = vpop.f32.mrb[0].mxu0
      %2718 = vmatprep.mubr.bf16.mxu0 0
      %2719 = vmatmul.mubr.bf16.gmra.mrb[0].mxu0 %v1210
      %v2720 = vpop.f32.mrb[0].mxu0
      %v2721 = vadd.f32 %v2560, %v2720
      %v2722 = vpop.f32.mrb[0].mxu0
      %v2723 = vpop.f32.mrb[0].mxu0
      %v2724 = vadd.f32 %v2563, %v2723
      %v2725 = vpop.f32.mrb[0].mxu0
      %2726 = vmatprep.mubr.bf16.mxu0 0
      %2727 = vmatmul.mubr.bf16.gmra.mrb[0].mxu0 %v1211
      %v2728 = vpop.f32.mrb[0].mxu0
      %v2729 = vadd.f32 %v2568, %v2728
      %v2730 = vpop.f32.mrb[0].mxu0
      %v2731 = vpop.f32.mrb[0].mxu0
      %v2732 = vadd.f32 %v2571, %v2731
      %v2733 = vpop.f32.mrb[0].mxu0
      %2734 = vmatprep.mubr.bf16.mxu0 0
      %2735 = vmatmul.mubr.bf16.gmra.mrb[0].mxu0 %v1212
      %v2736 = vpop.f32.mrb[0].mxu0
      %v2737 = vadd.f32 %v2576, %v2736
      %v2738 = vpop.f32.mrb[0].mxu0
      %v2739 = vpop.f32.mrb[0].mxu0
      %v2740 = vadd.f32 %v2579, %v2739
      %v2741 = vpop.f32.mrb[0].mxu0
      %2742 = vmatprep.mubr.bf16.mxu0 0
      %2743 = vmatmul.mubr.bf16.gmra.mrb[0].mxu0 %v1213
      %v2744 = vpop.f32.mrb[0].mxu0
      %v2745 = vadd.f32 %v2584, %v2744
      %v2746 = vpop.f32.mrb[0].mxu0
      %v2747 = vpop.f32.mrb[0].mxu0
      %v2748 = vadd.f32 %v2587, %v2747
      %v2749 = vpop.f32.mrb[0].mxu0
      %2750 = vmatprep.mubr.bf16.mxu0 0
      %2751 = vmatmul.mubr.bf16.gmra.mrb[0].mxu0 %v1214
      %v2752 = vpop.f32.mrb[0].mxu0
      %v2753 = vadd.f32 %v2592, %v2752
      %v2754 = vpop.f32.mrb[0].mxu0
      %v2755 = vpop.f32.mrb[0].mxu0
      %v2756 = vadd.f32 %v2595, %v2755
      %v2757 = vpop.f32.mrb[0].mxu0
      %2758 = vdwg.mxu0
      %v2759 = vadd.f32 %v2118, %v2633
      %v2760 = vadd.f32 %v2121, %v2636
      %v2761 = vadd.f32 %v2126, %v2641
      %v2762 = vadd.f32 %v2129, %v2644
      %v2763 = vadd.f32 %v2134, %v2649
      %v2764 = vadd.f32 %v2137, %v2652
      %v2765 = vadd.f32 %v2142, %v2657
      %v2766 = vadd.f32 %v2145, %v2660
      %v2767 = vadd.f32 %v2150, %v2665
      %v2768 = vadd.f32 %v2153, %v2668
      %v2769 = vadd.f32 %v2158, %v2673
      %v2770 = vadd.f32 %v2161, %v2676
      %v2771 = vadd.f32 %v2166, %v2681
      %v2772 = vadd.f32 %v2169, %v2684
      %v2773 = vadd.f32 %v2174, %v2689
      %v2774 = vadd.f32 %v2177, %v2692
      %v2775 = vadd.f32 %v2182, %v2697
      %v2776 = vadd.f32 %v2185, %v2700
      %v2777 = vadd.f32 %v2190, %v2705
      %v2778 = vadd.f32 %v2193, %v2708
      %v2779 = vadd.f32 %v2198, %v2713
      %v2780 = vadd.f32 %v2201, %v2716
      %v2781 = vadd.f32 %v2206, %v2721
      %v2782 = vadd.f32 %v2209, %v2724
      %v2783 = vadd.f32 %v2214, %v2729
      %v2784 = vadd.f32 %v2217, %v2732
      %v2785 = vadd.f32 %v2222, %v2737
      %v2786 = vadd.f32 %v2225, %v2740
      %v2787 = vadd.f32 %v2230, %v2745
      %v2788 = vadd.f32 %v2233, %v2748
      %v2789 = vadd.f32 %v2238, %v2753
      %v2790 = vadd.f32 %v2241, %v2756
      %v2791 = vld [vmem:[%s6] sm:$0x1]
      %v2793 = vlaneseq
      %v2794 = vshrl.u32 %v2793, 7
      %v2795 = vsub.s32 0, %v2794
      %v2796 = vrot.slane %v2791, %v2795
      %v2798 = vmul.f32 %v2759, %v2796
      %v2799 = vmul.f32 %v2760, %v2796
      %v2800 = vmul.f32 %v2761, %v2796
      %v2801 = vmul.f32 %v2762, %v2796
      %v2802 = vmul.f32 %v2763, %v2796
      %v2803 = vmul.f32 %v2764, %v2796
      %v2804 = vmul.f32 %v2765, %v2796
      %v2805 = vmul.f32 %v2766, %v2796
      %v2806 = vmul.f32 %v2767, %v2796
      %v2807 = vmul.f32 %v2768, %v2796
      %v2808 = vmul.f32 %v2769, %v2796
      %v2809 = vmul.f32 %v2770, %v2796
      %v2810 = vmul.f32 %v2771, %v2796
      %v2811 = vmul.f32 %v2772, %v2796
      %v2812 = vmul.f32 %v2773, %v2796
      %v2813 = vmul.f32 %v2774, %v2796
      %v2814 = vmul.f32 %v2775, %v2796
      %v2815 = vmul.f32 %v2776, %v2796
      %v2816 = vmul.f32 %v2777, %v2796
      %v2817 = vmul.f32 %v2778, %v2796
      %v2818 = vmul.f32 %v2779, %v2796
      %v2819 = vmul.f32 %v2780, %v2796
      %v2820 = vmul.f32 %v2781, %v2796
      %v2821 = vmul.f32 %v2782, %v2796
      %v2822 = vmul.f32 %v2783, %v2796
      %v2823 = vmul.f32 %v2784, %v2796
      %v2824 = vmul.f32 %v2785, %v2796
      %v2825 = vmul.f32 %v2786, %v2796
      %v2826 = vmul.f32 %v2787, %v2796
      %v2827 = vmul.f32 %v2788, %v2796
      %v2828 = vmul.f32 %v2789, %v2796
      %v2829 = vmul.f32 %v2790, %v2796
      %v2830 = vld [vmem:[%s7] sm:$0x1]
      %v2832 = vlaneseq
      %v2833 = vshrl.u32 %v2832, 7
      %v2834 = vsub.s32 0, %v2833
      %v2835 = vrot.slane %v2830, %v2834
      %v2837 = vadd.f32 %v2798, %v2835
      %v2838 = vadd.f32 %v2799, %v2835
      %v2839 = vadd.f32 %v2800, %v2835
      %v2840 = vadd.f32 %v2801, %v2835
      %v2841 = vadd.f32 %v2802, %v2835
      %v2842 = vadd.f32 %v2803, %v2835
      %v2843 = vadd.f32 %v2804, %v2835
      %v2844 = vadd.f32 %v2805, %v2835
      %v2845 = vadd.f32 %v2806, %v2835
      %v2846 = vadd.f32 %v2807, %v2835
      %v2847 = vadd.f32 %v2808, %v2835
      %v2848 = vadd.f32 %v2809, %v2835
      %v2849 = vadd.f32 %v2810, %v2835
      %v2850 = vadd.f32 %v2811, %v2835
      %v2851 = vadd.f32 %v2812, %v2835
      %v2852 = vadd.f32 %v2813, %v2835
      %v2853 = vadd.f32 %v2814, %v2835
      %v2854 = vadd.f32 %v2815, %v2835
      %v2855 = vadd.f32 %v2816, %v2835
      %v2856 = vadd.f32 %v2817, %v2835
      %v2857 = vadd.f32 %v2818, %v2835
      %v2858 = vadd.f32 %v2819, %v2835
      %v2859 = vadd.f32 %v2820, %v2835
      %v2860 = vadd.f32 %v2821, %v2835
      %v2861 = vadd.f32 %v2822, %v2835
      %v2862 = vadd.f32 %v2823, %v2835
      %v2863 = vadd.f32 %v2824, %v2835
      %v2864 = vadd.f32 %v2825, %v2835
      %v2865 = vadd.f32 %v2826, %v2835
      %v2866 = vadd.f32 %v2827, %v2835
      %v2867 = vadd.f32 %v2828, %v2835
      %v2868 = vadd.f32 %v2829, %v2835
      %v2869 = vmax.f32 %v2837, 0.0
      %v2870 = vmax.f32 %v2838, 0.0
      %v2871 = vmax.f32 %v2839, 0.0
      %v2872 = vmax.f32 %v2840, 0.0
      %v2873 = vmax.f32 %v2841, 0.0
      %v2874 = vmax.f32 %v2842, 0.0
      %v2875 = vmax.f32 %v2843, 0.0
      %v2876 = vmax.f32 %v2844, 0.0
      %v2877 = vmax.f32 %v2845, 0.0
      %v2878 = vmax.f32 %v2846, 0.0
      %v2879 = vmax.f32 %v2847, 0.0
      %v2880 = vmax.f32 %v2848, 0.0
      %v2881 = vmax.f32 %v2849, 0.0
      %v2882 = vmax.f32 %v2850, 0.0
      %v2883 = vmax.f32 %v2851, 0.0
      %v2884 = vmax.f32 %v2852, 0.0
      %v2885 = vmax.f32 %v2853, 0.0
      %v2886 = vmax.f32 %v2854, 0.0
      %v2887 = vmax.f32 %v2855, 0.0
      %v2888 = vmax.f32 %v2856, 0.0
      %v2889 = vmax.f32 %v2857, 0.0
      %v2890 = vmax.f32 %v2858, 0.0
      %v2891 = vmax.f32 %v2859, 0.0
      %v2892 = vmax.f32 %v2860, 0.0
      %v2893 = vmax.f32 %v2861, 0.0
      %v2894 = vmax.f32 %v2862, 0.0
      %v2895 = vmax.f32 %v2863, 0.0
      %v2896 = vmax.f32 %v2864, 0.0
      %v2897 = vmax.f32 %v2865, 0.0
      %v2898 = vmax.f32 %v2866, 0.0
      %v2899 = vmax.f32 %v2867, 0.0
      %v2900 = vmax.f32 %v2868, 0.0
      %v2901 = vadd.f32 %v2869, %v2871
      %v2902 = vadd.f32 %v2870, %v2872
      %v2903 = vadd.f32 %v2873, %v2875
      %v2904 = vadd.f32 %v2874, %v2876
      %v2905 = vadd.f32 %v2877, %v2879
      %v2906 = vadd.f32 %v2878, %v2880
      %v2907 = vadd.f32 %v2881, %v2883
      %v2908 = vadd.f32 %v2882, %v2884
      %v2909 = vadd.f32 %v2885, %v2887
      %v2910 = vadd.f32 %v2886, %v2888
      %v2911 = vadd.f32 %v2889, %v2891
      %v2912 = vadd.f32 %v2890, %v2892
      %v2913 = vadd.f32 %v2893, %v2895
      %v2914 = vadd.f32 %v2894, %v2896
      %v2915 = vadd.f32 %v2897, %v2899
      %v2916 = vadd.f32 %v2898, %v2900
      %2917 = vst [vmem:[#allocation2] sm:$0xff] %v2901
      %2918 = vst [vmem:[#allocation2 + $0x8] sm:$0xff] %v2902
      %2919 = vst [vmem:[#allocation2 + $0x10] sm:$0xff] %v2903
      %2920 = vst [vmem:[#allocation2 + $0x18] sm:$0xff] %v2904
      %2921 = vst [vmem:[#allocation2 + $0x20] sm:$0xff] %v2905
      %2922 = vst [vmem:[#allocation2 + $0x28] sm:$0xff] %v2906
      %2923 = vst [vmem:[#allocation2 + $0x30] sm:$0xff] %v2907
      %2924 = vst [vmem:[#allocation2 + $0x38] sm:$0xff] %v2908
      %2925 = vst [vmem:[#allocation2 + $0x40] sm:$0xff] %v2909
      %2926 = vst [vmem:[#allocation2 + $0x48] sm:$0xff] %v2910
      %2927 = vst [vmem:[#allocation2 + $0x50] sm:$0xff] %v2911
      %2928 = vst [vmem:[#allocation2 + $0x58] sm:$0xff] %v2912
      %2929 = vst [vmem:[#allocation2 + $0x60] sm:$0xff] %v2913
      %2930 = vst [vmem:[#allocation2 + $0x68] sm:$0xff] %v2914
      %2931 = vst [vmem:[#allocation2 + $0x70] sm:$0xff] %v2915
      %2932 = vst [vmem:[#allocation2 + $0x78] sm:$0xff] %v2916
      %v2933 = vld [vmem:[#allocation2] ss:$2 sm:$0xff]
      %s2934 = scalar_lea.vmem [#allocation2], 16
      %v2935 = vld [vmem:[%s2934] ss:$2 sm:$0xff]
      %s2936 = scalar_lea.vmem [#allocation2], 32
      %v2937 = vld [vmem:[%s2936] ss:$2 sm:$0xff]
      %s2938 = scalar_lea.vmem [#allocation2], 48
      %v2939 = vld [vmem:[%s2938] ss:$2 sm:$0xff]
      %s2940 = scalar_lea.vmem [#allocation2], 64
      %v2941 = vld [vmem:[%s2940] ss:$2 sm:$0xff]
      %s2942 = scalar_lea.vmem [#allocation2], 80
      %v2943 = vld [vmem:[%s2942] ss:$2 sm:$0xff]
      %s2944 = scalar_lea.vmem [#allocation2], 96
      %v2945 = vld [vmem:[%s2944] ss:$2 sm:$0xff]
      %s2946 = scalar_lea.vmem [#allocation2], 112
      %v2947 = vld [vmem:[%s2946] ss:$2 sm:$0xff]
      %s2948 = scalar_lea.vmem [#allocation2], 1
      %v2949 = vld [vmem:[%s2948] ss:$2 sm:$0xff]
      %s2950 = scalar_lea.vmem [#allocation2], 17
      %v2951 = vld [vmem:[%s2950] ss:$2 sm:$0xff]
      %s2952 = scalar_lea.vmem [#allocation2], 33
      %v2953 = vld [vmem:[%s2952] ss:$2 sm:$0xff]
      %s2954 = scalar_lea.vmem [#allocation2], 49
      %v2955 = vld [vmem:[%s2954] ss:$2 sm:$0xff]
      %s2956 = scalar_lea.vmem [#allocation2], 65
      %v2957 = vld [vmem:[%s2956] ss:$2 sm:$0xff]
      %s2958 = scalar_lea.vmem [#allocation2], 81
      %v2959 = vld [vmem:[%s2958] ss:$2 sm:$0xff]
      %s2960 = scalar_lea.vmem [#allocation2], 97
      %v2961 = vld [vmem:[%s2960] ss:$2 sm:$0xff]
      %s2962 = scalar_lea.vmem [#allocation2], 113
      %v2963 = vld [vmem:[%s2962] ss:$2 sm:$0xff]
      %v2964 = vadd.f32 %v2933, %v2949
      %v2965 = vadd.f32 %v2935, %v2951
      %v2966 = vadd.f32 %v2937, %v2953
      %v2967 = vadd.f32 %v2939, %v2955
      %v2968 = vadd.f32 %v2941, %v2957
      %v2969 = vadd.f32 %v2943, %v2959
      %v2970 = vadd.f32 %v2945, %v2961
      %v2971 = vadd.f32 %v2947, %v2963
      %v2972 = vmul.f32 %v2964, 0.25
      %v2973 = vmul.f32 %v2965, 0.25
      %v2974 = vmul.f32 %v2966, 0.25
      %v2975 = vmul.f32 %v2967, 0.25
      %v2976 = vmul.f32 %v2968, 0.25
      %v2977 = vmul.f32 %v2969, 0.25
      %v2978 = vmul.f32 %v2970, 0.25
      %v2979 = vmul.f32 %v2971, 0.25
      %v2980 = vpack.c.bf16 %v2972, %v2972
      %v2981 = vpack.c.bf16 %v2973, %v2973
      %v2982 = vpack.c.bf16 %v2974, %v2974
      %v2983 = vpack.c.bf16 %v2975, %v2975
      %v2984 = vpack.c.bf16 %v2976, %v2976
      %v2985 = vpack.c.bf16 %v2977, %v2977
      %v2986 = vpack.c.bf16 %v2978, %v2978
      %v2987 = vpack.c.bf16 %v2979, %v2979
      %2988 = vst [vmem:[%s373] sm:$0xf] %v2980
      %2989 = vst [vmem:[%s373 + $0x4] sm:$0xf] %v2981
      %2990 = vst [vmem:[%s373 + $0x8] sm:$0xf] %v2982
      %2991 = vst [vmem:[%s373 + $0xc] sm:$0xf] %v2983
      %2992 = vst [vmem:[%s373 + $0x10] sm:$0xf] %v2984
      %2993 = vst [vmem:[%s373 + $0x14] sm:$0xf] %v2985
      %2994 = vst [vmem:[%s373 + $0x18] sm:$0xf] %v2986
      %2995 = vst [vmem:[%s373 + $0x1c] sm:$0xf] %v2987
      %s2996 = smul.u32 8, %s24
      %p2997 = scmp.lt.s32.totalorder %s23, 1
      %s2998 = scalar_select %p2997, %s23, 1
      %p2999 = scmp.lt.s32.totalorder %s2996, 7
      %s3000 = scalar_select %p2999, %s2996, 7
      %s3001 = smul.addr %s2998, 8
      %s3002 = sadd.s32 %s3000, %s3001
      %s3003 = smul.addr %s3002, 4
      %s3004 = scalar_lea.vmem %s8, %s3003
      // Predicated region
      $region53: #{bottleneck_forward.3} parent=51 // pred_check
        %p3005 = pneg %p233
      $region54: #{bottleneck_forward.3} parent=51 // pred_check_branch
        %3007 = sbr.rel (%p3005) target = $region56
      $region55: #{bottleneck_forward.3} parent=51 // pred_region
        %s3008 = smul.u32 8, %s24
      $region56: #{bottleneck_forward.3} parent=51 // pred_fallthru
        _
    $region52: #{bottleneck_forward.3} parent=5 // pred_fallthru
      _
    %p3009 = scmp.le.s32.totalorder 2, %s14
    // Predicated region
    $region57: #{bottleneck_forward.3} parent=5 // pred_check
      %p3010 = pneg %p3009
    $region58: #{bottleneck_forward.3} parent=5 // pred_check_branch
      %3012 = sbr.rel (%p3010) target = $region60
    $region59: #{bottleneck_forward.3} parent=5 // pred_region
      %s3013 = ssub.s32 %s14, 2
      // Predicated region
      $region61: #{bottleneck_forward.3} parent=59 // pred_check
        %p3014 = pneg %p239
      $region62: #{bottleneck_forward.3} parent=59 // pred_check_branch
        %3016 = sbr.rel (%p3014) target = $region64
      $region63: #{bottleneck_forward.3} parent=59 // pred_region
        %s3017 = smul.u32 8, %s26
        %p3018 = scmp.lt.s32.totalorder %s25, 1
        %s3019 = scalar_select %p3018, %s25, 1
        %p3020 = scmp.lt.s32.totalorder %s3017, 7
        %s3021 = scalar_select %p3020, %s3017, 7
        %s3022 = smul.addr %s3019, 8
        %s3023 = sadd.s32 %s3021, %s3022
        %s3024 = smul.addr %s3023, 4
        %s3025 = scalar_lea.vmem %s8, %s3024
      $region64: #{bottleneck_forward.3} parent=59 // pred_fallthru
        _
    $region60: #{bottleneck_forward.3} parent=5 // pred_fallthru
      _
  $region6: #{bottleneck_forward.3} parent=0 // loop_footer
    %s18 = sadd.s32 1, %s14
  $region7: #{bottleneck_forward.3} parent=0 // loop_footer_branch
    %13 = sbr.rel target = $region3
  $region8: #{bottleneck_forward.3} parent=0 // loop_exit
    _

</llo_original>
